<compile_context>
chip_gen: v5e
topology: v5e:2x2
jax: 0.10.0
libtpu: 0.0.40
codegen_flags: <defaults>
</compile_context>

<pallas_src>
import functools

import jax
import jax.numpy as jnp
from jax.experimental import pallas as pl
from jax.experimental.pallas import tpu as pltpu


def _trans_head_kernel(x_ref, w1_ref, b1_ref, w2_ref, b2_ref,
                       w3_ref, b3_ref, w4_ref, b4_ref, o_ref, max_sc,
                       *, n_points):
    t = pl.program_id(1)

    @pl.when(t == 0)
    def _init():
        max_sc[...] = jnp.full(max_sc.shape, -jnp.inf, dtype=max_sc.dtype)

    # x tile: (F, TN), channels-first, cast to bf16 in-kernel (no HBM pass).
    x = x_ref[0].astype(jnp.bfloat16)

    # conv1 (1x1, BN scale folded into weights): contract F -> (TN, 1024)
    h1 = jax.lax.dot_general(
        x, w1_ref[...], (((0,), (0,)), ((), ())),
        preferred_element_type=jnp.float32)
    h1 = jnp.maximum(h1 + b1_ref[...], 0.0)          # f32 bias + relu epilogue

    # conv2 (1x1): (TN, 1024) @ (1024, 256) -> (TN, 256)
    h2 = jnp.dot(h1.astype(jnp.bfloat16), w2_ref[...],
                 preferred_element_type=jnp.float32)
    h2 = jnp.maximum(h2 + b2_ref[...], 0.0)

    # Mask rows beyond the true N (garbage rows of a padded last tile).
    tn = h2.shape[0]
    if n_points % tn:                                # static: only when padded
        row = t * tn + jax.lax.broadcasted_iota(jnp.int32, (tn, 1), 0)
        h2 = jnp.where(row < n_points, h2, -jnp.inf)

    # Running max over the point dimension (torch.max(x, 2)).
    max_sc[...] = jnp.maximum(max_sc[...], jnp.max(h2, axis=0, keepdims=True))

    @pl.when(t == pl.num_programs(1) - 1)
    def _finalize():
        m = max_sc[...]                              # (1, 256) f32
        # conv3 + bn3 + relu
        h3 = jnp.dot(m.astype(jnp.bfloat16), w3_ref[...],
                     preferred_element_type=jnp.float32)
        h3 = jnp.maximum(h3 + b3_ref[...], 0.0)
        # drop1 (p=0.2) is identity in eval mode.
        # conv4 + bias
        y = jnp.dot(h3.astype(jnp.bfloat16), w4_ref[...],
                    preferred_element_type=jnp.float32) + b4_ref[...]
        o_ref[0] = y.astype(o_ref.dtype)             # (1, K)


def trans_head_forward(x_ncl, params, *, point_tile=512):
    """x_ncl: (B, F, N), matching PyTorch Conv1d NCL layout. Returns (B, K)."""
    B, F, N = x_ncl.shape
    w1, b1, w2, b2, w3, b3, w4, b4 = params
    C2 = w2.shape[1]           # 256
    K = w4.shape[1]

    tn = min(point_tile, N)    # point-dim tile (128-aligned when tn < N)
    nt = pl.cdiv(N, tn)

    const = lambda arr: pl.BlockSpec(arr.shape, lambda b, t: (0, 0))

    out = pl.pallas_call(
        functools.partial(_trans_head_kernel, n_points=N),
        out_shape=jax.ShapeDtypeStruct((B, 1, K), jnp.float32),
        grid_spec=pltpu.PrefetchScalarGridSpec(
            num_scalar_prefetch=0,
            grid=(B, nt),
            in_specs=[
                pl.BlockSpec((1, F, tn), lambda b, t: (b, 0, t)),
                const(w1), const(b1), const(w2), const(b2),
                const(w3), const(b3), const(w4), const(b4),
            ],
            out_specs=pl.BlockSpec((1, 1, K), lambda b, t: (b, 0, 0)),
            scratch_shapes=[pltpu.VMEM((1, C2), jnp.float32)],
        ),
        compiler_params=pltpu.CompilerParams(
            dimension_semantics=("parallel", "arbitrary"),
            vmem_limit_bytes=32 * 1024 * 1024),
    )(x_ncl, w1, b1, w2, b2, w3, b3, w4, b4)

    return out[:, 0, :]                               # (B, K) == conv4(...).squeeze(2)


def make_params(key, in_feat_dim, out_dim):
    """Deterministic synthetic parameters mirroring the PyTorch module (eval).
    Conv1d(kernel=1) weights are stored as (C_in, C_out); eval-mode BatchNorm
    scale is folded into the weight columns (weights cast to bf16 for the MXU)
    and the remaining per-channel bias is kept as a (1, C_out) f32 row."""
    eps = 1e-5
    state = {"key": key}

    def nk():
        state["key"], sub = jax.random.split(state["key"])
        return sub

    def conv(cin, cout):
        w = jax.random.normal(nk(), (cin, cout), jnp.float32) * 0.05
        b = jax.random.normal(nk(), (cout,), jnp.float32) * 0.05
        return w, b

    def bn(cout):
        gamma = 1.0 + 0.1 * jax.random.normal(nk(), (cout,), jnp.float32)
        beta = 0.1 * jax.random.normal(nk(), (cout,), jnp.float32)
        mean = 0.1 * jax.random.normal(nk(), (cout,), jnp.float32)
        var = jnp.abs(jax.random.normal(nk(), (cout,), jnp.float32)) + 0.5
        return gamma, beta, mean, var

    def fold(w, b, gamma, beta, mean, var):
        scale = gamma / jnp.sqrt(var + eps)                 # (C,)
        w_f = (w * scale[None, :]).astype(jnp.bfloat16)     # BN scale -> weights
        bias = (beta + scale * (b - mean)).reshape(1, -1)   # (1, C) f32
        return w_f, bias

    w1, b1 = fold(*conv(in_feat_dim, 1024), *bn(1024))
    w2, b2 = fold(*conv(1024, 256), *bn(256))
    w3, b3 = fold(*conv(256, 256), *bn(256))
    w4c, b4c = conv(256, out_dim)
    w4 = w4c.astype(jnp.bfloat16)
    b4 = b4c.reshape(1, out_dim)
    return (w1, b1, w2, b2, w3, b3, w4, b4)


def trans_head_reference(x_ncl, params):
    """Pure-JAX reference using the same bf16 operands / f32 accumulation."""
    w1, b1, w2, b2, w3, b3, w4, b4 = params
    x = jnp.transpose(x_ncl, (0, 2, 1)).astype(jnp.bfloat16)      # (B, N, F)
    h1 = jnp.einsum('bnf,fc->bnc', x, w1, preferred_element_type=jnp.float32)
    h1 = jnp.maximum(h1 + b1, 0.0)
    h2 = jnp.einsum('bnc,cd->bnd', h1.astype(jnp.bfloat16), w2,
                    preferred_element_type=jnp.float32)
    h2 = jnp.maximum(h2 + b2, 0.0)
    m = jnp.max(h2, axis=1)                                       # (B, 256)
    h3 = jnp.einsum('bc,cd->bd', m.astype(jnp.bfloat16), w3,
                    preferred_element_type=jnp.float32)
    h3 = jnp.maximum(h3 + b3, 0.0)
    return jnp.einsum('bc,ck->bk', h3.astype(jnp.bfloat16), w4,
                      preferred_element_type=jnp.float32) + b4    # (B, K)


if __name__ == "__main__":
    # Small demo shapes consistent with the module (channel widths 1024/256
    # are fixed by TransHead itself).  N=320 with point_tile=128 exercises the
    # multi-tile running max AND the padded-last-tile mask path.
    B, IN_FEAT, N, OUT_DIM = 2, 32, 320, 3

    key = jax.random.PRNGKey(0)
    kx, kp = jax.random.split(key)
    x = jax.random.normal(kx, (B, IN_FEAT, N), jnp.float32)   # PyTorch NCL layout
    params = make_params(kp, IN_FEAT, OUT_DIM)

    y = trans_head_forward(x, params, point_tile=128)
    y = jax.block_until_ready(y)

    y_ref = trans_head_reference(x, params)
    assert y.shape == (B, OUT_DIM)
    assert jnp.allclose(y, y_ref, atol=3e-3, rtol=3e-3), "mismatch vs JAX reference"

    print("KERNEL_OK")
</pallas_src>

<mosaic_0001>
module attributes {stable_mosaic.version = 11 : i64} {
  func.func @_trans_head_kernel(%arg0: i32, %arg1: i32, %arg2: memref<1x32x128xf32, #tpu.memory_space<vmem>>, %arg3: memref<32x1024xbf16, #tpu.memory_space<vmem>>, %arg4: memref<1x1024xf32, #tpu.memory_space<vmem>>, %arg5: memref<1024x256xbf16, #tpu.memory_space<vmem>>, %arg6: memref<1x256xf32, #tpu.memory_space<vmem>>, %arg7: memref<256x256xbf16, #tpu.memory_space<vmem>>, %arg8: memref<1x256xf32, #tpu.memory_space<vmem>>, %arg9: memref<256x3xbf16, #tpu.memory_space<vmem>>, %arg10: memref<1x3xf32, #tpu.memory_space<vmem>>, %arg11: memref<1x1x3xf32, #tpu.memory_space<vmem>>, %arg12: memref<1x256xf32, #tpu.memory_space<vmem>>) attributes {dimension_semantics = [#tpu.dimension_semantics<parallel>, #tpu.dimension_semantics<arbitrary>], iteration_bounds = array<i64: 2, 3>, scalar_prefetch = 0 : i64, scratch_operands = 1 : i64, tpu.core_type = #tpu.core_type<tc>, window_params = [{transform_indices = @transform_0, window_bounds = array<i64: 1, 32, 128>}, {pipeline_mode = #tpu.pipeline_mode<synchronous>, transform_indices = @transform_1, window_bounds = array<i64: 32, 1024>}, {pipeline_mode = #tpu.pipeline_mode<synchronous>, transform_indices = @transform_2, window_bounds = array<i64: 1, 1024>}, {pipeline_mode = #tpu.pipeline_mode<synchronous>, transform_indices = @transform_3, window_bounds = array<i64: 1024, 256>}, {pipeline_mode = #tpu.pipeline_mode<synchronous>, transform_indices = @transform_4, window_bounds = array<i64: 1, 256>}, {pipeline_mode = #tpu.pipeline_mode<synchronous>, transform_indices = @transform_5, window_bounds = array<i64: 256, 256>}, {pipeline_mode = #tpu.pipeline_mode<synchronous>, transform_indices = @transform_6, window_bounds = array<i64: 1, 256>}, {pipeline_mode = #tpu.pipeline_mode<synchronous>, transform_indices = @transform_7, window_bounds = array<i64: 256, 3>}, {pipeline_mode = #tpu.pipeline_mode<synchronous>, transform_indices = @transform_8, window_bounds = array<i64: 1, 3>}, {transform_indices = @transform_9, window_bounds = array<i64: 1, 1, 3>}]} {
    %c0_i32 = arith.constant 0 : i32
    %0 = arith.cmpi eq, %arg1, %c0_i32 : i32
    %1 = arith.extui %0 : i1 to i32
    %c0_i32_0 = arith.constant 0 : i32
    %2 = arith.cmpi ne, %1, %c0_i32_0 : i32
    scf.if %2 {
      %cst_21 = arith.constant 0xFF800000 : f32
      %39 = vector.broadcast %cst_21 : f32 to vector<1x256xf32>
      %c0_22 = arith.constant 0 : index
      %c0_23 = arith.constant 0 : index
      %40 = vector.load %arg12[%c0_22, %c0_23] : memref<1x256xf32, #tpu.memory_space<vmem>>, vector<1x256xf32>
      tpu.vector_store %arg12[%c0_22, %c0_23], %39 {strides = array<i32>} : memref<1x256xf32, #tpu.memory_space<vmem>>, vector<1x256xf32>,
    } else {
    }
    %c0 = arith.constant 0 : index
    %c0_1 = arith.constant 0 : index
    %c0_2 = arith.constant 0 : index
    %3 = vector.load %arg2[%c0, %c0_1, %c0_2] : memref<1x32x128xf32, #tpu.memory_space<vmem>>, vector<1x32x128xf32>
    %4 = vector.shape_cast %3 : vector<1x32x128xf32> to vector<32x128xf32>
    %5 = arith.truncf %4 : vector<32x128xf32> to vector<32x128xbf16>
    %c0_3 = arith.constant 0 : index
    %c0_4 = arith.constant 0 : index
    %6 = vector.load %arg3[%c0_3, %c0_4] : memref<32x1024xbf16, #tpu.memory_space<vmem>>, vector<32x1024xbf16>
    %cst = arith.constant dense<0.000000e+00> : vector<128x1024xf32>
    %7 = tpu.matmul %5, %6, %cst {dimension_numbers = #tpu.dot_dimension_numbers<[0], [0], [1], [1], [0, 1, 1, 1], [], []>} : vector<32x128xbf16>, vector<32x1024xbf16>, vector<128x1024xf32> -> vector<128x1024xf32>
    %c0_5 = arith.constant 0 : index
    %c0_6 = arith.constant 0 : index
    %8 = vector.load %arg4[%c0_5, %c0_6] : memref<1x1024xf32, #tpu.memory_space<vmem>>, vector<1x1024xf32>
    %9 = vector.broadcast %8 : vector<1x1024xf32> to vector<128x1024xf32>
    %10 = arith.addf %7, %9 : vector<128x1024xf32>
    %cst_7 = arith.constant 0.000000e+00 : f32
    %11 = vector.broadcast %cst_7 : f32 to vector<128x1024xf32>
    %12 = arith.maximumf %10, %11 : vector<128x1024xf32>
    %13 = arith.truncf %12 : vector<128x1024xf32> to vector<128x1024xbf16>
    %c0_8 = arith.constant 0 : index
    %c0_9 = arith.constant 0 : index
    %14 = vector.load %arg5[%c0_8, %c0_9] : memref<1024x256xbf16, #tpu.memory_space<vmem>>, vector<1024x256xbf16>
    %cst_10 = arith.constant dense<0.000000e+00> : vector<128x256xf32>
    %15 = tpu.matmul %13, %14, %cst_10 {dimension_numbers = #tpu.dot_dimension_numbers<[1], [0], [0], [1], [0, 0, 1, 1], [], []>} : vector<128x1024xbf16>, vector<1024x256xbf16>, vector<128x256xf32> -> vector<128x256xf32>
    %c0_11 = arith.constant 0 : index
    %c0_12 = arith.constant 0 : index
    %16 = vector.load %arg6[%c0_11, %c0_12] : memref<1x256xf32, #tpu.memory_space<vmem>>, vector<1x256xf32>
    %17 = vector.broadcast %16 : vector<1x256xf32> to vector<128x256xf32>
    %18 = arith.addf %15, %17 : vector<128x256xf32>
    %cst_13 = arith.constant 0.000000e+00 : f32
    %19 = vector.broadcast %cst_13 : f32 to vector<128x256xf32>
    %20 = arith.maximumf %18, %19 : vector<128x256xf32>
    %c128_i32 = arith.constant 128 : i32
    %21 = arith.muli %arg1, %c128_i32 : i32
    %22 = tpu.iota {dimensions = array<i32: 0>} : vector<128x1xi32>
    %23 = vector.broadcast %21 : i32 to vector<128x1xi32>
    %24 = arith.addi %23, %22 : vector<128x1xi32>
    %c320_i32 = arith.constant 320 : i32
    %25 = vector.broadcast %c320_i32 : i32 to vector<128x1xi32>
    %26 = arith.cmpi slt, %24, %25 : vector<128x1xi32>
    %cst_14 = arith.constant 0xFF800000 : f32
    %27 = vector.shape_cast %26 : vector<128x1xi1> to vector<128x1xi1>
    %28 = vector.broadcast %27 : vector<128x1xi1> to vector<128x256xi1>
    %29 = vector.broadcast %cst_14 : f32 to vector<128x256xf32>
    %30 = arith.select %28, %20, %29 : vector<128x256xi1>, vector<128x256xf32>
    %c0_15 = arith.constant 0 : index
    %c0_16 = arith.constant 0 : index
    %31 = vector.load %arg12[%c0_15, %c0_16] : memref<1x256xf32, #tpu.memory_space<vmem>>, vector<1x256xf32>
    %cst_17 = arith.constant dense<0xFF800000> : vector<256xf32>
    %32 = vector.multi_reduction <maximumf>, %30, %cst_17 [0] : vector<128x256xf32> to vector<256xf32>
    %33 = vector.shape_cast %32 : vector<256xf32> to vector<1x256xf32>
    %34 = arith.maximumf %31, %33 : vector<1x256xf32>
    %c0_18 = arith.constant 0 : index
    %c0_19 = arith.constant 0 : index
    %35 = vector.load %arg12[%c0_18, %c0_19] : memref<1x256xf32, #tpu.memory_space<vmem>>, vector<1x256xf32>
    tpu.vector_store %arg12[%c0_18, %c0_19], %34 {strides = array<i32>} : memref<1x256xf32, #tpu.memory_space<vmem>>, vector<1x256xf32>,
    %c2_i32 = arith.constant 2 : i32
    %36 = arith.cmpi eq, %arg1, %c2_i32 : i32
    %37 = arith.extui %36 : i1 to i32
    %c0_i32_20 = arith.constant 0 : i32
    %38 = arith.cmpi ne, %37, %c0_i32_20 : i32
    scf.if %38 {
      %c0_21 = arith.constant 0 : index
      %c0_22 = arith.constant 0 : index
      %39 = vector.load %arg12[%c0_21, %c0_22] : memref<1x256xf32, #tpu.memory_space<vmem>>, vector<1x256xf32>
      %40 = arith.truncf %39 : vector<1x256xf32> to vector<1x256xbf16>
      %c0_23 = arith.constant 0 : index
      %c0_24 = arith.constant 0 : index
      %41 = vector.load %arg7[%c0_23, %c0_24] : memref<256x256xbf16, #tpu.memory_space<vmem>>, vector<256x256xbf16>
      %cst_25 = arith.constant dense<0.000000e+00> : vector<1x256xf32>
      %42 = tpu.matmul %40, %41, %cst_25 {dimension_numbers = #tpu.dot_dimension_numbers<[1], [0], [0], [1], [0, 0, 1, 1], [], []>} : vector<1x256xbf16>, vector<256x256xbf16>, vector<1x256xf32> -> vector<1x256xf32>
      %c0_26 = arith.constant 0 : index
      %c0_27 = arith.constant 0 : index
      %43 = vector.load %arg8[%c0_26, %c0_27] : memref<1x256xf32, #tpu.memory_space<vmem>>, vector<1x256xf32>
      %44 = arith.addf %42, %43 : vector<1x256xf32>
      %cst_28 = arith.constant 0.000000e+00 : f32
      %45 = vector.broadcast %cst_28 : f32 to vector<1x256xf32>
      %46 = arith.maximumf %44, %45 : vector<1x256xf32>
      %47 = arith.truncf %46 : vector<1x256xf32> to vector<1x256xbf16>
      %c0_29 = arith.constant 0 : index
      %c0_30 = arith.constant 0 : index
      %48 = vector.load %arg9[%c0_29, %c0_30] : memref<256x3xbf16, #tpu.memory_space<vmem>>, vector<256x3xbf16>
      %cst_31 = arith.constant dense<0.000000e+00> : vector<1x3xf32>
      %49 = tpu.matmul %47, %48, %cst_31 {dimension_numbers = #tpu.dot_dimension_numbers<[1], [0], [0], [1], [0, 0, 1, 1], [], []>} : vector<1x256xbf16>, vector<256x3xbf16>, vector<1x3xf32> -> vector<1x3xf32>
      %c0_32 = arith.constant 0 : index
      %c0_33 = arith.constant 0 : index
      %50 = vector.load %arg10[%c0_32, %c0_33] : memref<1x3xf32, #tpu.memory_space<vmem>>, vector<1x3xf32>
      %51 = arith.addf %49, %50 : vector<1x3xf32>
      %c0_34 = arith.constant 0 : index
      %c0_35 = arith.constant 0 : index
      %c0_36 = arith.constant 0 : index
      %52 = vector.load %arg11[%c0_34, %c0_35, %c0_36] : memref<1x1x3xf32, #tpu.memory_space<vmem>>, vector<1x1x3xf32>
      %53 = vector.shape_cast %52 : vector<1x1x3xf32> to vector<1x3xf32>
      %54 = vector.shape_cast %51 : vector<1x3xf32> to vector<1x1x3xf32>
      tpu.vector_store %arg11[%c0_34, %c0_35, %c0_36], %54 {strides = array<i32>} : memref<1x1x3xf32, #tpu.memory_space<vmem>>, vector<1x1x3xf32>,
    } else {
    }
    return
  }
  func.func @transform_0(%arg0: i32, %arg1: i32) -> (i32, i32, i32) {
    %c0_i32 = arith.constant 0 : i32
    %c0_i32_0 = arith.constant 0 : i32
    return %arg0, %c0_i32, %arg1 : i32, i32, i32
  }
  func.func @transform_1(%arg0: i32, %arg1: i32) -> (i32, i32) {
    %c0_i32 = arith.constant 0 : i32
    %c0_i32_0 = arith.constant 0 : i32
    %c0_i32_1 = arith.constant 0 : i32
    return %c0_i32, %c0_i32_0 : i32, i32
  }
  func.func @transform_2(%arg0: i32, %arg1: i32) -> (i32, i32) {
    %c0_i32 = arith.constant 0 : i32
    %c0_i32_0 = arith.constant 0 : i32
    %c0_i32_1 = arith.constant 0 : i32
    return %c0_i32, %c0_i32_0 : i32, i32
  }
  func.func @transform_3(%arg0: i32, %arg1: i32) -> (i32, i32) {
    %c0_i32 = arith.constant 0 : i32
    %c0_i32_0 = arith.constant 0 : i32
    %c0_i32_1 = arith.constant 0 : i32
    return %c0_i32, %c0_i32_0 : i32, i32
  }
  func.func @transform_4(%arg0: i32, %arg1: i32) -> (i32, i32) {
    %c0_i32 = arith.constant 0 : i32
    %c0_i32_0 = arith.constant 0 : i32
    %c0_i32_1 = arith.constant 0 : i32
    return %c0_i32, %c0_i32_0 : i32, i32
  }
  func.func @transform_5(%arg0: i32, %arg1: i32) -> (i32, i32) {
    %c0_i32 = arith.constant 0 : i32
    %c0_i32_0 = arith.constant 0 : i32
    %c0_i32_1 = arith.constant 0 : i32
    return %c0_i32, %c0_i32_0 : i32, i32
  }
  func.func @transform_6(%arg0: i32, %arg1: i32) -> (i32, i32) {
    %c0_i32 = arith.constant 0 : i32
    %c0_i32_0 = arith.constant 0 : i32
    %c0_i32_1 = arith.constant 0 : i32
    return %c0_i32, %c0_i32_0 : i32, i32
  }
  func.func @transform_7(%arg0: i32, %arg1: i32) -> (i32, i32) {
    %c0_i32 = arith.constant 0 : i32
    %c0_i32_0 = arith.constant 0 : i32
    %c0_i32_1 = arith.constant 0 : i32
    return %c0_i32, %c0_i32_0 : i32, i32
  }
  func.func @transform_8(%arg0: i32, %arg1: i32) -> (i32, i32) {
    %c0_i32 = arith.constant 0 : i32
    %c0_i32_0 = arith.constant 0 : i32
    %c0_i32_1 = arith.constant 0 : i32
    return %c0_i32, %c0_i32_0 : i32, i32
  }
  func.func @transform_9(%arg0: i32, %arg1: i32) -> (i32, i32, i32) {
    %c0_i32 = arith.constant 0 : i32
    %c0_i32_0 = arith.constant 0 : i32
    %c0_i32_1 = arith.constant 0 : i32
    return %arg0, %c0_i32, %c0_i32_0 : i32, i32, i32
  }
}

</mosaic_0001>

<llo_original>
// kernel: tpu_custom_call.1
$region0: #{tpu_custom_call.1}
  #allocation0 [shape = 'u32[]', space=smem, size = 0x4, offset = 0x4, fixed_abs, tag = 'smem constant byte address 0x4 - core index']
  #allocation1 [shape = 'u32[72,128]{1,0:T(1,128)}', space=vmem, size = 0x9000, scoped, tag = 'internal scratch']
  #allocation2 [shape = 'f32[1,256]{1,0:T(1,128)}', space=vmem, size = 0x400, scoped, tag = 'scratch operand']
  %s0 = inlined_call_operand.hbm [shape: f32[2,32,320], index: 0, kind: input, shape index: {}]
  %s1 = inlined_call_operand.vmem [shape: bf16[32,1024], index: 1, kind: input, shape index: {}]
  %s2 = inlined_call_operand.hbm [shape: f32[1,1024], index: 2, kind: input, shape index: {}]
  %s3 = inlined_call_operand.hbm [shape: bf16[1024,256], index: 3, kind: input, shape index: {}]
  %s4 = inlined_call_operand.vmem [shape: f32[1,256], index: 4, kind: input, shape index: {}]
  %s5 = inlined_call_operand.hbm [shape: bf16[256,256], index: 5, kind: input, shape index: {}]
  %s6 = inlined_call_operand.vmem [shape: f32[1,256], index: 6, kind: input, shape index: {}]
  %s7 = inlined_call_operand.vmem [shape: bf16[256,3], index: 7, kind: input, shape index: {}]
  %s8 = inlined_call_operand.vmem [shape: f32[1,3], index: 8, kind: input, shape index: {}]
  %s9 = inlined_call_operand.hbm [shape: f32[2,1,3], index: 9, kind: output, shape index: {}]
  %s10 = sld [smem:[#allocation0]]
  $region93: #{tpu_custom_call.1} parent=0
    _
  %s12 = ssub.s32 1, %s10
  %s13 = scalar_select 0, %s12, %s10
  $region1: #{tpu_custom_call.1} parent=0
    #allocation3 [shape = 'u8[32768]{0}', space=vmem, size = 0x8000, scoped, tag = 'input window, operand 0']
    #allocation4 [shape = 's32[2]{0}', space=sflag, size = 0x8, scoped, tag = 'scoped memory for tpu_custom_call.1']
    #allocation5 [shape = 's32[2]{0}', space=sflag, size = 0x8, scoped, tag = 'scoped memory for tpu_custom_call.1']
    #allocation6 [shape = 'u8[4096]{0}', space=vmem, size = 0x1000, scoped, tag = 'input window, operand 2, single buffered']
    #allocation7 [shape = 's32[1]{0}', space=sflag, size = 0x4, scoped, tag = 'scoped memory for tpu_custom_call.1']
    #allocation8 [shape = 'u8[524288]{0}', space=vmem, size = 0x80000, scoped, tag = 'input window, operand 3, single buffered']
    #allocation9 [shape = 'u8[131072]{0}', space=vmem, size = 0x20000, scoped, tag = 'input window, operand 5, single buffered']
    #allocation10 [shape = 's32[1]{0}', space=sflag, size = 0x4, scoped, tag = 'scoped memory for tpu_custom_call.1']
    #allocation11 [shape = 'u8[1024]{0}', space=vmem, size = 0x400, scoped, tag = 'output window, operand 0']
    %14 = vsyncpa [#allocation4], 0
    %s15 = scalar_lea.sflag [#allocation4], 1
    %16 = vsyncpa %s15, 0
    %17 = vsyncpa [#allocation7], 0
    %18 = vsyncpa [#allocation10], 0
    %19 = vsyncpa [#allocation5], 0
    %s20 = scalar_lea.sflag [#allocation5], 1
    %21 = vsyncpa %s20, 0
    loop: start=0, step=1, limit=8
    $region2: #{tpu_custom_call.1} parent=1 // loop_pre_header
      _
    $region3: #{tpu_custom_call.1} parent=1 // loop_header
      %s23 = sphi 0, %s27
      %p24 = scmp.ge.s32.totalorder %s23, 8
      %s30 = sphi 0, %s42
      %s31 = sphi 0, %s38
      %s32 = sphi 0, %s30
      %s33 = sphi 0, %s31
      %s34 = sphi 0, %s32
      %s35 = sphi 0, %s33
      %s47 = sphi 0, %s49
      %s50 = sphi 0, %s47
      %s51 = sphi 0, %s50
      %s67 = sphi 0, %s51
      %s71 = sphi 0, %s71
      %s73 = sphi 0, %s71
      %s74 = sphi 0, %s73
      %s88 = sphi 0, %s74
      %s92 = sphi 0, %s92
      %s94 = sphi 0, %s92
      %s95 = sphi 0, %s94
      %s109 = sphi 0, %s95
      %s113 = sphi 0, %s113
      %s115 = sphi 0, %s113
      %s116 = sphi 0, %s115
      %s130 = sphi 0, %s116
      %s134 = sphi 0, %s134
      %s136 = sphi 0, %s134
      %s137 = sphi 0, %s136
      %s151 = sphi 0, %s137
      %s155 = sphi 0, %s155
      %s157 = sphi 0, %s155
      %s158 = sphi 0, %s157
      %s172 = sphi 0, %s158
      %s176 = sphi 0, %s176
      %s178 = sphi 0, %s176
      %s179 = sphi 0, %s178
      %s193 = sphi 0, %s179
      %s197 = sphi 0, %s197
      %s199 = sphi 0, %s197
      %s200 = sphi 0, %s199
      %s214 = sphi 0, %s200
      %s218 = sphi 0, %s218
      %s220 = sphi 0, %s218
      %s221 = sphi 0, %s220
      %s235 = sphi 0, %s221
      %s241 = sphi 0, %s243
      %s244 = sphi 0, %s241
      %s245 = sphi 0, %s244
      %s261 = sphi 0, %s245
    $region4: #{tpu_custom_call.1} parent=1 // loop_header_branch
      %26 = sbr.rel (%p24) target = $region8
    $region5: #{tpu_custom_call.1} parent=1 // loop_body
      %s28 = ssub.s32 %s23, 1
      %s29 = ssub.s32 %s23, 2
      %s36 = sadd.s32 1, %s31
      %p37 = scmp.ge.s32.totalorder %s36, 3
      %s38 = scalar_select %p37, 0, %s36
      %s39 = sadd.s32 1, %s30
      %s40 = scalar_select %p37, %s39, %s30
      %p41 = scmp.ge.s32.totalorder %s40, 2
      %s42 = scalar_select %p41, 0, %s40
      %s43 = ssub.s32 %s30, %s42
      %s44 = ssub.s32 %s31, %s38
      %s45 = sor.u32 %s43, %s44
      %p46 = scmp.eq.s32.totalorder %s45, 0
      %s48 = sadd.s32 %s47, 1
      %s49 = scalar_select %p46, %s47, %s48
      %p52 = pneg %p46
      %p53 = scmp.eq.s32.totalorder %s23, 5
      %p54 = por %p52, %p53
      %p55 = scmp.ne.s32.totalorder %s47, %s50
      %p56 = scmp.eq.s32.totalorder %s23, 0
      %p57 = por %p55, %p56
      %p58 = scmp.ne.s32.totalorder %s47, %s50
      %p59 = scmp.eq.s32.totalorder %s28, 5
      %p60 = por %p58, %p59
      %p61 = scmp.ne.s32.totalorder %s50, %s51
      %p62 = scmp.eq.s32.totalorder %s28, 0
      %p63 = por %p61, %p62
      %p64 = scmp.ne.s32.totalorder %s50, %s51
      %p65 = scmp.eq.s32.totalorder %s29, 5
      %p66 = por %p64, %p65
      %p68 = scmp.ne.s32.totalorder %s51, %s67
      %p69 = scmp.eq.s32.totalorder %s29, 0
      %p70 = por %p68, %p69
      %s72 = sadd.s32 %s71, 1
      %p75 = scmp.eq.s32.totalorder %s23, 5
      %p76 = scmp.ne.s32.totalorder %s71, %s73
      %p77 = scmp.eq.s32.totalorder %s23, 0
      %p78 = por %p76, %p77
      %p79 = scmp.ne.s32.totalorder %s71, %s73
      %p80 = scmp.eq.s32.totalorder %s28, 5
      %p81 = por %p79, %p80
      %p82 = scmp.ne.s32.totalorder %s73, %s74
      %p83 = scmp.eq.s32.totalorder %s28, 0
      %p84 = por %p82, %p83
      %p85 = scmp.ne.s32.totalorder %s73, %s74
      %p86 = scmp.eq.s32.totalorder %s29, 5
      %p87 = por %p85, %p86
      %p89 = scmp.ne.s32.totalorder %s74, %s88
      %p90 = scmp.eq.s32.totalorder %s29, 0
      %p91 = por %p89, %p90
      %s93 = sadd.s32 %s92, 1
      %p96 = scmp.eq.s32.totalorder %s23, 5
      %p97 = scmp.ne.s32.totalorder %s92, %s94
      %p98 = scmp.eq.s32.totalorder %s23, 0
      %p99 = por %p97, %p98
      %p100 = scmp.ne.s32.totalorder %s92, %s94
      %p101 = scmp.eq.s32.totalorder %s28, 5
      %p102 = por %p100, %p101
      %p103 = scmp.ne.s32.totalorder %s94, %s95
      %p104 = scmp.eq.s32.totalorder %s28, 0
      %p105 = por %p103, %p104
      %p106 = scmp.ne.s32.totalorder %s94, %s95
      %p107 = scmp.eq.s32.totalorder %s29, 5
      %p108 = por %p106, %p107
      %p110 = scmp.ne.s32.totalorder %s95, %s109
      %p111 = scmp.eq.s32.totalorder %s29, 0
      %p112 = por %p110, %p111
      %s114 = sadd.s32 %s113, 1
      %p117 = scmp.eq.s32.totalorder %s23, 5
      %p118 = scmp.ne.s32.totalorder %s113, %s115
      %p119 = scmp.eq.s32.totalorder %s23, 0
      %p120 = por %p118, %p119
      %p121 = scmp.ne.s32.totalorder %s113, %s115
      %p122 = scmp.eq.s32.totalorder %s28, 5
      %p123 = por %p121, %p122
      %p124 = scmp.ne.s32.totalorder %s115, %s116
      %p125 = scmp.eq.s32.totalorder %s28, 0
      %p126 = por %p124, %p125
      %p127 = scmp.ne.s32.totalorder %s115, %s116
      %p128 = scmp.eq.s32.totalorder %s29, 5
      %p129 = por %p127, %p128
      %p131 = scmp.ne.s32.totalorder %s116, %s130
      %p132 = scmp.eq.s32.totalorder %s29, 0
      %p133 = por %p131, %p132
      %s135 = sadd.s32 %s134, 1
      %p138 = scmp.eq.s32.totalorder %s23, 5
      %p139 = scmp.ne.s32.totalorder %s134, %s136
      %p140 = scmp.eq.s32.totalorder %s23, 0
      %p141 = por %p139, %p140
      %p142 = scmp.ne.s32.totalorder %s134, %s136
      %p143 = scmp.eq.s32.totalorder %s28, 5
      %p144 = por %p142, %p143
      %p145 = scmp.ne.s32.totalorder %s136, %s137
      %p146 = scmp.eq.s32.totalorder %s28, 0
      %p147 = por %p145, %p146
      %p148 = scmp.ne.s32.totalorder %s136, %s137
      %p149 = scmp.eq.s32.totalorder %s29, 5
      %p150 = por %p148, %p149
      %p152 = scmp.ne.s32.totalorder %s137, %s151
      %p153 = scmp.eq.s32.totalorder %s29, 0
      %p154 = por %p152, %p153
      %s156 = sadd.s32 %s155, 1
      %p159 = scmp.eq.s32.totalorder %s23, 5
      %p160 = scmp.ne.s32.totalorder %s155, %s157
      %p161 = scmp.eq.s32.totalorder %s23, 0
      %p162 = por %p160, %p161
      %p163 = scmp.ne.s32.totalorder %s155, %s157
      %p164 = scmp.eq.s32.totalorder %s28, 5
      %p165 = por %p163, %p164
      %p166 = scmp.ne.s32.totalorder %s157, %s158
      %p167 = scmp.eq.s32.totalorder %s28, 0
      %p168 = por %p166, %p167
      %p169 = scmp.ne.s32.totalorder %s157, %s158
      %p170 = scmp.eq.s32.totalorder %s29, 5
      %p171 = por %p169, %p170
      %p173 = scmp.ne.s32.totalorder %s158, %s172
      %p174 = scmp.eq.s32.totalorder %s29, 0
      %p175 = por %p173, %p174
      %s177 = sadd.s32 %s176, 1
      %p180 = scmp.eq.s32.totalorder %s23, 5
      %p181 = scmp.ne.s32.totalorder %s176, %s178
      %p182 = scmp.eq.s32.totalorder %s23, 0
      %p183 = por %p181, %p182
      %p184 = scmp.ne.s32.totalorder %s176, %s178
      %p185 = scmp.eq.s32.totalorder %s28, 5
      %p186 = por %p184, %p185
      %p187 = scmp.ne.s32.totalorder %s178, %s179
      %p188 = scmp.eq.s32.totalorder %s28, 0
      %p189 = por %p187, %p188
      %p190 = scmp.ne.s32.totalorder %s178, %s179
      %p191 = scmp.eq.s32.totalorder %s29, 5
      %p192 = por %p190, %p191
      %p194 = scmp.ne.s32.totalorder %s179, %s193
      %p195 = scmp.eq.s32.totalorder %s29, 0
      %p196 = por %p194, %p195
      %s198 = sadd.s32 %s197, 1
      %p201 = scmp.eq.s32.totalorder %s23, 5
      %p202 = scmp.ne.s32.totalorder %s197, %s199
      %p203 = scmp.eq.s32.totalorder %s23, 0
      %p204 = por %p202, %p203
      %p205 = scmp.ne.s32.totalorder %s197, %s199
      %p206 = scmp.eq.s32.totalorder %s28, 5
      %p207 = por %p205, %p206
      %p208 = scmp.ne.s32.totalorder %s199, %s200
      %p209 = scmp.eq.s32.totalorder %s28, 0
      %p210 = por %p208, %p209
      %p211 = scmp.ne.s32.totalorder %s199, %s200
      %p212 = scmp.eq.s32.totalorder %s29, 5
      %p213 = por %p211, %p212
      %p215 = scmp.ne.s32.totalorder %s200, %s214
      %p216 = scmp.eq.s32.totalorder %s29, 0
      %p217 = por %p215, %p216
      %s219 = sadd.s32 %s218, 1
      %p222 = scmp.eq.s32.totalorder %s23, 5
      %p223 = scmp.ne.s32.totalorder %s218, %s220
      %p224 = scmp.eq.s32.totalorder %s23, 0
      %p225 = por %p223, %p224
      %p226 = scmp.ne.s32.totalorder %s218, %s220
      %p227 = scmp.eq.s32.totalorder %s28, 5
      %p228 = por %p226, %p227
      %p229 = scmp.ne.s32.totalorder %s220, %s221
      %p230 = scmp.eq.s32.totalorder %s28, 0
      %p231 = por %p229, %p230
      %p232 = scmp.ne.s32.totalorder %s220, %s221
      %p233 = scmp.eq.s32.totalorder %s29, 5
      %p234 = por %p232, %p233
      %p236 = scmp.ne.s32.totalorder %s221, %s235
      %p237 = scmp.eq.s32.totalorder %s29, 0
      %p238 = por %p236, %p237
      %s239 = ssub.s32 %s30, %s42
      %p240 = scmp.eq.s32.totalorder %s239, 0
      %s242 = sadd.s32 %s241, 1
      %s243 = scalar_select %p240, %s241, %s242
      %p246 = pneg %p240
      %p247 = scmp.eq.s32.totalorder %s23, 5
      %p248 = por %p246, %p247
      %p249 = scmp.ne.s32.totalorder %s241, %s244
      %p250 = scmp.eq.s32.totalorder %s23, 0
      %p251 = por %p249, %p250
      %p252 = scmp.ne.s32.totalorder %s241, %s244
      %p253 = scmp.eq.s32.totalorder %s28, 5
      %p254 = por %p252, %p253
      %p255 = scmp.ne.s32.totalorder %s244, %s245
      %p256 = scmp.eq.s32.totalorder %s28, 0
      %p257 = por %p255, %p256
      %p258 = scmp.ne.s32.totalorder %s244, %s245
      %p259 = scmp.eq.s32.totalorder %s29, 5
      %p260 = por %p258, %p259
      %p262 = scmp.ne.s32.totalorder %s245, %s261
      %p263 = scmp.eq.s32.totalorder %s29, 0
      %p264 = por %p262, %p263
      %p265 = scmp.le.s32.totalorder 1, %s23
      %p266 = scmp.lt.s32.totalorder %s23, 7
      %p267 = pnand %p265, %p266
      %p268 = pneg %p267
      // Predicated region
      $region9: #{tpu_custom_call.1} parent=5 // pred_check
        _
      $region10: #{tpu_custom_call.1} parent=5 // pred_check_branch
        %270 = sbr.rel (%p267) target = $region12
      $region11: #{tpu_custom_call.1} parent=5 // pred_region
        %s271 = ssub.s32 %s23, 1
        // Predicated region
        $region13: #{tpu_custom_call.1} parent=11 // pred_check
          %p272 = pneg %p84
        $region14: #{tpu_custom_call.1} parent=11 // pred_check_branch
          %274 = sbr.rel (%p272) target = $region16
        $region15: #{tpu_custom_call.1} parent=11 // pred_region
          _
        $region16: #{tpu_custom_call.1} parent=11 // pred_fallthru
          _
        // Predicated region
        $region17: #{tpu_custom_call.1} parent=11 // pred_check
          %p275 = pneg %p105
        $region18: #{tpu_custom_call.1} parent=11 // pred_check_branch
          %277 = sbr.rel (%p275) target = $region20
        $region19: #{tpu_custom_call.1} parent=11 // pred_region
          %279 = vsyncadd [#allocation7], 0
          %s281 = sshll.u32 %s2, 4
          %s282 = int_to_ptr.hbm [resolvable:$true] %s281
          %s283 = sshll.u32 [#allocation6], 4
          %s284 = int_to_ptr.vmem [resolvable:$true] %s283
          %286 = dma.hbm_to_vmem [thread:$0]  %s282, 128, %s284, [#allocation7]
        $region20: #{tpu_custom_call.1} parent=11 // pred_fallthru
          _
        // Predicated region
        $region21: #{tpu_custom_call.1} parent=11 // pred_check
          %p287 = pneg %p126
        $region22: #{tpu_custom_call.1} parent=11 // pred_check_branch
          %289 = sbr.rel (%p287) target = $region24
        $region23: #{tpu_custom_call.1} parent=11 // pred_region
          %291 = vsyncadd [#allocation7], 0
          %s292 = sshll.u32 %s3, 4
          %s293 = int_to_ptr.hbm [resolvable:$true] %s292
          %s294 = sshll.u32 [#allocation8], 4
          %s295 = int_to_ptr.vmem [resolvable:$true] %s294
          %300 = dma.hbm_to_vmem [thread:$0]  %s293, 16384, %s295, [#allocation7], 128, 128, 8
        $region24: #{tpu_custom_call.1} parent=11 // pred_fallthru
          _
        // Predicated region
        $region25: #{tpu_custom_call.1} parent=11 // pred_check
          %p301 = pneg %p147
        $region26: #{tpu_custom_call.1} parent=11 // pred_check_branch
          %303 = sbr.rel (%p301) target = $region28
        $region27: #{tpu_custom_call.1} parent=11 // pred_region
          _
        $region28: #{tpu_custom_call.1} parent=11 // pred_fallthru
          _
        // Predicated region
        $region29: #{tpu_custom_call.1} parent=11 // pred_check
          %p304 = pneg %p168
        $region30: #{tpu_custom_call.1} parent=11 // pred_check_branch
          %306 = sbr.rel (%p304) target = $region32
        $region31: #{tpu_custom_call.1} parent=11 // pred_region
          %308 = vsyncadd [#allocation10], 0
          %s309 = sshll.u32 %s5, 4
          %s310 = int_to_ptr.hbm [resolvable:$true] %s309
          %s311 = sshll.u32 [#allocation9], 4
          %s312 = int_to_ptr.vmem [resolvable:$true] %s311
          %317 = dma.hbm_to_vmem [thread:$0]  %s310, 4096, %s312, [#allocation10], 128, 128, 8
        $region32: #{tpu_custom_call.1} parent=11 // pred_fallthru
          _
        // Predicated region
        $region33: #{tpu_custom_call.1} parent=11 // pred_check
          %p318 = pneg %p189
        $region34: #{tpu_custom_call.1} parent=11 // pred_check_branch
          %320 = sbr.rel (%p318) target = $region36
        $region35: #{tpu_custom_call.1} parent=11 // pred_region
          _
        $region36: #{tpu_custom_call.1} parent=11 // pred_fallthru
          _
        // Predicated region
        $region37: #{tpu_custom_call.1} parent=11 // pred_check
          %p321 = pneg %p210
        $region38: #{tpu_custom_call.1} parent=11 // pred_check_branch
          %323 = sbr.rel (%p321) target = $region40
        $region39: #{tpu_custom_call.1} parent=11 // pred_region
          _
        $region40: #{tpu_custom_call.1} parent=11 // pred_fallthru
          _
        // Predicated region
        $region41: #{tpu_custom_call.1} parent=11 // pred_check
          %p324 = pneg %p231
        $region42: #{tpu_custom_call.1} parent=11 // pred_check_branch
          %326 = sbr.rel (%p324) target = $region44
        $region43: #{tpu_custom_call.1} parent=11 // pred_region
          _
        $region44: #{tpu_custom_call.1} parent=11 // pred_fallthru
          _
      $region12: #{tpu_custom_call.1} parent=5 // pred_fallthru
        _
      %p327 = scmp.lt.s32.totalorder %s23, 6
      // Predicated region
      $region45: #{tpu_custom_call.1} parent=5 // pred_check
        %p328 = pneg %p327
      $region46: #{tpu_custom_call.1} parent=5 // pred_check_branch
        %330 = sbr.rel (%p328) target = $region48
      $region47: #{tpu_custom_call.1} parent=5 // pred_region
        // Predicated region
        $region49: #{tpu_custom_call.1} parent=47 // pred_check
          %p331 = pneg %p57
        $region50: #{tpu_custom_call.1} parent=47 // pred_check_branch
          %333 = sbr.rel (%p331) target = $region52
        $region51: #{tpu_custom_call.1} parent=47 // pred_region
          %s334 = sand.u32 %s47, 1
          %s335 = scalar_lea.sflag [#allocation4], %s334
          %s336 = sand.u32 %s47, 1
          %s337 = smul.addr %s336, 32
          %s338 = scalar_lea.vmem [#allocation3], %s337
          %340 = vsyncadd %s335, 0
          %s341 = smul.addr %s30, 12
          %s342 = sadd.s32 %s31, %s341
          %s343 = smul.addr %s342, 8
          %s344 = scalar_lea.hbm %s0, %s343
          %s345 = sshll.u32 %s344, 4
          %s346 = int_to_ptr.hbm [resolvable:$true] %s345
          %s347 = sshll.u32 %s338, 4
          %s348 = int_to_ptr.vmem [resolvable:$true] %s347
          %353 = dma.hbm_to_vmem [thread:$0]  %s346, 512, %s348, %s335, 384, 128, 8
        $region52: #{tpu_custom_call.1} parent=47 // pred_fallthru
          _
      $region48: #{tpu_custom_call.1} parent=5 // pred_fallthru
        _
      %p354 = scmp.le.s32.totalorder 1, %s23
      %p355 = scmp.lt.s32.totalorder %s23, 7
      %p356 = pnand %p354, %p355
      %p357 = pneg %p356
      // Predicated region
      $region53: #{tpu_custom_call.1} parent=5 // pred_check
        _
      $region54: #{tpu_custom_call.1} parent=5 // pred_check_branch
        %359 = sbr.rel (%p356) target = $region56
      $region55: #{tpu_custom_call.1} parent=5 // pred_region
        %s360 = ssub.s32 %s23, 1
        %s361 = sand.u32 %s50, 1
        %s362 = scalar_lea.sflag [#allocation4], %s361
        %s363 = sand.u32 %s50, 1
        %s364 = smul.addr %s363, 32
        %s365 = scalar_lea.vmem [#allocation3], %s364
        // Predicated region
        $region57: #{tpu_custom_call.1} parent=55 // pred_check
          %p366 = pneg %p63
        $region58: #{tpu_custom_call.1} parent=55 // pred_check_branch
          %368 = sbr.rel (%p366) target = $region60
        $region59: #{tpu_custom_call.1} parent=55 // pred_region
          %370 = dma.done %s362, 512
        $region60: #{tpu_custom_call.1} parent=55 // pred_fallthru
          _
        // Predicated region
        $region61: #{tpu_custom_call.1} parent=55 // pred_check
          %p371 = pneg %p105
        $region62: #{tpu_custom_call.1} parent=55 // pred_check_branch
          %373 = sbr.rel (%p371) target = $region64
        $region63: #{tpu_custom_call.1} parent=55 // pred_region
          %375 = dma.done [#allocation7], 128
        $region64: #{tpu_custom_call.1} parent=55 // pred_fallthru
          _
        // Predicated region
        $region65: #{tpu_custom_call.1} parent=55 // pred_check
          %p376 = pneg %p126
        $region66: #{tpu_custom_call.1} parent=55 // pred_check_branch
          %378 = sbr.rel (%p376) target = $region68
        $region67: #{tpu_custom_call.1} parent=55 // pred_region
          %380 = dma.done [#allocation7], 16384
        $region68: #{tpu_custom_call.1} parent=55 // pred_fallthru
          _
        // Predicated region
        $region69: #{tpu_custom_call.1} parent=55 // pred_check
          %p381 = pneg %p168
        $region70: #{tpu_custom_call.1} parent=55 // pred_check_branch
          %383 = sbr.rel (%p381) target = $region72
        $region71: #{tpu_custom_call.1} parent=55 // pred_region
          %385 = dma.done [#allocation10], 4096
        $region72: #{tpu_custom_call.1} parent=55 // pred_fallthru
          _
        %s386 = sand.u32 %s50, 1
        %s387 = scalar_lea.sflag [#allocation4], %s386
        %s388 = sand.u32 %s50, 1
        %s389 = smul.addr %s388, 32
        %s390 = scalar_lea.vmem [#allocation3], %s389
        %p391 = pneg %p63
        %p392 = pneg %p60
        %p393 = pneg %p84
        %p394 = pneg %p81
        %p395 = pneg %p105
        %p396 = pneg %p102
        %p397 = pneg %p126
        %p398 = pneg %p123
        %p399 = pneg %p147
        %p400 = pneg %p144
        %p401 = pneg %p168
        %p402 = pneg %p165
        %p403 = pneg %p189
        %p404 = pneg %p186
        %p405 = pneg %p210
        %p406 = pneg %p207
        %p407 = pneg %p231
        %p408 = pneg %p228
        %p409 = pneg %p257
        %p410 = pneg %p254
        %s411 = sand.u32 %s244, 1
        %s412 = scalar_lea.sflag [#allocation5], %s411
        %s413 = sand.u32 %s244, 1
        %s414 = scalar_lea.vmem [#allocation11], %s413
        %p416 = scmp.eq.s32.totalorder %s33, 0
        // Predicated region
        $region73: #{tpu_custom_call.1} parent=55 // pred_check
          %p417 = pneg %p416
        $region74: #{tpu_custom_call.1} parent=55 // pred_check_branch
          %419 = sbr.rel (%p417) target = $region76
        $region75: #{tpu_custom_call.1} parent=55 // pred_region
          %v420 = vlaneseq
          %vm421 = vcmp.ge.s32.totalorder %v420, 0
          %vm422 = vcmp.lt.s32.totalorder %v420, 256
          %vm423 = vmand %vm421, %vm422
          %424 = vst.msk [vmem:[#allocation2] sm:$0x3] %vm423, -inf
        $region76: #{tpu_custom_call.1} parent=55 // pred_fallthru
          _
        %v425 = vld [vmem:[%s365] sm:$0xff]
        %v426 = vld [vmem:[%s365 + $0x8] sm:$0xff]
        %v427 = vld [vmem:[%s365 + $0x10] sm:$0xff]
        %v428 = vld [vmem:[%s365 + $0x18] sm:$0xff]
        %v429 = vpack.c.bf16 %v426, %v425
        %v430 = vpack.c.bf16 %v428, %v427
        %v431 = vld [vmem:[%s1] sm:$0xff]
        %v432 = vld [vmem:[%s1 + $0x8] sm:$0xff]
        %v433 = vld [vmem:[%s1 + $0x10] sm:$0xff]
        %v434 = vld [vmem:[%s1 + $0x18] sm:$0xff]
        %v435 = vld [vmem:[%s1 + $0x20] sm:$0xff]
        %v436 = vld [vmem:[%s1 + $0x28] sm:$0xff]
        %v437 = vld [vmem:[%s1 + $0x30] sm:$0xff]
        %v438 = vld [vmem:[%s1 + $0x38] sm:$0xff]
        %v439 = vld [vmem:[%s1 + $0x40] sm:$0xff]
        %v440 = vld [vmem:[%s1 + $0x48] sm:$0xff]
        %v441 = vld [vmem:[%s1 + $0x50] sm:$0xff]
        %v442 = vld [vmem:[%s1 + $0x58] sm:$0xff]
        %v443 = vld [vmem:[%s1 + $0x60] sm:$0xff]
        %v444 = vld [vmem:[%s1 + $0x68] sm:$0xff]
        %v445 = vld [vmem:[%s1 + $0x70] sm:$0xff]
        %v446 = vld [vmem:[%s1 + $0x78] sm:$0xff]
        %v447 = vld [vmem:[#allocation6] sm:$0xff]
        %v449 = vperm.slane %v447, 0
        %v450 = vperm.slane %v447, 1
        %v451 = vperm.slane %v447, 2
        %v452 = vperm.slane %v447, 3
        %v453 = vperm.slane %v447, 4
        %v454 = vperm.slane %v447, 5
        %v455 = vperm.slane %v447, 6
        %v456 = vperm.slane %v447, 7
        %465 = vxpose.xlu0.c.b16.start [1/8] %v429, 128
        %466 = vxpose.xlu0.c.b16.cont [2/8] %v430, 128
        %467 = vxpose.xlu0.c.b16.cont [3/8] 0, 128
        %468 = vxpose.xlu0.c.b16.cont [4/8] 0, 128
        %469 = vxpose.xlu0.c.b16.cont [5/8] 0, 128
        %470 = vxpose.xlu0.c.b16.cont [6/8] 0, 128
        %471 = vxpose.xlu0.c.b16.cont [7/8] 0, 128
        %472 = vxpose.xlu0.c.b16.end [8/8] 0, 128
        %v473 = vpop.trf.xlu0
        %v474 = vpop.trf.xlu0
        %v475 = vpop.trf.xlu0
        %v476 = vpop.trf.xlu0
        %v477 = vpop.trf.xlu0
        %v478 = vpop.trf.xlu0
        %v479 = vpop.trf.xlu0
        %v480 = vpop.trf.xlu0
        %v497 = vunpack.c.l.b16 %v431
        %v498 = vunpack.c.h.b16 %v431
        %v499 = vunpack.c.l.b16 %v432
        %v500 = vunpack.c.h.b16 %v432
        %v501 = vunpack.c.l.b16 %v433
        %v502 = vunpack.c.h.b16 %v433
        %v503 = vunpack.c.l.b16 %v434
        %v504 = vunpack.c.h.b16 %v434
        %v505 = vunpack.c.l.b16 %v435
        %v506 = vunpack.c.h.b16 %v435
        %v507 = vunpack.c.l.b16 %v436
        %v508 = vunpack.c.h.b16 %v436
        %v509 = vunpack.c.l.b16 %v437
        %v510 = vunpack.c.h.b16 %v437
        %v511 = vunpack.c.l.b16 %v438
        %v512 = vunpack.c.h.b16 %v438
        %v513 = vunpack.c.l.b16 %v439
        %v514 = vunpack.c.h.b16 %v439
        %v515 = vunpack.c.l.b16 %v440
        %v516 = vunpack.c.h.b16 %v440
        %v517 = vunpack.c.l.b16 %v441
        %v518 = vunpack.c.h.b16 %v441
        %v519 = vunpack.c.l.b16 %v442
        %v520 = vunpack.c.h.b16 %v442
        %v521 = vunpack.c.l.b16 %v443
        %v522 = vunpack.c.h.b16 %v443
        %v523 = vunpack.c.l.b16 %v444
        %v524 = vunpack.c.h.b16 %v444
        %v525 = vunpack.c.l.b16 %v445
        %v526 = vunpack.c.h.b16 %v445
        %v527 = vunpack.c.l.b16 %v446
        %v528 = vunpack.c.h.b16 %v446
        %v529 = vpack.c.b16 %v505, %v497
        %v530 = vpack.c.b16 %v506, %v498
        %v531 = vpack.c.b16 %v507, %v499
        %v532 = vpack.c.b16 %v508, %v500
        %v533 = vpack.c.b16 %v509, %v501
        %v534 = vpack.c.b16 %v510, %v502
        %v535 = vpack.c.b16 %v511, %v503
        %v536 = vpack.c.b16 %v512, %v504
        %v537 = vpack.c.b16 %v521, %v513
        %v538 = vpack.c.b16 %v522, %v514
        %v539 = vpack.c.b16 %v523, %v515
        %v540 = vpack.c.b16 %v524, %v516
        %v541 = vpack.c.b16 %v525, %v517
        %v542 = vpack.c.b16 %v526, %v518
        %v543 = vpack.c.b16 %v527, %v519
        %v544 = vpack.c.b16 %v528, %v520
        %vm561 = vcmask 261120
        %v563 = vsel %vm561, %v473, 0
        %v566 = vsel %vm561, %v474, 0
        %v569 = vsel %vm561, %v475, 0
        %v572 = vsel %vm561, %v476, 0
        %v575 = vsel %vm561, %v477, 0
        %v578 = vsel %vm561, %v478, 0
        %v581 = vsel %vm561, %v479, 0
        %v584 = vsel %vm561, %v480, 0
        %586 = vmatpush.bf16.msra.mxu0 0
        %587 = vmatpush.bf16.msra.mxu0 0
        %588 = vmatpush.bf16.msra.mxu0 0
        %589 = vmatpush.bf16.msra.mxu0 0
        %590 = vmatpush.bf16.msra.mxu0 0
        %591 = vmatpush.bf16.msra.mxu0 0
        %592 = vmatpush.bf16.msra.mxu0 %v537
        %593 = vmatpush.bf16.msra.mxu0 %v529
        %594 = vmatmul.bf16.gmra.mxu0 %v563
        %v595 = vpop.f32.mrf.mxu0
        %v596 = vadd.f32 %v449, %v595
        %v597 = vpop.f32.mrf.mxu0
        %v598 = vadd.f32 %v449, %v597
        %599 = vmatmul.bf16.gmra.mxu0 %v566
        %v600 = vpop.f32.mrf.mxu0
        %v601 = vadd.f32 %v449, %v600
        %v602 = vpop.f32.mrf.mxu0
        %v603 = vadd.f32 %v449, %v602
        %604 = vmatmul.bf16.gmra.mxu0 %v569
        %v605 = vpop.f32.mrf.mxu0
        %v606 = vadd.f32 %v449, %v605
        %v607 = vpop.f32.mrf.mxu0
        %v608 = vadd.f32 %v449, %v607
        %609 = vmatmul.bf16.gmra.mxu0 %v572
        %v610 = vpop.f32.mrf.mxu0
        %v611 = vadd.f32 %v449, %v610
        %v612 = vpop.f32.mrf.mxu0
        %v613 = vadd.f32 %v449, %v612
        %614 = vmatmul.bf16.gmra.mxu0 %v575
        %v615 = vpop.f32.mrf.mxu0
        %v616 = vadd.f32 %v449, %v615
        %v617 = vpop.f32.mrf.mxu0
        %v618 = vadd.f32 %v449, %v617
        %619 = vmatmul.bf16.gmra.mxu0 %v578
        %v620 = vpop.f32.mrf.mxu0
        %v621 = vadd.f32 %v449, %v620
        %v622 = vpop.f32.mrf.mxu0
        %v623 = vadd.f32 %v449, %v622
        %624 = vmatmul.bf16.gmra.mxu0 %v581
        %v625 = vpop.f32.mrf.mxu0
        %v626 = vadd.f32 %v449, %v625
        %v627 = vpop.f32.mrf.mxu0
        %v628 = vadd.f32 %v449, %v627
        %629 = vmatmul.bf16.gmra.mxu0 %v584
        %v630 = vpop.f32.mrf.mxu0
        %v631 = vadd.f32 %v449, %v630
        %v632 = vpop.f32.mrf.mxu0
        %v633 = vadd.f32 %v449, %v632
        %634 = vdwg.mxu0
        %635 = vmatpush.bf16.msra.mxu0 0
        %636 = vmatpush.bf16.msra.mxu0 0
        %637 = vmatpush.bf16.msra.mxu0 0
        %638 = vmatpush.bf16.msra.mxu0 0
        %639 = vmatpush.bf16.msra.mxu0 0
        %640 = vmatpush.bf16.msra.mxu0 0
        %641 = vmatpush.bf16.msra.mxu0 %v538
        %642 = vmatpush.bf16.msra.mxu0 %v530
        %643 = vmatmul.bf16.gmra.mxu0 %v563
        %v644 = vpop.f32.mrf.mxu0
        %v645 = vadd.f32 %v450, %v644
        %v646 = vpop.f32.mrf.mxu0
        %v647 = vadd.f32 %v450, %v646
        %648 = vmatmul.bf16.gmra.mxu0 %v566
        %v649 = vpop.f32.mrf.mxu0
        %v650 = vadd.f32 %v450, %v649
        %v651 = vpop.f32.mrf.mxu0
        %v652 = vadd.f32 %v450, %v651
        %653 = vmatmul.bf16.gmra.mxu0 %v569
        %v654 = vpop.f32.mrf.mxu0
        %v655 = vadd.f32 %v450, %v654
        %v656 = vpop.f32.mrf.mxu0
        %v657 = vadd.f32 %v450, %v656
        %658 = vmatmul.bf16.gmra.mxu0 %v572
        %v659 = vpop.f32.mrf.mxu0
        %v660 = vadd.f32 %v450, %v659
        %v661 = vpop.f32.mrf.mxu0
        %v662 = vadd.f32 %v450, %v661
        %663 = vmatmul.bf16.gmra.mxu0 %v575
        %v664 = vpop.f32.mrf.mxu0
        %v665 = vadd.f32 %v450, %v664
        %v666 = vpop.f32.mrf.mxu0
        %v667 = vadd.f32 %v450, %v666
        %668 = vmatmul.bf16.gmra.mxu0 %v578
        %v669 = vpop.f32.mrf.mxu0
        %v670 = vadd.f32 %v450, %v669
        %v671 = vpop.f32.mrf.mxu0
        %v672 = vadd.f32 %v450, %v671
        %673 = vmatmul.bf16.gmra.mxu0 %v581
        %v674 = vpop.f32.mrf.mxu0
        %v675 = vadd.f32 %v450, %v674
        %v676 = vpop.f32.mrf.mxu0
        %v677 = vadd.f32 %v450, %v676
        %678 = vmatmul.bf16.gmra.mxu0 %v584
        %v679 = vpop.f32.mrf.mxu0
        %v680 = vadd.f32 %v450, %v679
        %v681 = vpop.f32.mrf.mxu0
        %v682 = vadd.f32 %v450, %v681
        %683 = vdwg.mxu0
        %684 = vmatpush.bf16.msra.mxu0 0
        %685 = vmatpush.bf16.msra.mxu0 0
        %686 = vmatpush.bf16.msra.mxu0 0
        %687 = vmatpush.bf16.msra.mxu0 0
        %688 = vmatpush.bf16.msra.mxu0 0
        %689 = vmatpush.bf16.msra.mxu0 0
        %690 = vmatpush.bf16.msra.mxu0 %v539
        %691 = vmatpush.bf16.msra.mxu0 %v531
        %692 = vmatmul.bf16.gmra.mxu0 %v563
        %v693 = vpop.f32.mrf.mxu0
        %v694 = vadd.f32 %v451, %v693
        %v695 = vpop.f32.mrf.mxu0
        %v696 = vadd.f32 %v451, %v695
        %697 = vmatmul.bf16.gmra.mxu0 %v566
        %v698 = vpop.f32.mrf.mxu0
        %v699 = vadd.f32 %v451, %v698
        %v700 = vpop.f32.mrf.mxu0
        %v701 = vadd.f32 %v451, %v700
        %702 = vmatmul.bf16.gmra.mxu0 %v569
        %v703 = vpop.f32.mrf.mxu0
        %v704 = vadd.f32 %v451, %v703
        %v705 = vpop.f32.mrf.mxu0
        %v706 = vadd.f32 %v451, %v705
        %707 = vmatmul.bf16.gmra.mxu0 %v572
        %v708 = vpop.f32.mrf.mxu0
        %v709 = vadd.f32 %v451, %v708
        %v710 = vpop.f32.mrf.mxu0
        %v711 = vadd.f32 %v451, %v710
        %712 = vmatmul.bf16.gmra.mxu0 %v575
        %v713 = vpop.f32.mrf.mxu0
        %v714 = vadd.f32 %v451, %v713
        %v715 = vpop.f32.mrf.mxu0
        %v716 = vadd.f32 %v451, %v715
        %717 = vmatmul.bf16.gmra.mxu0 %v578
        %v718 = vpop.f32.mrf.mxu0
        %v719 = vadd.f32 %v451, %v718
        %v720 = vpop.f32.mrf.mxu0
        %v721 = vadd.f32 %v451, %v720
        %722 = vmatmul.bf16.gmra.mxu0 %v581
        %v723 = vpop.f32.mrf.mxu0
        %v724 = vadd.f32 %v451, %v723
        %v725 = vpop.f32.mrf.mxu0
        %v726 = vadd.f32 %v451, %v725
        %727 = vmatmul.bf16.gmra.mxu0 %v584
        %v728 = vpop.f32.mrf.mxu0
        %v729 = vadd.f32 %v451, %v728
        %v730 = vpop.f32.mrf.mxu0
        %v731 = vadd.f32 %v451, %v730
        %732 = vdwg.mxu0
        %733 = vmatpush.bf16.msra.mxu0 0
        %734 = vmatpush.bf16.msra.mxu0 0
        %735 = vmatpush.bf16.msra.mxu0 0
        %736 = vmatpush.bf16.msra.mxu0 0
        %737 = vmatpush.bf16.msra.mxu0 0
        %738 = vmatpush.bf16.msra.mxu0 0
        %739 = vmatpush.bf16.msra.mxu0 %v540
        %740 = vmatpush.bf16.msra.mxu0 %v532
        %741 = vmatmul.bf16.gmra.mxu0 %v563
        %v742 = vpop.f32.mrf.mxu0
        %v743 = vadd.f32 %v452, %v742
        %v744 = vpop.f32.mrf.mxu0
        %v745 = vadd.f32 %v452, %v744
        %746 = vmatmul.bf16.gmra.mxu0 %v566
        %v747 = vpop.f32.mrf.mxu0
        %v748 = vadd.f32 %v452, %v747
        %v749 = vpop.f32.mrf.mxu0
        %v750 = vadd.f32 %v452, %v749
        %751 = vmatmul.bf16.gmra.mxu0 %v569
        %v752 = vpop.f32.mrf.mxu0
        %v753 = vadd.f32 %v452, %v752
        %v754 = vpop.f32.mrf.mxu0
        %v755 = vadd.f32 %v452, %v754
        %756 = vmatmul.bf16.gmra.mxu0 %v572
        %v757 = vpop.f32.mrf.mxu0
        %v758 = vadd.f32 %v452, %v757
        %v759 = vpop.f32.mrf.mxu0
        %v760 = vadd.f32 %v452, %v759
        %761 = vmatmul.bf16.gmra.mxu0 %v575
        %v762 = vpop.f32.mrf.mxu0
        %v763 = vadd.f32 %v452, %v762
        %v764 = vpop.f32.mrf.mxu0
        %v765 = vadd.f32 %v452, %v764
        %766 = vmatmul.bf16.gmra.mxu0 %v578
        %v767 = vpop.f32.mrf.mxu0
        %v768 = vadd.f32 %v452, %v767
        %v769 = vpop.f32.mrf.mxu0
        %v770 = vadd.f32 %v452, %v769
        %771 = vmatmul.bf16.gmra.mxu0 %v581
        %v772 = vpop.f32.mrf.mxu0
        %v773 = vadd.f32 %v452, %v772
        %v774 = vpop.f32.mrf.mxu0
        %v775 = vadd.f32 %v452, %v774
        %776 = vmatmul.bf16.gmra.mxu0 %v584
        %v777 = vpop.f32.mrf.mxu0
        %v778 = vadd.f32 %v452, %v777
        %v779 = vpop.f32.mrf.mxu0
        %v780 = vadd.f32 %v452, %v779
        %781 = vdwg.mxu0
        %782 = vmatpush.bf16.msra.mxu0 0
        %783 = vmatpush.bf16.msra.mxu0 0
        %784 = vmatpush.bf16.msra.mxu0 0
        %785 = vmatpush.bf16.msra.mxu0 0
        %786 = vmatpush.bf16.msra.mxu0 0
        %787 = vmatpush.bf16.msra.mxu0 0
        %788 = vmatpush.bf16.msra.mxu0 %v541
        %789 = vmatpush.bf16.msra.mxu0 %v533
        %790 = vmatmul.bf16.gmra.mxu0 %v563
        %v791 = vpop.f32.mrf.mxu0
        %v792 = vadd.f32 %v453, %v791
        %v793 = vpop.f32.mrf.mxu0
        %v794 = vadd.f32 %v453, %v793
        %795 = vmatmul.bf16.gmra.mxu0 %v566
        %v796 = vpop.f32.mrf.mxu0
        %v797 = vadd.f32 %v453, %v796
        %v798 = vpop.f32.mrf.mxu0
        %v799 = vadd.f32 %v453, %v798
        %800 = vmatmul.bf16.gmra.mxu0 %v569
        %v801 = vpop.f32.mrf.mxu0
        %v802 = vadd.f32 %v453, %v801
        %v803 = vpop.f32.mrf.mxu0
        %v804 = vadd.f32 %v453, %v803
        %805 = vmatmul.bf16.gmra.mxu0 %v572
        %v806 = vpop.f32.mrf.mxu0
        %v807 = vadd.f32 %v453, %v806
        %v808 = vpop.f32.mrf.mxu0
        %v809 = vadd.f32 %v453, %v808
        %810 = vmatmul.bf16.gmra.mxu0 %v575
        %v811 = vpop.f32.mrf.mxu0
        %v812 = vadd.f32 %v453, %v811
        %v813 = vpop.f32.mrf.mxu0
        %v814 = vadd.f32 %v453, %v813
        %815 = vmatmul.bf16.gmra.mxu0 %v578
        %v816 = vpop.f32.mrf.mxu0
        %v817 = vadd.f32 %v453, %v816
        %v818 = vpop.f32.mrf.mxu0
        %v819 = vadd.f32 %v453, %v818
        %820 = vmatmul.bf16.gmra.mxu0 %v581
        %v821 = vpop.f32.mrf.mxu0
        %v822 = vadd.f32 %v453, %v821
        %v823 = vpop.f32.mrf.mxu0
        %v824 = vadd.f32 %v453, %v823
        %825 = vmatmul.bf16.gmra.mxu0 %v584
        %v826 = vpop.f32.mrf.mxu0
        %v827 = vadd.f32 %v453, %v826
        %v828 = vpop.f32.mrf.mxu0
        %v829 = vadd.f32 %v453, %v828
        %830 = vdwg.mxu0
        %831 = vmatpush.bf16.msra.mxu0 0
        %832 = vmatpush.bf16.msra.mxu0 0
        %833 = vmatpush.bf16.msra.mxu0 0
        %834 = vmatpush.bf16.msra.mxu0 0
        %835 = vmatpush.bf16.msra.mxu0 0
        %836 = vmatpush.bf16.msra.mxu0 0
        %837 = vmatpush.bf16.msra.mxu0 %v542
        %838 = vmatpush.bf16.msra.mxu0 %v534
        %839 = vmatmul.bf16.gmra.mxu0 %v563
        %v840 = vpop.f32.mrf.mxu0
        %v841 = vadd.f32 %v454, %v840
        %v842 = vpop.f32.mrf.mxu0
        %v843 = vadd.f32 %v454, %v842
        %844 = vmatmul.bf16.gmra.mxu0 %v566
        %v845 = vpop.f32.mrf.mxu0
        %v846 = vadd.f32 %v454, %v845
        %v847 = vpop.f32.mrf.mxu0
        %v848 = vadd.f32 %v454, %v847
        %849 = vmatmul.bf16.gmra.mxu0 %v569
        %v850 = vpop.f32.mrf.mxu0
        %v851 = vadd.f32 %v454, %v850
        %v852 = vpop.f32.mrf.mxu0
        %v853 = vadd.f32 %v454, %v852
        %854 = vmatmul.bf16.gmra.mxu0 %v572
        %v855 = vpop.f32.mrf.mxu0
        %v856 = vadd.f32 %v454, %v855
        %v857 = vpop.f32.mrf.mxu0
        %v858 = vadd.f32 %v454, %v857
        %859 = vmatmul.bf16.gmra.mxu0 %v575
        %v860 = vpop.f32.mrf.mxu0
        %v861 = vadd.f32 %v454, %v860
        %v862 = vpop.f32.mrf.mxu0
        %v863 = vadd.f32 %v454, %v862
        %864 = vmatmul.bf16.gmra.mxu0 %v578
        %v865 = vpop.f32.mrf.mxu0
        %v866 = vadd.f32 %v454, %v865
        %v867 = vpop.f32.mrf.mxu0
        %v868 = vadd.f32 %v454, %v867
        %869 = vmatmul.bf16.gmra.mxu0 %v581
        %v870 = vpop.f32.mrf.mxu0
        %v871 = vadd.f32 %v454, %v870
        %v872 = vpop.f32.mrf.mxu0
        %v873 = vadd.f32 %v454, %v872
        %874 = vmatmul.bf16.gmra.mxu0 %v584
        %v875 = vpop.f32.mrf.mxu0
        %v876 = vadd.f32 %v454, %v875
        %v877 = vpop.f32.mrf.mxu0
        %v878 = vadd.f32 %v454, %v877
        %879 = vdwg.mxu0
        %880 = vmatpush.bf16.msra.mxu0 0
        %881 = vmatpush.bf16.msra.mxu0 0
        %882 = vmatpush.bf16.msra.mxu0 0
        %883 = vmatpush.bf16.msra.mxu0 0
        %884 = vmatpush.bf16.msra.mxu0 0
        %885 = vmatpush.bf16.msra.mxu0 0
        %886 = vmatpush.bf16.msra.mxu0 %v543
        %887 = vmatpush.bf16.msra.mxu0 %v535
        %888 = vmatmul.bf16.gmra.mxu0 %v563
        %v889 = vpop.f32.mrf.mxu0
        %v890 = vadd.f32 %v455, %v889
        %v891 = vpop.f32.mrf.mxu0
        %v892 = vadd.f32 %v455, %v891
        %893 = vmatmul.bf16.gmra.mxu0 %v566
        %v894 = vpop.f32.mrf.mxu0
        %v895 = vadd.f32 %v455, %v894
        %v896 = vpop.f32.mrf.mxu0
        %v897 = vadd.f32 %v455, %v896
        %898 = vmatmul.bf16.gmra.mxu0 %v569
        %v899 = vpop.f32.mrf.mxu0
        %v900 = vadd.f32 %v455, %v899
        %v901 = vpop.f32.mrf.mxu0
        %v902 = vadd.f32 %v455, %v901
        %903 = vmatmul.bf16.gmra.mxu0 %v572
        %v904 = vpop.f32.mrf.mxu0
        %v905 = vadd.f32 %v455, %v904
        %v906 = vpop.f32.mrf.mxu0
        %v907 = vadd.f32 %v455, %v906
        %908 = vmatmul.bf16.gmra.mxu0 %v575
        %v909 = vpop.f32.mrf.mxu0
        %v910 = vadd.f32 %v455, %v909
        %v911 = vpop.f32.mrf.mxu0
        %v912 = vadd.f32 %v455, %v911
        %913 = vmatmul.bf16.gmra.mxu0 %v578
        %v914 = vpop.f32.mrf.mxu0
        %v915 = vadd.f32 %v455, %v914
        %v916 = vpop.f32.mrf.mxu0
        %v917 = vadd.f32 %v455, %v916
        %918 = vmatmul.bf16.gmra.mxu0 %v581
        %v919 = vpop.f32.mrf.mxu0
        %v920 = vadd.f32 %v455, %v919
        %v921 = vpop.f32.mrf.mxu0
        %v922 = vadd.f32 %v455, %v921
        %923 = vmatmul.bf16.gmra.mxu0 %v584
        %v924 = vpop.f32.mrf.mxu0
        %v925 = vadd.f32 %v455, %v924
        %v926 = vpop.f32.mrf.mxu0
        %v927 = vadd.f32 %v455, %v926
        %928 = vdwg.mxu0
        %929 = vmatpush.bf16.msra.mxu0 0
        %930 = vmatpush.bf16.msra.mxu0 0
        %931 = vmatpush.bf16.msra.mxu0 0
        %932 = vmatpush.bf16.msra.mxu0 0
        %933 = vmatpush.bf16.msra.mxu0 0
        %934 = vmatpush.bf16.msra.mxu0 0
        %935 = vmatpush.bf16.msra.mxu0 %v544
        %936 = vmatpush.bf16.msra.mxu0 %v536
        %937 = vmatmul.bf16.gmra.mxu0 %v563
        %v938 = vpop.f32.mrf.mxu0
        %v939 = vadd.f32 %v456, %v938
        %v940 = vpop.f32.mrf.mxu0
        %v941 = vadd.f32 %v456, %v940
        %942 = vmatmul.bf16.gmra.mxu0 %v566
        %v943 = vpop.f32.mrf.mxu0
        %v944 = vadd.f32 %v456, %v943
        %v945 = vpop.f32.mrf.mxu0
        %v946 = vadd.f32 %v456, %v945
        %947 = vmatmul.bf16.gmra.mxu0 %v569
        %v948 = vpop.f32.mrf.mxu0
        %v949 = vadd.f32 %v456, %v948
        %v950 = vpop.f32.mrf.mxu0
        %v951 = vadd.f32 %v456, %v950
        %952 = vmatmul.bf16.gmra.mxu0 %v572
        %v953 = vpop.f32.mrf.mxu0
        %v954 = vadd.f32 %v456, %v953
        %v955 = vpop.f32.mrf.mxu0
        %v956 = vadd.f32 %v456, %v955
        %957 = vmatmul.bf16.gmra.mxu0 %v575
        %v958 = vpop.f32.mrf.mxu0
        %v959 = vadd.f32 %v456, %v958
        %v960 = vpop.f32.mrf.mxu0
        %v961 = vadd.f32 %v456, %v960
        %962 = vmatmul.bf16.gmra.mxu0 %v578
        %v963 = vpop.f32.mrf.mxu0
        %v964 = vadd.f32 %v456, %v963
        %v965 = vpop.f32.mrf.mxu0
        %v966 = vadd.f32 %v456, %v965
        %967 = vmatmul.bf16.gmra.mxu0 %v581
        %v968 = vpop.f32.mrf.mxu0
        %v969 = vadd.f32 %v456, %v968
        %v970 = vpop.f32.mrf.mxu0
        %v971 = vadd.f32 %v456, %v970
        %972 = vmatmul.bf16.gmra.mxu0 %v584
        %v973 = vpop.f32.mrf.mxu0
        %v974 = vadd.f32 %v456, %v973
        %v975 = vpop.f32.mrf.mxu0
        %v976 = vadd.f32 %v456, %v975
        %977 = vdwg.mxu0
        %v978 = vmax.f32 %v596, 0.0
        %v979 = vmax.f32 %v645, 0.0
        %v980 = vmax.f32 %v694, 0.0
        %v981 = vmax.f32 %v743, 0.0
        %v982 = vmax.f32 %v792, 0.0
        %v983 = vmax.f32 %v841, 0.0
        %v984 = vmax.f32 %v890, 0.0
        %v985 = vmax.f32 %v939, 0.0
        %v986 = vmax.f32 %v598, 0.0
        %v987 = vmax.f32 %v647, 0.0
        %v988 = vmax.f32 %v696, 0.0
        %v989 = vmax.f32 %v745, 0.0
        %v990 = vmax.f32 %v794, 0.0
        %v991 = vmax.f32 %v843, 0.0
        %v992 = vmax.f32 %v892, 0.0
        %v993 = vmax.f32 %v941, 0.0
        %v994 = vmax.f32 %v601, 0.0
        %v995 = vmax.f32 %v650, 0.0
        %v996 = vmax.f32 %v699, 0.0
        %v997 = vmax.f32 %v748, 0.0
        %v998 = vmax.f32 %v797, 0.0
        %v999 = vmax.f32 %v846, 0.0
        %v1000 = vmax.f32 %v895, 0.0
        %v1001 = vmax.f32 %v944, 0.0
        %v1002 = vmax.f32 %v603, 0.0
        %v1003 = vmax.f32 %v652, 0.0
        %v1004 = vmax.f32 %v701, 0.0
        %v1005 = vmax.f32 %v750, 0.0
        %v1006 = vmax.f32 %v799, 0.0
        %v1007 = vmax.f32 %v848, 0.0
        %v1008 = vmax.f32 %v897, 0.0
        %v1009 = vmax.f32 %v946, 0.0
        %v1010 = vmax.f32 %v606, 0.0
        %v1011 = vmax.f32 %v655, 0.0
        %v1012 = vmax.f32 %v704, 0.0
        %v1013 = vmax.f32 %v753, 0.0
        %v1014 = vmax.f32 %v802, 0.0
        %v1015 = vmax.f32 %v851, 0.0
        %v1016 = vmax.f32 %v900, 0.0
        %v1017 = vmax.f32 %v949, 0.0
        %v1018 = vmax.f32 %v608, 0.0
        %v1019 = vmax.f32 %v657, 0.0
        %v1020 = vmax.f32 %v706, 0.0
        %v1021 = vmax.f32 %v755, 0.0
        %v1022 = vmax.f32 %v804, 0.0
        %v1023 = vmax.f32 %v853, 0.0
        %v1024 = vmax.f32 %v902, 0.0
        %v1025 = vmax.f32 %v951, 0.0
        %v1026 = vmax.f32 %v611, 0.0
        %v1027 = vmax.f32 %v660, 0.0
        %v1028 = vmax.f32 %v709, 0.0
        %v1029 = vmax.f32 %v758, 0.0
        %v1030 = vmax.f32 %v807, 0.0
        %v1031 = vmax.f32 %v856, 0.0
        %v1032 = vmax.f32 %v905, 0.0
        %v1033 = vmax.f32 %v954, 0.0
        %v1034 = vmax.f32 %v613, 0.0
        %v1035 = vmax.f32 %v662, 0.0
        %v1036 = vmax.f32 %v711, 0.0
        %v1037 = vmax.f32 %v760, 0.0
        %v1038 = vmax.f32 %v809, 0.0
        %v1039 = vmax.f32 %v858, 0.0
        %v1040 = vmax.f32 %v907, 0.0
        %v1041 = vmax.f32 %v956, 0.0
        %v1042 = vmax.f32 %v616, 0.0
        %v1043 = vmax.f32 %v665, 0.0
        %v1044 = vmax.f32 %v714, 0.0
        %v1045 = vmax.f32 %v763, 0.0
        %v1046 = vmax.f32 %v812, 0.0
        %v1047 = vmax.f32 %v861, 0.0
        %v1048 = vmax.f32 %v910, 0.0
        %v1049 = vmax.f32 %v959, 0.0
        %v1050 = vmax.f32 %v618, 0.0
        %v1051 = vmax.f32 %v667, 0.0
        %v1052 = vmax.f32 %v716, 0.0
        %v1053 = vmax.f32 %v765, 0.0
        %v1054 = vmax.f32 %v814, 0.0
        %v1055 = vmax.f32 %v863, 0.0
        %v1056 = vmax.f32 %v912, 0.0
        %v1057 = vmax.f32 %v961, 0.0
        %v1058 = vmax.f32 %v621, 0.0
        %v1059 = vmax.f32 %v670, 0.0
        %v1060 = vmax.f32 %v719, 0.0
        %v1061 = vmax.f32 %v768, 0.0
        %v1062 = vmax.f32 %v817, 0.0
        %v1063 = vmax.f32 %v866, 0.0
        %v1064 = vmax.f32 %v915, 0.0
        %v1065 = vmax.f32 %v964, 0.0
        %v1066 = vmax.f32 %v623, 0.0
        %v1067 = vmax.f32 %v672, 0.0
        %v1068 = vmax.f32 %v721, 0.0
        %v1069 = vmax.f32 %v770, 0.0
        %v1070 = vmax.f32 %v819, 0.0
        %v1071 = vmax.f32 %v868, 0.0
        %v1072 = vmax.f32 %v917, 0.0
        %v1073 = vmax.f32 %v966, 0.0
        %v1074 = vmax.f32 %v626, 0.0
        %v1075 = vmax.f32 %v675, 0.0
        %v1076 = vmax.f32 %v724, 0.0
        %v1077 = vmax.f32 %v773, 0.0
        %v1078 = vmax.f32 %v822, 0.0
        %v1079 = vmax.f32 %v871, 0.0
        %v1080 = vmax.f32 %v920, 0.0
        %v1081 = vmax.f32 %v969, 0.0
        %v1082 = vmax.f32 %v628, 0.0
        %v1083 = vmax.f32 %v677, 0.0
        %v1084 = vmax.f32 %v726, 0.0
        %v1085 = vmax.f32 %v775, 0.0
        %v1086 = vmax.f32 %v824, 0.0
        %v1087 = vmax.f32 %v873, 0.0
        %v1088 = vmax.f32 %v922, 0.0
        %v1089 = vmax.f32 %v971, 0.0
        %v1090 = vmax.f32 %v631, 0.0
        %v1091 = vmax.f32 %v680, 0.0
        %v1092 = vmax.f32 %v729, 0.0
        %v1093 = vmax.f32 %v778, 0.0
        %v1094 = vmax.f32 %v827, 0.0
        %v1095 = vmax.f32 %v876, 0.0
        %v1096 = vmax.f32 %v925, 0.0
        %v1097 = vmax.f32 %v974, 0.0
        %v1098 = vmax.f32 %v633, 0.0
        %v1099 = vmax.f32 %v682, 0.0
        %v1100 = vmax.f32 %v731, 0.0
        %v1101 = vmax.f32 %v780, 0.0
        %v1102 = vmax.f32 %v829, 0.0
        %v1103 = vmax.f32 %v878, 0.0
        %v1104 = vmax.f32 %v927, 0.0
        %v1105 = vmax.f32 %v976, 0.0
        %v1106 = vpack.c.bf16 %v986, %v978
        %v1107 = vpack.c.bf16 %v987, %v979
        %v1108 = vpack.c.bf16 %v988, %v980
        %v1109 = vpack.c.bf16 %v989, %v981
        %v1110 = vpack.c.bf16 %v990, %v982
        %v1111 = vpack.c.bf16 %v991, %v983
        %v1112 = vpack.c.bf16 %v992, %v984
        %v1113 = vpack.c.bf16 %v993, %v985
        %v1114 = vpack.c.bf16 %v1002, %v994
        %v1115 = vpack.c.bf16 %v1003, %v995
        %v1116 = vpack.c.bf16 %v1004, %v996
        %v1117 = vpack.c.bf16 %v1005, %v997
        %v1118 = vpack.c.bf16 %v1006, %v998
        %v1119 = vpack.c.bf16 %v1007, %v999
        %v1120 = vpack.c.bf16 %v1008, %v1000
        %v1121 = vpack.c.bf16 %v1009, %v1001
        %v1122 = vpack.c.bf16 %v1018, %v1010
        %v1123 = vpack.c.bf16 %v1019, %v1011
        %v1124 = vpack.c.bf16 %v1020, %v1012
        %v1125 = vpack.c.bf16 %v1021, %v1013
        %v1126 = vpack.c.bf16 %v1022, %v1014
        %v1127 = vpack.c.bf16 %v1023, %v1015
        %v1128 = vpack.c.bf16 %v1024, %v1016
        %v1129 = vpack.c.bf16 %v1025, %v1017
        %v1130 = vpack.c.bf16 %v1034, %v1026
        %v1131 = vpack.c.bf16 %v1035, %v1027
        %v1132 = vpack.c.bf16 %v1036, %v1028
        %v1133 = vpack.c.bf16 %v1037, %v1029
        %v1134 = vpack.c.bf16 %v1038, %v1030
        %v1135 = vpack.c.bf16 %v1039, %v1031
        %v1136 = vpack.c.bf16 %v1040, %v1032
        %v1137 = vpack.c.bf16 %v1041, %v1033
        %v1138 = vpack.c.bf16 %v1050, %v1042
        %v1139 = vpack.c.bf16 %v1051, %v1043
        %v1140 = vpack.c.bf16 %v1052, %v1044
        %v1141 = vpack.c.bf16 %v1053, %v1045
        %v1142 = vpack.c.bf16 %v1054, %v1046
        %v1143 = vpack.c.bf16 %v1055, %v1047
        %v1144 = vpack.c.bf16 %v1056, %v1048
        %v1145 = vpack.c.bf16 %v1057, %v1049
        %v1146 = vpack.c.bf16 %v1066, %v1058
        %v1147 = vpack.c.bf16 %v1067, %v1059
        %v1148 = vpack.c.bf16 %v1068, %v1060
        %v1149 = vpack.c.bf16 %v1069, %v1061
        %v1150 = vpack.c.bf16 %v1070, %v1062
        %v1151 = vpack.c.bf16 %v1071, %v1063
        %v1152 = vpack.c.bf16 %v1072, %v1064
        %v1153 = vpack.c.bf16 %v1073, %v1065
        %v1154 = vpack.c.bf16 %v1082, %v1074
        %v1155 = vpack.c.bf16 %v1083, %v1075
        %v1156 = vpack.c.bf16 %v1084, %v1076
        %v1157 = vpack.c.bf16 %v1085, %v1077
        %v1158 = vpack.c.bf16 %v1086, %v1078
        %v1159 = vpack.c.bf16 %v1087, %v1079
        %v1160 = vpack.c.bf16 %v1088, %v1080
        %v1161 = vpack.c.bf16 %v1089, %v1081
        %v1162 = vpack.c.bf16 %v1098, %v1090
        %v1163 = vpack.c.bf16 %v1099, %v1091
        %v1164 = vpack.c.bf16 %v1100, %v1092
        %v1165 = vpack.c.bf16 %v1101, %v1093
        %v1166 = vpack.c.bf16 %v1102, %v1094
        %v1167 = vpack.c.bf16 %v1103, %v1095
        %v1168 = vpack.c.bf16 %v1104, %v1096
        %v1169 = vpack.c.bf16 %v1105, %v1097
        %v1170 = vld [vmem:[#allocation8] sm:$0xff]
        %v1171 = vld [vmem:[#allocation8 + $0x8] sm:$0xff]
        %v1172 = vld [vmem:[#allocation8 + $0x10] sm:$0xff]
        %v1173 = vld [vmem:[#allocation8 + $0x18] sm:$0xff]
        %v1174 = vld [vmem:[#allocation8 + $0x20] sm:$0xff]
        %v1175 = vld [vmem:[#allocation8 + $0x28] sm:$0xff]
        %v1176 = vld [vmem:[#allocation8 + $0x30] sm:$0xff]
        %v1177 = vld [vmem:[#allocation8 + $0x38] sm:$0xff]
        %v1178 = vld [vmem:[#allocation8 + $0x40] sm:$0xff]
        %v1179 = vld [vmem:[#allocation8 + $0x48] sm:$0xff]
        %v1180 = vld [vmem:[#allocation8 + $0x50] sm:$0xff]
        %v1181 = vld [vmem:[#allocation8 + $0x58] sm:$0xff]
        %v1182 = vld [vmem:[#allocation8 + $0x60] sm:$0xff]
        %v1183 = vld [vmem:[#allocation8 + $0x68] sm:$0xff]
        %v1184 = vld [vmem:[#allocation8 + $0x70] sm:$0xff]
        %v1185 = vld [vmem:[#allocation8 + $0x78] sm:$0xff]
        %v1186 = vld [vmem:[#allocation8 + $0x80] sm:$0xff]
        %v1187 = vld [vmem:[#allocation8 + $0x88] sm:$0xff]
        %v1188 = vld [vmem:[#allocation8 + $0x90] sm:$0xff]
        %v1189 = vld [vmem:[#allocation8 + $0x98] sm:$0xff]
        %v1190 = vld [vmem:[#allocation8 + $0xa0] sm:$0xff]
        %v1191 = vld [vmem:[#allocation8 + $0xa8] sm:$0xff]
        %v1192 = vld [vmem:[#allocation8 + $0xb0] sm:$0xff]
        %v1193 = vld [vmem:[#allocation8 + $0xb8] sm:$0xff]
        %v1194 = vld [vmem:[#allocation8 + $0xc0] sm:$0xff]
        %v1195 = vld [vmem:[#allocation8 + $0xc8] sm:$0xff]
        %v1196 = vld [vmem:[#allocation8 + $0xd0] sm:$0xff]
        %v1197 = vld [vmem:[#allocation8 + $0xd8] sm:$0xff]
        %v1198 = vld [vmem:[#allocation8 + $0xe0] sm:$0xff]
        %v1199 = vld [vmem:[#allocation8 + $0xe8] sm:$0xff]
        %v1200 = vld [vmem:[#allocation8 + $0xf0] sm:$0xff]
        %v1201 = vld [vmem:[#allocation8 + $0xf8] sm:$0xff]
        %v1202 = vld [vmem:[#allocation8 + $0x100] sm:$0xff]
        %v1203 = vld [vmem:[#allocation8 + $0x108] sm:$0xff]
        %v1204 = vld [vmem:[#allocation8 + $0x110] sm:$0xff]
        %v1205 = vld [vmem:[#allocation8 + $0x118] sm:$0xff]
        %v1206 = vld [vmem:[#allocation8 + $0x120] sm:$0xff]
        %v1207 = vld [vmem:[#allocation8 + $0x128] sm:$0xff]
        %v1208 = vld [vmem:[#allocation8 + $0x130] sm:$0xff]
        %v1209 = vld [vmem:[#allocation8 + $0x138] sm:$0xff]
        %v1210 = vld [vmem:[#allocation8 + $0x140] sm:$0xff]
        %v1211 = vld [vmem:[#allocation8 + $0x148] sm:$0xff]
        %v1212 = vld [vmem:[#allocation8 + $0x150] sm:$0xff]
        %v1213 = vld [vmem:[#allocation8 + $0x158] sm:$0xff]
        %v1214 = vld [vmem:[#allocation8 + $0x160] sm:$0xff]
        %v1215 = vld [vmem:[#allocation8 + $0x168] sm:$0xff]
        %v1216 = vld [vmem:[#allocation8 + $0x170] sm:$0xff]
        %v1217 = vld [vmem:[#allocation8 + $0x178] sm:$0xff]
        %v1218 = vld [vmem:[#allocation8 + $0x180] sm:$0xff]
        %v1219 = vld [vmem:[#allocation8 + $0x188] sm:$0xff]
        %v1220 = vld [vmem:[#allocation8 + $0x190] sm:$0xff]
        %v1221 = vld [vmem:[#allocation8 + $0x198] sm:$0xff]
        %v1222 = vld [vmem:[#allocation8 + $0x1a0] sm:$0xff]
        %v1223 = vld [vmem:[#allocation8 + $0x1a8] sm:$0xff]
        %v1224 = vld [vmem:[#allocation8 + $0x1b0] sm:$0xff]
        %v1225 = vld [vmem:[#allocation8 + $0x1b8] sm:$0xff]
        %v1226 = vld [vmem:[#allocation8 + $0x1c0] sm:$0xff]
        %v1227 = vld [vmem:[#allocation8 + $0x1c8] sm:$0xff]
        %v1228 = vld [vmem:[#allocation8 + $0x1d0] sm:$0xff]
        %v1229 = vld [vmem:[#allocation8 + $0x1d8] sm:$0xff]
        %v1230 = vld [vmem:[#allocation8 + $0x1e0] sm:$0xff]
        %v1231 = vld [vmem:[#allocation8 + $0x1e8] sm:$0xff]
        %v1232 = vld [vmem:[#allocation8 + $0x1f0] sm:$0xff]
        %v1233 = vld [vmem:[#allocation8 + $0x1f8] sm:$0xff]
        %v1234 = vld [vmem:[#allocation8 + $0x200] sm:$0xff]
        %v1235 = vld [vmem:[#allocation8 + $0x208] sm:$0xff]
        %v1236 = vld [vmem:[#allocation8 + $0x210] sm:$0xff]
        %v1237 = vld [vmem:[#allocation8 + $0x218] sm:$0xff]
        %v1238 = vld [vmem:[#allocation8 + $0x220] sm:$0xff]
        %v1239 = vld [vmem:[#allocation8 + $0x228] sm:$0xff]
        %v1240 = vld [vmem:[#allocation8 + $0x230] sm:$0xff]
        %v1241 = vld [vmem:[#allocation8 + $0x238] sm:$0xff]
        %v1242 = vld [vmem:[#allocation8 + $0x240] sm:$0xff]
        %v1243 = vld [vmem:[#allocation8 + $0x248] sm:$0xff]
        %v1244 = vld [vmem:[#allocation8 + $0x250] sm:$0xff]
        %v1245 = vld [vmem:[#allocation8 + $0x258] sm:$0xff]
        %v1246 = vld [vmem:[#allocation8 + $0x260] sm:$0xff]
        %v1247 = vld [vmem:[#allocation8 + $0x268] sm:$0xff]
        %v1248 = vld [vmem:[#allocation8 + $0x270] sm:$0xff]
        %v1249 = vld [vmem:[#allocation8 + $0x278] sm:$0xff]
        %v1250 = vld [vmem:[#allocation8 + $0x280] sm:$0xff]
        %v1251 = vld [vmem:[#allocation8 + $0x288] sm:$0xff]
        %v1252 = vld [vmem:[#allocation8 + $0x290] sm:$0xff]
        %v1253 = vld [vmem:[#allocation8 + $0x298] sm:$0xff]
        %v1254 = vld [vmem:[#allocation8 + $0x2a0] sm:$0xff]
        %v1255 = vld [vmem:[#allocation8 + $0x2a8] sm:$0xff]
        %v1256 = vld [vmem:[#allocation8 + $0x2b0] sm:$0xff]
        %v1257 = vld [vmem:[#allocation8 + $0x2b8] sm:$0xff]
        %v1258 = vld [vmem:[#allocation8 + $0x2c0] sm:$0xff]
        %v1259 = vld [vmem:[#allocation8 + $0x2c8] sm:$0xff]
        %v1260 = vld [vmem:[#allocation8 + $0x2d0] sm:$0xff]
        %v1261 = vld [vmem:[#allocation8 + $0x2d8] sm:$0xff]
        %v1262 = vld [vmem:[#allocation8 + $0x2e0] sm:$0xff]
        %v1263 = vld [vmem:[#allocation8 + $0x2e8] sm:$0xff]
        %v1264 = vld [vmem:[#allocation8 + $0x2f0] sm:$0xff]
        %v1265 = vld [vmem:[#allocation8 + $0x2f8] sm:$0xff]
        %v1266 = vld [vmem:[#allocation8 + $0x300] sm:$0xff]
        %v1267 = vld [vmem:[#allocation8 + $0x308] sm:$0xff]
        %v1268 = vld [vmem:[#allocation8 + $0x310] sm:$0xff]
        %v1269 = vld [vmem:[#allocation8 + $0x318] sm:$0xff]
        %v1270 = vld [vmem:[#allocation8 + $0x320] sm:$0xff]
        %v1271 = vld [vmem:[#allocation8 + $0x328] sm:$0xff]
        %v1272 = vld [vmem:[#allocation8 + $0x330] sm:$0xff]
        %v1273 = vld [vmem:[#allocation8 + $0x338] sm:$0xff]
        %v1274 = vld [vmem:[#allocation8 + $0x340] sm:$0xff]
        %v1275 = vld [vmem:[#allocation8 + $0x348] sm:$0xff]
        %v1276 = vld [vmem:[#allocation8 + $0x350] sm:$0xff]
        %v1277 = vld [vmem:[#allocation8 + $0x358] sm:$0xff]
        %v1278 = vld [vmem:[#allocation8 + $0x360] sm:$0xff]
        %v1279 = vld [vmem:[#allocation8 + $0x368] sm:$0xff]
        %v1280 = vld [vmem:[#allocation8 + $0x370] sm:$0xff]
        %v1281 = vld [vmem:[#allocation8 + $0x378] sm:$0xff]
        %v1282 = vld [vmem:[#allocation8 + $0x380] sm:$0xff]
        %v1283 = vld [vmem:[#allocation8 + $0x388] sm:$0xff]
        %v1284 = vld [vmem:[#allocation8 + $0x390] sm:$0xff]
        %v1285 = vld [vmem:[#allocation8 + $0x398] sm:$0xff]
        %v1286 = vld [vmem:[#allocation8 + $0x3a0] sm:$0xff]
        %v1287 = vld [vmem:[#allocation8 + $0x3a8] sm:$0xff]
        %v1288 = vld [vmem:[#allocation8 + $0x3b0] sm:$0xff]
        %v1289 = vld [vmem:[#allocation8 + $0x3b8] sm:$0xff]
        %v1290 = vld [vmem:[#allocation8 + $0x3c0] sm:$0xff]
        %v1291 = vld [vmem:[#allocation8 + $0x3c8] sm:$0xff]
        %v1292 = vld [vmem:[#allocation8 + $0x3d0] sm:$0xff]
        %v1293 = vld [vmem:[#allocation8 + $0x3d8] sm:$0xff]
        %v1294 = vld [vmem:[#allocation8 + $0x3e0] sm:$0xff]
        %v1295 = vld [vmem:[#allocation8 + $0x3e8] sm:$0xff]
        %v1296 = vld [vmem:[#allocation8 + $0x3f0] sm:$0xff]
        %v1297 = vld [vmem:[#allocation8 + $0x3f8] sm:$0xff]
        %v1298 = vld [vmem:[%s4] sm:$0x3]
        %v1300 = vperm.slane %v1298, 0
        %v1301 = vperm.slane %v1298, 1
        %v1432 = vunpack.c.l.b16 %v1170
        %v1433 = vunpack.c.h.b16 %v1170
        %v1434 = vunpack.c.l.b16 %v1171
        %v1435 = vunpack.c.h.b16 %v1171
        %v1436 = vunpack.c.l.b16 %v1172
        %v1437 = vunpack.c.h.b16 %v1172
        %v1438 = vunpack.c.l.b16 %v1173
        %v1439 = vunpack.c.h.b16 %v1173
        %v1440 = vunpack.c.l.b16 %v1174
        %v1441 = vunpack.c.h.b16 %v1174
        %v1442 = vunpack.c.l.b16 %v1175
        %v1443 = vunpack.c.h.b16 %v1175
        %v1444 = vunpack.c.l.b16 %v1176
        %v1445 = vunpack.c.h.b16 %v1176
        %v1446 = vunpack.c.l.b16 %v1177
        %v1447 = vunpack.c.h.b16 %v1177
        %v1448 = vunpack.c.l.b16 %v1178
        %v1449 = vunpack.c.h.b16 %v1178
        %v1450 = vunpack.c.l.b16 %v1179
        %v1451 = vunpack.c.h.b16 %v1179
        %v1452 = vunpack.c.l.b16 %v1180
        %v1453 = vunpack.c.h.b16 %v1180
        %v1454 = vunpack.c.l.b16 %v1181
        %v1455 = vunpack.c.h.b16 %v1181
        %v1456 = vunpack.c.l.b16 %v1182
        %v1457 = vunpack.c.h.b16 %v1182
        %v1458 = vunpack.c.l.b16 %v1183
        %v1459 = vunpack.c.h.b16 %v1183
        %v1460 = vunpack.c.l.b16 %v1184
        %v1461 = vunpack.c.h.b16 %v1184
        %v1462 = vunpack.c.l.b16 %v1185
        %v1463 = vunpack.c.h.b16 %v1185
        %v1464 = vunpack.c.l.b16 %v1186
        %v1465 = vunpack.c.h.b16 %v1186
        %v1466 = vunpack.c.l.b16 %v1187
        %v1467 = vunpack.c.h.b16 %v1187
        %v1468 = vunpack.c.l.b16 %v1188
        %v1469 = vunpack.c.h.b16 %v1188
        %v1470 = vunpack.c.l.b16 %v1189
        %v1471 = vunpack.c.h.b16 %v1189
        %v1472 = vunpack.c.l.b16 %v1190
        %v1473 = vunpack.c.h.b16 %v1190
        %v1474 = vunpack.c.l.b16 %v1191
        %v1475 = vunpack.c.h.b16 %v1191
        %v1476 = vunpack.c.l.b16 %v1192
        %v1477 = vunpack.c.h.b16 %v1192
        %v1478 = vunpack.c.l.b16 %v1193
        %v1479 = vunpack.c.h.b16 %v1193
        %v1480 = vunpack.c.l.b16 %v1194
        %v1481 = vunpack.c.h.b16 %v1194
        %v1482 = vunpack.c.l.b16 %v1195
        %v1483 = vunpack.c.h.b16 %v1195
        %v1484 = vunpack.c.l.b16 %v1196
        %v1485 = vunpack.c.h.b16 %v1196
        %v1486 = vunpack.c.l.b16 %v1197
        %v1487 = vunpack.c.h.b16 %v1197
        %v1488 = vunpack.c.l.b16 %v1198
        %v1489 = vunpack.c.h.b16 %v1198
        %v1490 = vunpack.c.l.b16 %v1199
        %v1491 = vunpack.c.h.b16 %v1199
        %v1492 = vunpack.c.l.b16 %v1200
        %v1493 = vunpack.c.h.b16 %v1200
        %v1494 = vunpack.c.l.b16 %v1201
        %v1495 = vunpack.c.h.b16 %v1201
        %v1496 = vunpack.c.l.b16 %v1202
        %v1497 = vunpack.c.h.b16 %v1202
        %v1498 = vunpack.c.l.b16 %v1203
        %v1499 = vunpack.c.h.b16 %v1203
        %v1500 = vunpack.c.l.b16 %v1204
        %v1501 = vunpack.c.h.b16 %v1204
        %v1502 = vunpack.c.l.b16 %v1205
        %v1503 = vunpack.c.h.b16 %v1205
        %v1504 = vunpack.c.l.b16 %v1206
        %v1505 = vunpack.c.h.b16 %v1206
        %v1506 = vunpack.c.l.b16 %v1207
        %v1507 = vunpack.c.h.b16 %v1207
        %v1508 = vunpack.c.l.b16 %v1208
        %v1509 = vunpack.c.h.b16 %v1208
        %v1510 = vunpack.c.l.b16 %v1209
        %v1511 = vunpack.c.h.b16 %v1209
        %v1512 = vunpack.c.l.b16 %v1210
        %v1513 = vunpack.c.h.b16 %v1210
        %v1514 = vunpack.c.l.b16 %v1211
        %v1515 = vunpack.c.h.b16 %v1211
        %v1516 = vunpack.c.l.b16 %v1212
        %v1517 = vunpack.c.h.b16 %v1212
        %v1518 = vunpack.c.l.b16 %v1213
        %v1519 = vunpack.c.h.b16 %v1213
        %v1520 = vunpack.c.l.b16 %v1214
        %v1521 = vunpack.c.h.b16 %v1214
        %v1522 = vunpack.c.l.b16 %v1215
        %v1523 = vunpack.c.h.b16 %v1215
        %v1524 = vunpack.c.l.b16 %v1216
        %v1525 = vunpack.c.h.b16 %v1216
        %v1526 = vunpack.c.l.b16 %v1217
        %v1527 = vunpack.c.h.b16 %v1217
        %v1528 = vunpack.c.l.b16 %v1218
        %v1529 = vunpack.c.h.b16 %v1218
        %v1530 = vunpack.c.l.b16 %v1219
        %v1531 = vunpack.c.h.b16 %v1219
        %v1532 = vunpack.c.l.b16 %v1220
        %v1533 = vunpack.c.h.b16 %v1220
        %v1534 = vunpack.c.l.b16 %v1221
        %v1535 = vunpack.c.h.b16 %v1221
        %v1536 = vunpack.c.l.b16 %v1222
        %v1537 = vunpack.c.h.b16 %v1222
        %v1538 = vunpack.c.l.b16 %v1223
        %v1539 = vunpack.c.h.b16 %v1223
        %v1540 = vunpack.c.l.b16 %v1224
        %v1541 = vunpack.c.h.b16 %v1224
        %v1542 = vunpack.c.l.b16 %v1225
        %v1543 = vunpack.c.h.b16 %v1225
        %v1544 = vunpack.c.l.b16 %v1226
        %v1545 = vunpack.c.h.b16 %v1226
        %v1546 = vunpack.c.l.b16 %v1227
        %v1547 = vunpack.c.h.b16 %v1227
        %v1548 = vunpack.c.l.b16 %v1228
        %v1549 = vunpack.c.h.b16 %v1228
        %v1550 = vunpack.c.l.b16 %v1229
        %v1551 = vunpack.c.h.b16 %v1229
        %v1552 = vunpack.c.l.b16 %v1230
        %v1553 = vunpack.c.h.b16 %v1230
        %v1554 = vunpack.c.l.b16 %v1231
        %v1555 = vunpack.c.h.b16 %v1231
        %v1556 = vunpack.c.l.b16 %v1232
        %v1557 = vunpack.c.h.b16 %v1232
        %v1558 = vunpack.c.l.b16 %v1233
        %v1559 = vunpack.c.h.b16 %v1233
        %v1560 = vunpack.c.l.b16 %v1234
        %v1561 = vunpack.c.h.b16 %v1234
        %v1562 = vunpack.c.l.b16 %v1235
        %v1563 = vunpack.c.h.b16 %v1235
        %v1564 = vunpack.c.l.b16 %v1236
        %v1565 = vunpack.c.h.b16 %v1236
        %v1566 = vunpack.c.l.b16 %v1237
        %v1567 = vunpack.c.h.b16 %v1237
        %v1568 = vunpack.c.l.b16 %v1238
        %v1569 = vunpack.c.h.b16 %v1238
        %v1570 = vunpack.c.l.b16 %v1239
        %v1571 = vunpack.c.h.b16 %v1239
        %v1572 = vunpack.c.l.b16 %v1240
        %v1573 = vunpack.c.h.b16 %v1240
        %v1574 = vunpack.c.l.b16 %v1241
        %v1575 = vunpack.c.h.b16 %v1241
        %v1576 = vunpack.c.l.b16 %v1242
        %v1577 = vunpack.c.h.b16 %v1242
        %v1578 = vunpack.c.l.b16 %v1243
        %v1579 = vunpack.c.h.b16 %v1243
        %v1580 = vunpack.c.l.b16 %v1244
        %v1581 = vunpack.c.h.b16 %v1244
        %v1582 = vunpack.c.l.b16 %v1245
        %v1583 = vunpack.c.h.b16 %v1245
        %v1584 = vunpack.c.l.b16 %v1246
        %v1585 = vunpack.c.h.b16 %v1246
        %v1586 = vunpack.c.l.b16 %v1247
        %v1587 = vunpack.c.h.b16 %v1247
        %v1588 = vunpack.c.l.b16 %v1248
        %v1589 = vunpack.c.h.b16 %v1248
        %v1590 = vunpack.c.l.b16 %v1249
        %v1591 = vunpack.c.h.b16 %v1249
        %v1592 = vunpack.c.l.b16 %v1250
        %v1593 = vunpack.c.h.b16 %v1250
        %v1594 = vunpack.c.l.b16 %v1251
        %v1595 = vunpack.c.h.b16 %v1251
        %v1596 = vunpack.c.l.b16 %v1252
        %v1597 = vunpack.c.h.b16 %v1252
        %v1598 = vunpack.c.l.b16 %v1253
        %v1599 = vunpack.c.h.b16 %v1253
        %v1600 = vunpack.c.l.b16 %v1254
        %v1601 = vunpack.c.h.b16 %v1254
        %v1602 = vunpack.c.l.b16 %v1255
        %v1603 = vunpack.c.h.b16 %v1255
        %v1604 = vunpack.c.l.b16 %v1256
        %v1605 = vunpack.c.h.b16 %v1256
        %v1606 = vunpack.c.l.b16 %v1257
        %v1607 = vunpack.c.h.b16 %v1257
        %v1608 = vunpack.c.l.b16 %v1258
        %v1609 = vunpack.c.h.b16 %v1258
        %v1610 = vunpack.c.l.b16 %v1259
        %v1611 = vunpack.c.h.b16 %v1259
        %v1612 = vunpack.c.l.b16 %v1260
        %v1613 = vunpack.c.h.b16 %v1260
        %v1614 = vunpack.c.l.b16 %v1261
        %v1615 = vunpack.c.h.b16 %v1261
        %v1616 = vunpack.c.l.b16 %v1262
        %v1617 = vunpack.c.h.b16 %v1262
        %v1618 = vunpack.c.l.b16 %v1263
        %v1619 = vunpack.c.h.b16 %v1263
        %v1620 = vunpack.c.l.b16 %v1264
        %v1621 = vunpack.c.h.b16 %v1264
        %v1622 = vunpack.c.l.b16 %v1265
        %v1623 = vunpack.c.h.b16 %v1265
        %v1624 = vunpack.c.l.b16 %v1266
        %v1625 = vunpack.c.h.b16 %v1266
        %v1626 = vunpack.c.l.b16 %v1267
        %v1627 = vunpack.c.h.b16 %v1267
        %v1628 = vunpack.c.l.b16 %v1268
        %v1629 = vunpack.c.h.b16 %v1268
        %v1630 = vunpack.c.l.b16 %v1269
        %v1631 = vunpack.c.h.b16 %v1269
        %v1632 = vunpack.c.l.b16 %v1270
        %v1633 = vunpack.c.h.b16 %v1270
        %v1634 = vunpack.c.l.b16 %v1271
        %v1635 = vunpack.c.h.b16 %v1271
        %v1636 = vunpack.c.l.b16 %v1272
        %v1637 = vunpack.c.h.b16 %v1272
        %v1638 = vunpack.c.l.b16 %v1273
        %v1639 = vunpack.c.h.b16 %v1273
        %v1640 = vunpack.c.l.b16 %v1274
        %v1641 = vunpack.c.h.b16 %v1274
        %v1642 = vunpack.c.l.b16 %v1275
        %v1643 = vunpack.c.h.b16 %v1275
        %v1644 = vunpack.c.l.b16 %v1276
        %v1645 = vunpack.c.h.b16 %v1276
        %v1646 = vunpack.c.l.b16 %v1277
        %v1647 = vunpack.c.h.b16 %v1277
        %v1648 = vunpack.c.l.b16 %v1278
        %v1649 = vunpack.c.h.b16 %v1278
        %v1650 = vunpack.c.l.b16 %v1279
        %v1651 = vunpack.c.h.b16 %v1279
        %v1652 = vunpack.c.l.b16 %v1280
        %v1653 = vunpack.c.h.b16 %v1280
        %v1654 = vunpack.c.l.b16 %v1281
        %v1655 = vunpack.c.h.b16 %v1281
        %v1656 = vunpack.c.l.b16 %v1282
        %v1657 = vunpack.c.h.b16 %v1282
        %v1658 = vunpack.c.l.b16 %v1283
        %v1659 = vunpack.c.h.b16 %v1283
        %v1660 = vunpack.c.l.b16 %v1284
        %v1661 = vunpack.c.h.b16 %v1284
        %v1662 = vunpack.c.l.b16 %v1285
        %v1663 = vunpack.c.h.b16 %v1285
        %v1664 = vunpack.c.l.b16 %v1286
        %v1665 = vunpack.c.h.b16 %v1286
        %v1666 = vunpack.c.l.b16 %v1287
        %v1667 = vunpack.c.h.b16 %v1287
        %v1668 = vunpack.c.l.b16 %v1288
        %v1669 = vunpack.c.h.b16 %v1288
        %v1670 = vunpack.c.l.b16 %v1289
        %v1671 = vunpack.c.h.b16 %v1289
        %v1672 = vunpack.c.l.b16 %v1290
        %v1673 = vunpack.c.h.b16 %v1290
        %v1674 = vunpack.c.l.b16 %v1291
        %v1675 = vunpack.c.h.b16 %v1291
        %v1676 = vunpack.c.l.b16 %v1292
        %v1677 = vunpack.c.h.b16 %v1292
        %v1678 = vunpack.c.l.b16 %v1293
        %v1679 = vunpack.c.h.b16 %v1293
        %v1680 = vunpack.c.l.b16 %v1294
        %v1681 = vunpack.c.h.b16 %v1294
        %v1682 = vunpack.c.l.b16 %v1295
        %v1683 = vunpack.c.h.b16 %v1295
        %v1684 = vunpack.c.l.b16 %v1296
        %v1685 = vunpack.c.h.b16 %v1296
        %v1686 = vunpack.c.l.b16 %v1297
        %v1687 = vunpack.c.h.b16 %v1297
        %v1688 = vpack.c.b16 %v1434, %v1432
        %v1689 = vpack.c.b16 %v1435, %v1433
        %v1690 = vpack.c.b16 %v1438, %v1436
        %v1691 = vpack.c.b16 %v1439, %v1437
        %v1692 = vpack.c.b16 %v1442, %v1440
        %v1693 = vpack.c.b16 %v1443, %v1441
        %v1694 = vpack.c.b16 %v1446, %v1444
        %v1695 = vpack.c.b16 %v1447, %v1445
        %v1696 = vpack.c.b16 %v1450, %v1448
        %v1697 = vpack.c.b16 %v1451, %v1449
        %v1698 = vpack.c.b16 %v1454, %v1452
        %v1699 = vpack.c.b16 %v1455, %v1453
        %v1700 = vpack.c.b16 %v1458, %v1456
        %v1701 = vpack.c.b16 %v1459, %v1457
        %v1702 = vpack.c.b16 %v1462, %v1460
        %v1703 = vpack.c.b16 %v1463, %v1461
        %v1704 = vpack.c.b16 %v1466, %v1464
        %v1705 = vpack.c.b16 %v1467, %v1465
        %v1706 = vpack.c.b16 %v1470, %v1468
        %v1707 = vpack.c.b16 %v1471, %v1469
        %v1708 = vpack.c.b16 %v1474, %v1472
        %v1709 = vpack.c.b16 %v1475, %v1473
        %v1710 = vpack.c.b16 %v1478, %v1476
        %v1711 = vpack.c.b16 %v1479, %v1477
        %v1712 = vpack.c.b16 %v1482, %v1480
        %v1713 = vpack.c.b16 %v1483, %v1481
        %v1714 = vpack.c.b16 %v1486, %v1484
        %v1715 = vpack.c.b16 %v1487, %v1485
        %v1716 = vpack.c.b16 %v1490, %v1488
        %v1717 = vpack.c.b16 %v1491, %v1489
        %v1718 = vpack.c.b16 %v1494, %v1492
        %v1719 = vpack.c.b16 %v1495, %v1493
        %v1720 = vpack.c.b16 %v1498, %v1496
        %v1721 = vpack.c.b16 %v1499, %v1497
        %v1722 = vpack.c.b16 %v1502, %v1500
        %v1723 = vpack.c.b16 %v1503, %v1501
        %v1724 = vpack.c.b16 %v1506, %v1504
        %v1725 = vpack.c.b16 %v1507, %v1505
        %v1726 = vpack.c.b16 %v1510, %v1508
        %v1727 = vpack.c.b16 %v1511, %v1509
        %v1728 = vpack.c.b16 %v1514, %v1512
        %v1729 = vpack.c.b16 %v1515, %v1513
        %v1730 = vpack.c.b16 %v1518, %v1516
        %v1731 = vpack.c.b16 %v1519, %v1517
        %v1732 = vpack.c.b16 %v1522, %v1520
        %v1733 = vpack.c.b16 %v1523, %v1521
        %v1734 = vpack.c.b16 %v1526, %v1524
        %v1735 = vpack.c.b16 %v1527, %v1525
        %v1736 = vpack.c.b16 %v1530, %v1528
        %v1737 = vpack.c.b16 %v1531, %v1529
        %v1738 = vpack.c.b16 %v1534, %v1532
        %v1739 = vpack.c.b16 %v1535, %v1533
        %v1740 = vpack.c.b16 %v1538, %v1536
        %v1741 = vpack.c.b16 %v1539, %v1537
        %v1742 = vpack.c.b16 %v1542, %v1540
        %v1743 = vpack.c.b16 %v1543, %v1541
        %v1744 = vpack.c.b16 %v1546, %v1544
        %v1745 = vpack.c.b16 %v1547, %v1545
        %v1746 = vpack.c.b16 %v1550, %v1548
        %v1747 = vpack.c.b16 %v1551, %v1549
        %v1748 = vpack.c.b16 %v1554, %v1552
        %v1749 = vpack.c.b16 %v1555, %v1553
        %v1750 = vpack.c.b16 %v1558, %v1556
        %v1751 = vpack.c.b16 %v1559, %v1557
        %v1752 = vpack.c.b16 %v1562, %v1560
        %v1753 = vpack.c.b16 %v1563, %v1561
        %v1754 = vpack.c.b16 %v1566, %v1564
        %v1755 = vpack.c.b16 %v1567, %v1565
        %v1756 = vpack.c.b16 %v1570, %v1568
        %v1757 = vpack.c.b16 %v1571, %v1569
        %v1758 = vpack.c.b16 %v1574, %v1572
        %v1759 = vpack.c.b16 %v1575, %v1573
        %v1760 = vpack.c.b16 %v1578, %v1576
        %v1761 = vpack.c.b16 %v1579, %v1577
        %v1762 = vpack.c.b16 %v1582, %v1580
        %v1763 = vpack.c.b16 %v1583, %v1581
        %v1764 = vpack.c.b16 %v1586, %v1584
        %v1765 = vpack.c.b16 %v1587, %v1585
        %v1766 = vpack.c.b16 %v1590, %v1588
        %v1767 = vpack.c.b16 %v1591, %v1589
        %v1768 = vpack.c.b16 %v1594, %v1592
        %v1769 = vpack.c.b16 %v1595, %v1593
        %v1770 = vpack.c.b16 %v1598, %v1596
        %v1771 = vpack.c.b16 %v1599, %v1597
        %v1772 = vpack.c.b16 %v1602, %v1600
        %v1773 = vpack.c.b16 %v1603, %v1601
        %v1774 = vpack.c.b16 %v1606, %v1604
        %v1775 = vpack.c.b16 %v1607, %v1605
        %v1776 = vpack.c.b16 %v1610, %v1608
        %v1777 = vpack.c.b16 %v1611, %v1609
        %v1778 = vpack.c.b16 %v1614, %v1612
        %v1779 = vpack.c.b16 %v1615, %v1613
        %v1780 = vpack.c.b16 %v1618, %v1616
        %v1781 = vpack.c.b16 %v1619, %v1617
        %v1782 = vpack.c.b16 %v1622, %v1620
        %v1783 = vpack.c.b16 %v1623, %v1621
        %v1784 = vpack.c.b16 %v1626, %v1624
        %v1785 = vpack.c.b16 %v1627, %v1625
        %v1786 = vpack.c.b16 %v1630, %v1628
        %v1787 = vpack.c.b16 %v1631, %v1629
        %v1788 = vpack.c.b16 %v1634, %v1632
        %v1789 = vpack.c.b16 %v1635, %v1633
        %v1790 = vpack.c.b16 %v1638, %v1636
        %v1791 = vpack.c.b16 %v1639, %v1637
        %v1792 = vpack.c.b16 %v1642, %v1640
        %v1793 = vpack.c.b16 %v1643, %v1641
        %v1794 = vpack.c.b16 %v1646, %v1644
        %v1795 = vpack.c.b16 %v1647, %v1645
        %v1796 = vpack.c.b16 %v1650, %v1648
        %v1797 = vpack.c.b16 %v1651, %v1649
        %v1798 = vpack.c.b16 %v1654, %v1652
        %v1799 = vpack.c.b16 %v1655, %v1653
        %v1800 = vpack.c.b16 %v1658, %v1656
        %v1801 = vpack.c.b16 %v1659, %v1657
        %v1802 = vpack.c.b16 %v1662, %v1660
        %v1803 = vpack.c.b16 %v1663, %v1661
        %v1804 = vpack.c.b16 %v1666, %v1664
        %v1805 = vpack.c.b16 %v1667, %v1665
        %v1806 = vpack.c.b16 %v1670, %v1668
        %v1807 = vpack.c.b16 %v1671, %v1669
        %v1808 = vpack.c.b16 %v1674, %v1672
        %v1809 = vpack.c.b16 %v1675, %v1673
        %v1810 = vpack.c.b16 %v1678, %v1676
        %v1811 = vpack.c.b16 %v1679, %v1677
        %v1812 = vpack.c.b16 %v1682, %v1680
        %v1813 = vpack.c.b16 %v1683, %v1681
        %v1814 = vpack.c.b16 %v1686, %v1684
        %v1815 = vpack.c.b16 %v1687, %v1685
        %1944 = vmatpush.bf16.msra.mxu0 %v1702
        %1945 = vmatpush.bf16.msra.mxu0 %v1700
        %1946 = vmatpush.bf16.msra.mxu0 %v1698
        %1947 = vmatpush.bf16.msra.mxu0 %v1696
        %1948 = vmatpush.bf16.msra.mxu0 %v1694
        %1949 = vmatpush.bf16.msra.mxu0 %v1692
        %1950 = vmatpush.bf16.msra.mxu0 %v1690
        %1951 = vmatpush.bf16.msra.mxu0 %v1688
        %1952 = vmatmul.bf16.gmra.mxu0 %v1106
        %v1953 = vpop.f32.mrf.mxu0
        %v1954 = vadd.f32 %v1300, %v1953
        %v1955 = vpop.f32.mrf.mxu0
        %v1956 = vadd.f32 %v1300, %v1955
        %1957 = vmatmul.bf16.gmra.mxu0 %v1114
        %v1958 = vpop.f32.mrf.mxu0
        %v1959 = vadd.f32 %v1300, %v1958
        %v1960 = vpop.f32.mrf.mxu0
        %v1961 = vadd.f32 %v1300, %v1960
        %1962 = vmatmul.bf16.gmra.mxu0 %v1122
        %v1963 = vpop.f32.mrf.mxu0
        %v1964 = vadd.f32 %v1300, %v1963
        %v1965 = vpop.f32.mrf.mxu0
        %v1966 = vadd.f32 %v1300, %v1965
        %1967 = vmatmul.bf16.gmra.mxu0 %v1130
        %v1968 = vpop.f32.mrf.mxu0
        %v1969 = vadd.f32 %v1300, %v1968
        %v1970 = vpop.f32.mrf.mxu0
        %v1971 = vadd.f32 %v1300, %v1970
        %1972 = vmatmul.bf16.gmra.mxu0 %v1138
        %v1973 = vpop.f32.mrf.mxu0
        %v1974 = vadd.f32 %v1300, %v1973
        %v1975 = vpop.f32.mrf.mxu0
        %v1976 = vadd.f32 %v1300, %v1975
        %1977 = vmatmul.bf16.gmra.mxu0 %v1146
        %v1978 = vpop.f32.mrf.mxu0
        %v1979 = vadd.f32 %v1300, %v1978
        %v1980 = vpop.f32.mrf.mxu0
        %v1981 = vadd.f32 %v1300, %v1980
        %1982 = vmatmul.bf16.gmra.mxu0 %v1154
        %v1983 = vpop.f32.mrf.mxu0
        %v1984 = vadd.f32 %v1300, %v1983
        %v1985 = vpop.f32.mrf.mxu0
        %v1986 = vadd.f32 %v1300, %v1985
        %1987 = vmatmul.bf16.gmra.mxu0 %v1162
        %v1988 = vpop.f32.mrf.mxu0
        %v1989 = vadd.f32 %v1300, %v1988
        %v1990 = vpop.f32.mrf.mxu0
        %v1991 = vadd.f32 %v1300, %v1990
        %1992 = vdwg.mxu0
        %1993 = vmatpush.bf16.msra.mxu0 %v1718
        %1994 = vmatpush.bf16.msra.mxu0 %v1716
        %1995 = vmatpush.bf16.msra.mxu0 %v1714
        %1996 = vmatpush.bf16.msra.mxu0 %v1712
        %1997 = vmatpush.bf16.msra.mxu0 %v1710
        %1998 = vmatpush.bf16.msra.mxu0 %v1708
        %1999 = vmatpush.bf16.msra.mxu0 %v1706
        %2000 = vmatpush.bf16.msra.mxu0 %v1704
        %2001 = vmatmul.bf16.gmra.mxu0 %v1107
        %v2002 = vpop.f32.mrf.mxu0
        %v2003 = vadd.f32 %v1954, %v2002
        %v2004 = vpop.f32.mrf.mxu0
        %v2005 = vadd.f32 %v1956, %v2004
        %2006 = vmatmul.bf16.gmra.mxu0 %v1115
        %v2007 = vpop.f32.mrf.mxu0
        %v2008 = vadd.f32 %v1959, %v2007
        %v2009 = vpop.f32.mrf.mxu0
        %v2010 = vadd.f32 %v1961, %v2009
        %2011 = vmatmul.bf16.gmra.mxu0 %v1123
        %v2012 = vpop.f32.mrf.mxu0
        %v2013 = vadd.f32 %v1964, %v2012
        %v2014 = vpop.f32.mrf.mxu0
        %v2015 = vadd.f32 %v1966, %v2014
        %2016 = vmatmul.bf16.gmra.mxu0 %v1131
        %v2017 = vpop.f32.mrf.mxu0
        %v2018 = vadd.f32 %v1969, %v2017
        %v2019 = vpop.f32.mrf.mxu0
        %v2020 = vadd.f32 %v1971, %v2019
        %2021 = vmatmul.bf16.gmra.mxu0 %v1139
        %v2022 = vpop.f32.mrf.mxu0
        %v2023 = vadd.f32 %v1974, %v2022
        %v2024 = vpop.f32.mrf.mxu0
        %v2025 = vadd.f32 %v1976, %v2024
        %2026 = vmatmul.bf16.gmra.mxu0 %v1147
        %v2027 = vpop.f32.mrf.mxu0
        %v2028 = vadd.f32 %v1979, %v2027
        %v2029 = vpop.f32.mrf.mxu0
        %v2030 = vadd.f32 %v1981, %v2029
        %2031 = vmatmul.bf16.gmra.mxu0 %v1155
        %v2032 = vpop.f32.mrf.mxu0
        %v2033 = vadd.f32 %v1984, %v2032
        %v2034 = vpop.f32.mrf.mxu0
        %v2035 = vadd.f32 %v1986, %v2034
        %2036 = vmatmul.bf16.gmra.mxu0 %v1163
        %v2037 = vpop.f32.mrf.mxu0
        %v2038 = vadd.f32 %v1989, %v2037
        %v2039 = vpop.f32.mrf.mxu0
        %v2040 = vadd.f32 %v1991, %v2039
        %2041 = vdwg.mxu0
        %2042 = vmatpush.bf16.msra.mxu0 %v1734
        %2043 = vmatpush.bf16.msra.mxu0 %v1732
        %2044 = vmatpush.bf16.msra.mxu0 %v1730
        %2045 = vmatpush.bf16.msra.mxu0 %v1728
        %2046 = vmatpush.bf16.msra.mxu0 %v1726
        %2047 = vmatpush.bf16.msra.mxu0 %v1724
        %2048 = vmatpush.bf16.msra.mxu0 %v1722
        %2049 = vmatpush.bf16.msra.mxu0 %v1720
        %2050 = vmatmul.bf16.gmra.mxu0 %v1108
        %v2051 = vpop.f32.mrf.mxu0
        %v2052 = vadd.f32 %v2003, %v2051
        %v2053 = vpop.f32.mrf.mxu0
        %v2054 = vadd.f32 %v2005, %v2053
        %2055 = vmatmul.bf16.gmra.mxu0 %v1116
        %v2056 = vpop.f32.mrf.mxu0
        %v2057 = vadd.f32 %v2008, %v2056
        %v2058 = vpop.f32.mrf.mxu0
        %v2059 = vadd.f32 %v2010, %v2058
        %2060 = vmatmul.bf16.gmra.mxu0 %v1124
        %v2061 = vpop.f32.mrf.mxu0
        %v2062 = vadd.f32 %v2013, %v2061
        %v2063 = vpop.f32.mrf.mxu0
        %v2064 = vadd.f32 %v2015, %v2063
        %2065 = vmatmul.bf16.gmra.mxu0 %v1132
        %v2066 = vpop.f32.mrf.mxu0
        %v2067 = vadd.f32 %v2018, %v2066
        %v2068 = vpop.f32.mrf.mxu0
        %v2069 = vadd.f32 %v2020, %v2068
        %2070 = vmatmul.bf16.gmra.mxu0 %v1140
        %v2071 = vpop.f32.mrf.mxu0
        %v2072 = vadd.f32 %v2023, %v2071
        %v2073 = vpop.f32.mrf.mxu0
        %v2074 = vadd.f32 %v2025, %v2073
        %2075 = vmatmul.bf16.gmra.mxu0 %v1148
        %v2076 = vpop.f32.mrf.mxu0
        %v2077 = vadd.f32 %v2028, %v2076
        %v2078 = vpop.f32.mrf.mxu0
        %v2079 = vadd.f32 %v2030, %v2078
        %2080 = vmatmul.bf16.gmra.mxu0 %v1156
        %v2081 = vpop.f32.mrf.mxu0
        %v2082 = vadd.f32 %v2033, %v2081
        %v2083 = vpop.f32.mrf.mxu0
        %v2084 = vadd.f32 %v2035, %v2083
        %2085 = vmatmul.bf16.gmra.mxu0 %v1164
        %v2086 = vpop.f32.mrf.mxu0
        %v2087 = vadd.f32 %v2038, %v2086
        %v2088 = vpop.f32.mrf.mxu0
        %v2089 = vadd.f32 %v2040, %v2088
        %2090 = vdwg.mxu0
        %2091 = vmatpush.bf16.msra.mxu0 %v1750
        %2092 = vmatpush.bf16.msra.mxu0 %v1748
        %2093 = vmatpush.bf16.msra.mxu0 %v1746
        %2094 = vmatpush.bf16.msra.mxu0 %v1744
        %2095 = vmatpush.bf16.msra.mxu0 %v1742
        %2096 = vmatpush.bf16.msra.mxu0 %v1740
        %2097 = vmatpush.bf16.msra.mxu0 %v1738
        %2098 = vmatpush.bf16.msra.mxu0 %v1736
        %2099 = vmatmul.bf16.gmra.mxu0 %v1109
        %v2100 = vpop.f32.mrf.mxu0
        %v2101 = vadd.f32 %v2052, %v2100
        %v2102 = vpop.f32.mrf.mxu0
        %v2103 = vadd.f32 %v2054, %v2102
        %2104 = vmatmul.bf16.gmra.mxu0 %v1117
        %v2105 = vpop.f32.mrf.mxu0
        %v2106 = vadd.f32 %v2057, %v2105
        %v2107 = vpop.f32.mrf.mxu0
        %v2108 = vadd.f32 %v2059, %v2107
        %2109 = vmatmul.bf16.gmra.mxu0 %v1125
        %v2110 = vpop.f32.mrf.mxu0
        %v2111 = vadd.f32 %v2062, %v2110
        %v2112 = vpop.f32.mrf.mxu0
        %v2113 = vadd.f32 %v2064, %v2112
        %2114 = vmatmul.bf16.gmra.mxu0 %v1133
        %v2115 = vpop.f32.mrf.mxu0
        %v2116 = vadd.f32 %v2067, %v2115
        %v2117 = vpop.f32.mrf.mxu0
        %v2118 = vadd.f32 %v2069, %v2117
        %2119 = vmatmul.bf16.gmra.mxu0 %v1141
        %v2120 = vpop.f32.mrf.mxu0
        %v2121 = vadd.f32 %v2072, %v2120
        %v2122 = vpop.f32.mrf.mxu0
        %v2123 = vadd.f32 %v2074, %v2122
        %2124 = vmatmul.bf16.gmra.mxu0 %v1149
        %v2125 = vpop.f32.mrf.mxu0
        %v2126 = vadd.f32 %v2077, %v2125
        %v2127 = vpop.f32.mrf.mxu0
        %v2128 = vadd.f32 %v2079, %v2127
        %2129 = vmatmul.bf16.gmra.mxu0 %v1157
        %v2130 = vpop.f32.mrf.mxu0
        %v2131 = vadd.f32 %v2082, %v2130
        %v2132 = vpop.f32.mrf.mxu0
        %v2133 = vadd.f32 %v2084, %v2132
        %2134 = vmatmul.bf16.gmra.mxu0 %v1165
        %v2135 = vpop.f32.mrf.mxu0
        %v2136 = vadd.f32 %v2087, %v2135
        %v2137 = vpop.f32.mrf.mxu0
        %v2138 = vadd.f32 %v2089, %v2137
        %2139 = vdwg.mxu0
        %2140 = vmatpush.bf16.msra.mxu0 %v1766
        %2141 = vmatpush.bf16.msra.mxu0 %v1764
        %2142 = vmatpush.bf16.msra.mxu0 %v1762
        %2143 = vmatpush.bf16.msra.mxu0 %v1760
        %2144 = vmatpush.bf16.msra.mxu0 %v1758
        %2145 = vmatpush.bf16.msra.mxu0 %v1756
        %2146 = vmatpush.bf16.msra.mxu0 %v1754
        %2147 = vmatpush.bf16.msra.mxu0 %v1752
        %2148 = vmatmul.bf16.gmra.mxu0 %v1110
        %v2149 = vpop.f32.mrf.mxu0
        %v2150 = vadd.f32 %v2101, %v2149
        %v2151 = vpop.f32.mrf.mxu0
        %v2152 = vadd.f32 %v2103, %v2151
        %2153 = vmatmul.bf16.gmra.mxu0 %v1118
        %v2154 = vpop.f32.mrf.mxu0
        %v2155 = vadd.f32 %v2106, %v2154
        %v2156 = vpop.f32.mrf.mxu0
        %v2157 = vadd.f32 %v2108, %v2156
        %2158 = vmatmul.bf16.gmra.mxu0 %v1126
        %v2159 = vpop.f32.mrf.mxu0
        %v2160 = vadd.f32 %v2111, %v2159
        %v2161 = vpop.f32.mrf.mxu0
        %v2162 = vadd.f32 %v2113, %v2161
        %2163 = vmatmul.bf16.gmra.mxu0 %v1134
        %v2164 = vpop.f32.mrf.mxu0
        %v2165 = vadd.f32 %v2116, %v2164
        %v2166 = vpop.f32.mrf.mxu0
        %v2167 = vadd.f32 %v2118, %v2166
        %2168 = vmatmul.bf16.gmra.mxu0 %v1142
        %v2169 = vpop.f32.mrf.mxu0
        %v2170 = vadd.f32 %v2121, %v2169
        %v2171 = vpop.f32.mrf.mxu0
        %v2172 = vadd.f32 %v2123, %v2171
        %2173 = vmatmul.bf16.gmra.mxu0 %v1150
        %v2174 = vpop.f32.mrf.mxu0
        %v2175 = vadd.f32 %v2126, %v2174
        %v2176 = vpop.f32.mrf.mxu0
        %v2177 = vadd.f32 %v2128, %v2176
        %2178 = vmatmul.bf16.gmra.mxu0 %v1158
        %v2179 = vpop.f32.mrf.mxu0
        %v2180 = vadd.f32 %v2131, %v2179
        %v2181 = vpop.f32.mrf.mxu0
        %v2182 = vadd.f32 %v2133, %v2181
        %2183 = vmatmul.bf16.gmra.mxu0 %v1166
        %v2184 = vpop.f32.mrf.mxu0
        %v2185 = vadd.f32 %v2136, %v2184
        %v2186 = vpop.f32.mrf.mxu0
        %v2187 = vadd.f32 %v2138, %v2186
        %2188 = vdwg.mxu0
        %2189 = vmatpush.bf16.msra.mxu0 %v1782
        %2190 = vmatpush.bf16.msra.mxu0 %v1780
        %2191 = vmatpush.bf16.msra.mxu0 %v1778
        %2192 = vmatpush.bf16.msra.mxu0 %v1776
        %2193 = vmatpush.bf16.msra.mxu0 %v1774
        %2194 = vmatpush.bf16.msra.mxu0 %v1772
        %2195 = vmatpush.bf16.msra.mxu0 %v1770
        %2196 = vmatpush.bf16.msra.mxu0 %v1768
        %2197 = vmatmul.bf16.gmra.mxu0 %v1111
        %v2198 = vpop.f32.mrf.mxu0
        %v2199 = vadd.f32 %v2150, %v2198
        %v2200 = vpop.f32.mrf.mxu0
        %v2201 = vadd.f32 %v2152, %v2200
        %2202 = vmatmul.bf16.gmra.mxu0 %v1119
        %v2203 = vpop.f32.mrf.mxu0
        %v2204 = vadd.f32 %v2155, %v2203
        %v2205 = vpop.f32.mrf.mxu0
        %v2206 = vadd.f32 %v2157, %v2205
        %2207 = vmatmul.bf16.gmra.mxu0 %v1127
        %v2208 = vpop.f32.mrf.mxu0
        %v2209 = vadd.f32 %v2160, %v2208
        %v2210 = vpop.f32.mrf.mxu0
        %v2211 = vadd.f32 %v2162, %v2210
        %2212 = vmatmul.bf16.gmra.mxu0 %v1135
        %v2213 = vpop.f32.mrf.mxu0
        %v2214 = vadd.f32 %v2165, %v2213
        %v2215 = vpop.f32.mrf.mxu0
        %v2216 = vadd.f32 %v2167, %v2215
        %2217 = vmatmul.bf16.gmra.mxu0 %v1143
        %v2218 = vpop.f32.mrf.mxu0
        %v2219 = vadd.f32 %v2170, %v2218
        %v2220 = vpop.f32.mrf.mxu0
        %v2221 = vadd.f32 %v2172, %v2220
        %2222 = vmatmul.bf16.gmra.mxu0 %v1151
        %v2223 = vpop.f32.mrf.mxu0
        %v2224 = vadd.f32 %v2175, %v2223
        %v2225 = vpop.f32.mrf.mxu0
        %v2226 = vadd.f32 %v2177, %v2225
        %2227 = vmatmul.bf16.gmra.mxu0 %v1159
        %v2228 = vpop.f32.mrf.mxu0
        %v2229 = vadd.f32 %v2180, %v2228
        %v2230 = vpop.f32.mrf.mxu0
        %v2231 = vadd.f32 %v2182, %v2230
        %2232 = vmatmul.bf16.gmra.mxu0 %v1167
        %v2233 = vpop.f32.mrf.mxu0
        %v2234 = vadd.f32 %v2185, %v2233
        %v2235 = vpop.f32.mrf.mxu0
        %v2236 = vadd.f32 %v2187, %v2235
        %2237 = vdwg.mxu0
        %2238 = vmatpush.bf16.msra.mxu0 %v1798
        %2239 = vmatpush.bf16.msra.mxu0 %v1796
        %2240 = vmatpush.bf16.msra.mxu0 %v1794
        %2241 = vmatpush.bf16.msra.mxu0 %v1792
        %2242 = vmatpush.bf16.msra.mxu0 %v1790
        %2243 = vmatpush.bf16.msra.mxu0 %v1788
        %2244 = vmatpush.bf16.msra.mxu0 %v1786
        %2245 = vmatpush.bf16.msra.mxu0 %v1784
        %2246 = vmatmul.bf16.gmra.mxu0 %v1112
        %v2247 = vpop.f32.mrf.mxu0
        %v2248 = vadd.f32 %v2199, %v2247
        %v2249 = vpop.f32.mrf.mxu0
        %v2250 = vadd.f32 %v2201, %v2249
        %2251 = vmatmul.bf16.gmra.mxu0 %v1120
        %v2252 = vpop.f32.mrf.mxu0
        %v2253 = vadd.f32 %v2204, %v2252
        %v2254 = vpop.f32.mrf.mxu0
        %v2255 = vadd.f32 %v2206, %v2254
        %2256 = vmatmul.bf16.gmra.mxu0 %v1128
        %v2257 = vpop.f32.mrf.mxu0
        %v2258 = vadd.f32 %v2209, %v2257
        %v2259 = vpop.f32.mrf.mxu0
        %v2260 = vadd.f32 %v2211, %v2259
        %2261 = vmatmul.bf16.gmra.mxu0 %v1136
        %v2262 = vpop.f32.mrf.mxu0
        %v2263 = vadd.f32 %v2214, %v2262
        %v2264 = vpop.f32.mrf.mxu0
        %v2265 = vadd.f32 %v2216, %v2264
        %2266 = vmatmul.bf16.gmra.mxu0 %v1144
        %v2267 = vpop.f32.mrf.mxu0
        %v2268 = vadd.f32 %v2219, %v2267
        %v2269 = vpop.f32.mrf.mxu0
        %v2270 = vadd.f32 %v2221, %v2269
        %2271 = vmatmul.bf16.gmra.mxu0 %v1152
        %v2272 = vpop.f32.mrf.mxu0
        %v2273 = vadd.f32 %v2224, %v2272
        %v2274 = vpop.f32.mrf.mxu0
        %v2275 = vadd.f32 %v2226, %v2274
        %2276 = vmatmul.bf16.gmra.mxu0 %v1160
        %v2277 = vpop.f32.mrf.mxu0
        %v2278 = vadd.f32 %v2229, %v2277
        %v2279 = vpop.f32.mrf.mxu0
        %v2280 = vadd.f32 %v2231, %v2279
        %2281 = vmatmul.bf16.gmra.mxu0 %v1168
        %v2282 = vpop.f32.mrf.mxu0
        %v2283 = vadd.f32 %v2234, %v2282
        %v2284 = vpop.f32.mrf.mxu0
        %v2285 = vadd.f32 %v2236, %v2284
        %2286 = vdwg.mxu0
        %2287 = vmatpush.bf16.msra.mxu0 %v1814
        %2288 = vmatpush.bf16.msra.mxu0 %v1812
        %2289 = vmatpush.bf16.msra.mxu0 %v1810
        %2290 = vmatpush.bf16.msra.mxu0 %v1808
        %2291 = vmatpush.bf16.msra.mxu0 %v1806
        %2292 = vmatpush.bf16.msra.mxu0 %v1804
        %2293 = vmatpush.bf16.msra.mxu0 %v1802
        %2294 = vmatpush.bf16.msra.mxu0 %v1800
        %2295 = vmatmul.bf16.gmra.mxu0 %v1113
        %v2296 = vpop.f32.mrf.mxu0
        %v2297 = vadd.f32 %v2248, %v2296
        %v2298 = vpop.f32.mrf.mxu0
        %v2299 = vadd.f32 %v2250, %v2298
        %2300 = vmatmul.bf16.gmra.mxu0 %v1121
        %v2301 = vpop.f32.mrf.mxu0
        %v2302 = vadd.f32 %v2253, %v2301
        %v2303 = vpop.f32.mrf.mxu0
        %v2304 = vadd.f32 %v2255, %v2303
        %2305 = vmatmul.bf16.gmra.mxu0 %v1129
        %v2306 = vpop.f32.mrf.mxu0
        %v2307 = vadd.f32 %v2258, %v2306
        %v2308 = vpop.f32.mrf.mxu0
        %v2309 = vadd.f32 %v2260, %v2308
        %2310 = vmatmul.bf16.gmra.mxu0 %v1137
        %v2311 = vpop.f32.mrf.mxu0
        %v2312 = vadd.f32 %v2263, %v2311
        %v2313 = vpop.f32.mrf.mxu0
        %v2314 = vadd.f32 %v2265, %v2313
        %2315 = vmatmul.bf16.gmra.mxu0 %v1145
        %v2316 = vpop.f32.mrf.mxu0
        %v2317 = vadd.f32 %v2268, %v2316
        %v2318 = vpop.f32.mrf.mxu0
        %v2319 = vadd.f32 %v2270, %v2318
        %2320 = vmatmul.bf16.gmra.mxu0 %v1153
        %v2321 = vpop.f32.mrf.mxu0
        %v2322 = vadd.f32 %v2273, %v2321
        %v2323 = vpop.f32.mrf.mxu0
        %v2324 = vadd.f32 %v2275, %v2323
        %2325 = vmatmul.bf16.gmra.mxu0 %v1161
        %v2326 = vpop.f32.mrf.mxu0
        %v2327 = vadd.f32 %v2278, %v2326
        %v2328 = vpop.f32.mrf.mxu0
        %v2329 = vadd.f32 %v2280, %v2328
        %2330 = vmatmul.bf16.gmra.mxu0 %v1169
        %v2331 = vpop.f32.mrf.mxu0
        %v2332 = vadd.f32 %v2283, %v2331
        %v2333 = vpop.f32.mrf.mxu0
        %v2334 = vadd.f32 %v2285, %v2333
        %2335 = vdwg.mxu0
        %2336 = vmatpush.bf16.msra.mxu0 %v1703
        %2337 = vmatpush.bf16.msra.mxu0 %v1701
        %2338 = vmatpush.bf16.msra.mxu0 %v1699
        %2339 = vmatpush.bf16.msra.mxu0 %v1697
        %2340 = vmatpush.bf16.msra.mxu0 %v1695
        %2341 = vmatpush.bf16.msra.mxu0 %v1693
        %2342 = vmatpush.bf16.msra.mxu0 %v1691
        %2343 = vmatpush.bf16.msra.mxu0 %v1689
        %2344 = vmatmul.bf16.gmra.mxu0 %v1106
        %v2345 = vpop.f32.mrf.mxu0
        %v2346 = vadd.f32 %v1301, %v2345
        %v2347 = vpop.f32.mrf.mxu0
        %v2348 = vadd.f32 %v1301, %v2347
        %2349 = vmatmul.bf16.gmra.mxu0 %v1114
        %v2350 = vpop.f32.mrf.mxu0
        %v2351 = vadd.f32 %v1301, %v2350
        %v2352 = vpop.f32.mrf.mxu0
        %v2353 = vadd.f32 %v1301, %v2352
        %2354 = vmatmul.bf16.gmra.mxu0 %v1122
        %v2355 = vpop.f32.mrf.mxu0
        %v2356 = vadd.f32 %v1301, %v2355
        %v2357 = vpop.f32.mrf.mxu0
        %v2358 = vadd.f32 %v1301, %v2357
        %2359 = vmatmul.bf16.gmra.mxu0 %v1130
        %v2360 = vpop.f32.mrf.mxu0
        %v2361 = vadd.f32 %v1301, %v2360
        %v2362 = vpop.f32.mrf.mxu0
        %v2363 = vadd.f32 %v1301, %v2362
        %2364 = vmatmul.bf16.gmra.mxu0 %v1138
        %v2365 = vpop.f32.mrf.mxu0
        %v2366 = vadd.f32 %v1301, %v2365
        %v2367 = vpop.f32.mrf.mxu0
        %v2368 = vadd.f32 %v1301, %v2367
        %2369 = vmatmul.bf16.gmra.mxu0 %v1146
        %v2370 = vpop.f32.mrf.mxu0
        %v2371 = vadd.f32 %v1301, %v2370
        %v2372 = vpop.f32.mrf.mxu0
        %v2373 = vadd.f32 %v1301, %v2372
        %2374 = vmatmul.bf16.gmra.mxu0 %v1154
        %v2375 = vpop.f32.mrf.mxu0
        %v2376 = vadd.f32 %v1301, %v2375
        %v2377 = vpop.f32.mrf.mxu0
        %v2378 = vadd.f32 %v1301, %v2377
        %2379 = vmatmul.bf16.gmra.mxu0 %v1162
        %v2380 = vpop.f32.mrf.mxu0
        %v2381 = vadd.f32 %v1301, %v2380
        %v2382 = vpop.f32.mrf.mxu0
        %v2383 = vadd.f32 %v1301, %v2382
        %2384 = vdwg.mxu0
        %2385 = vmatpush.bf16.msra.mxu0 %v1719
        %2386 = vmatpush.bf16.msra.mxu0 %v1717
        %2387 = vmatpush.bf16.msra.mxu0 %v1715
        %2388 = vmatpush.bf16.msra.mxu0 %v1713
        %2389 = vmatpush.bf16.msra.mxu0 %v1711
        %2390 = vmatpush.bf16.msra.mxu0 %v1709
        %2391 = vmatpush.bf16.msra.mxu0 %v1707
        %2392 = vmatpush.bf16.msra.mxu0 %v1705
        %2393 = vmatmul.bf16.gmra.mxu0 %v1107
        %v2394 = vpop.f32.mrf.mxu0
        %v2395 = vadd.f32 %v2346, %v2394
        %v2396 = vpop.f32.mrf.mxu0
        %v2397 = vadd.f32 %v2348, %v2396
        %2398 = vmatmul.bf16.gmra.mxu0 %v1115
        %v2399 = vpop.f32.mrf.mxu0
        %v2400 = vadd.f32 %v2351, %v2399
        %v2401 = vpop.f32.mrf.mxu0
        %v2402 = vadd.f32 %v2353, %v2401
        %2403 = vmatmul.bf16.gmra.mxu0 %v1123
        %v2404 = vpop.f32.mrf.mxu0
        %v2405 = vadd.f32 %v2356, %v2404
        %v2406 = vpop.f32.mrf.mxu0
        %v2407 = vadd.f32 %v2358, %v2406
        %2408 = vmatmul.bf16.gmra.mxu0 %v1131
        %v2409 = vpop.f32.mrf.mxu0
        %v2410 = vadd.f32 %v2361, %v2409
        %v2411 = vpop.f32.mrf.mxu0
        %v2412 = vadd.f32 %v2363, %v2411
        %2413 = vmatmul.bf16.gmra.mxu0 %v1139
        %v2414 = vpop.f32.mrf.mxu0
        %v2415 = vadd.f32 %v2366, %v2414
        %v2416 = vpop.f32.mrf.mxu0
        %v2417 = vadd.f32 %v2368, %v2416
        %2418 = vmatmul.bf16.gmra.mxu0 %v1147
        %v2419 = vpop.f32.mrf.mxu0
        %v2420 = vadd.f32 %v2371, %v2419
        %v2421 = vpop.f32.mrf.mxu0
        %v2422 = vadd.f32 %v2373, %v2421
        %2423 = vmatmul.bf16.gmra.mxu0 %v1155
        %v2424 = vpop.f32.mrf.mxu0
        %v2425 = vadd.f32 %v2376, %v2424
        %v2426 = vpop.f32.mrf.mxu0
        %v2427 = vadd.f32 %v2378, %v2426
        %2428 = vmatmul.bf16.gmra.mxu0 %v1163
        %v2429 = vpop.f32.mrf.mxu0
        %v2430 = vadd.f32 %v2381, %v2429
        %v2431 = vpop.f32.mrf.mxu0
        %v2432 = vadd.f32 %v2383, %v2431
        %2433 = vdwg.mxu0
        %2434 = vmatpush.bf16.msra.mxu0 %v1735
        %2435 = vmatpush.bf16.msra.mxu0 %v1733
        %2436 = vmatpush.bf16.msra.mxu0 %v1731
        %2437 = vmatpush.bf16.msra.mxu0 %v1729
        %2438 = vmatpush.bf16.msra.mxu0 %v1727
        %2439 = vmatpush.bf16.msra.mxu0 %v1725
        %2440 = vmatpush.bf16.msra.mxu0 %v1723
        %2441 = vmatpush.bf16.msra.mxu0 %v1721
        %2442 = vmatmul.bf16.gmra.mxu0 %v1108
        %v2443 = vpop.f32.mrf.mxu0
        %v2444 = vadd.f32 %v2395, %v2443
        %v2445 = vpop.f32.mrf.mxu0
        %v2446 = vadd.f32 %v2397, %v2445
        %2447 = vmatmul.bf16.gmra.mxu0 %v1116
        %v2448 = vpop.f32.mrf.mxu0
        %v2449 = vadd.f32 %v2400, %v2448
        %v2450 = vpop.f32.mrf.mxu0
        %v2451 = vadd.f32 %v2402, %v2450
        %2452 = vmatmul.bf16.gmra.mxu0 %v1124
        %v2453 = vpop.f32.mrf.mxu0
        %v2454 = vadd.f32 %v2405, %v2453
        %v2455 = vpop.f32.mrf.mxu0
        %v2456 = vadd.f32 %v2407, %v2455
        %2457 = vmatmul.bf16.gmra.mxu0 %v1132
        %v2458 = vpop.f32.mrf.mxu0
        %v2459 = vadd.f32 %v2410, %v2458
        %v2460 = vpop.f32.mrf.mxu0
        %v2461 = vadd.f32 %v2412, %v2460
        %2462 = vmatmul.bf16.gmra.mxu0 %v1140
        %v2463 = vpop.f32.mrf.mxu0
        %v2464 = vadd.f32 %v2415, %v2463
        %v2465 = vpop.f32.mrf.mxu0
        %v2466 = vadd.f32 %v2417, %v2465
        %2467 = vmatmul.bf16.gmra.mxu0 %v1148
        %v2468 = vpop.f32.mrf.mxu0
        %v2469 = vadd.f32 %v2420, %v2468
        %v2470 = vpop.f32.mrf.mxu0
        %v2471 = vadd.f32 %v2422, %v2470
        %2472 = vmatmul.bf16.gmra.mxu0 %v1156
        %v2473 = vpop.f32.mrf.mxu0
        %v2474 = vadd.f32 %v2425, %v2473
        %v2475 = vpop.f32.mrf.mxu0
        %v2476 = vadd.f32 %v2427, %v2475
        %2477 = vmatmul.bf16.gmra.mxu0 %v1164
        %v2478 = vpop.f32.mrf.mxu0
        %v2479 = vadd.f32 %v2430, %v2478
        %v2480 = vpop.f32.mrf.mxu0
        %v2481 = vadd.f32 %v2432, %v2480
        %2482 = vdwg.mxu0
        %2483 = vmatpush.bf16.msra.mxu0 %v1751
        %2484 = vmatpush.bf16.msra.mxu0 %v1749
        %2485 = vmatpush.bf16.msra.mxu0 %v1747
        %2486 = vmatpush.bf16.msra.mxu0 %v1745
        %2487 = vmatpush.bf16.msra.mxu0 %v1743
        %2488 = vmatpush.bf16.msra.mxu0 %v1741
        %2489 = vmatpush.bf16.msra.mxu0 %v1739
        %2490 = vmatpush.bf16.msra.mxu0 %v1737
        %2491 = vmatmul.bf16.gmra.mxu0 %v1109
        %v2492 = vpop.f32.mrf.mxu0
        %v2493 = vadd.f32 %v2444, %v2492
        %v2494 = vpop.f32.mrf.mxu0
        %v2495 = vadd.f32 %v2446, %v2494
        %2496 = vmatmul.bf16.gmra.mxu0 %v1117
        %v2497 = vpop.f32.mrf.mxu0
        %v2498 = vadd.f32 %v2449, %v2497
        %v2499 = vpop.f32.mrf.mxu0
        %v2500 = vadd.f32 %v2451, %v2499
        %2501 = vmatmul.bf16.gmra.mxu0 %v1125
        %v2502 = vpop.f32.mrf.mxu0
        %v2503 = vadd.f32 %v2454, %v2502
        %v2504 = vpop.f32.mrf.mxu0
        %v2505 = vadd.f32 %v2456, %v2504
        %2506 = vmatmul.bf16.gmra.mxu0 %v1133
        %v2507 = vpop.f32.mrf.mxu0
        %v2508 = vadd.f32 %v2459, %v2507
        %v2509 = vpop.f32.mrf.mxu0
        %v2510 = vadd.f32 %v2461, %v2509
        %2511 = vmatmul.bf16.gmra.mxu0 %v1141
        %v2512 = vpop.f32.mrf.mxu0
        %v2513 = vadd.f32 %v2464, %v2512
        %v2514 = vpop.f32.mrf.mxu0
        %v2515 = vadd.f32 %v2466, %v2514
        %2516 = vmatmul.bf16.gmra.mxu0 %v1149
        %v2517 = vpop.f32.mrf.mxu0
        %v2518 = vadd.f32 %v2469, %v2517
        %v2519 = vpop.f32.mrf.mxu0
        %v2520 = vadd.f32 %v2471, %v2519
        %2521 = vmatmul.bf16.gmra.mxu0 %v1157
        %v2522 = vpop.f32.mrf.mxu0
        %v2523 = vadd.f32 %v2474, %v2522
        %v2524 = vpop.f32.mrf.mxu0
        %v2525 = vadd.f32 %v2476, %v2524
        %2526 = vmatmul.bf16.gmra.mxu0 %v1165
        %v2527 = vpop.f32.mrf.mxu0
        %v2528 = vadd.f32 %v2479, %v2527
        %v2529 = vpop.f32.mrf.mxu0
        %v2530 = vadd.f32 %v2481, %v2529
        %2531 = vdwg.mxu0
        %2532 = vmatpush.bf16.msra.mxu0 %v1767
        %2533 = vmatpush.bf16.msra.mxu0 %v1765
        %2534 = vmatpush.bf16.msra.mxu0 %v1763
        %2535 = vmatpush.bf16.msra.mxu0 %v1761
        %2536 = vmatpush.bf16.msra.mxu0 %v1759
        %2537 = vmatpush.bf16.msra.mxu0 %v1757
        %2538 = vmatpush.bf16.msra.mxu0 %v1755
        %2539 = vmatpush.bf16.msra.mxu0 %v1753
        %2540 = vmatmul.bf16.gmra.mxu0 %v1110
        %v2541 = vpop.f32.mrf.mxu0
        %v2542 = vadd.f32 %v2493, %v2541
        %v2543 = vpop.f32.mrf.mxu0
        %v2544 = vadd.f32 %v2495, %v2543
        %2545 = vmatmul.bf16.gmra.mxu0 %v1118
        %v2546 = vpop.f32.mrf.mxu0
        %v2547 = vadd.f32 %v2498, %v2546
        %v2548 = vpop.f32.mrf.mxu0
        %v2549 = vadd.f32 %v2500, %v2548
        %2550 = vmatmul.bf16.gmra.mxu0 %v1126
        %v2551 = vpop.f32.mrf.mxu0
        %v2552 = vadd.f32 %v2503, %v2551
        %v2553 = vpop.f32.mrf.mxu0
        %v2554 = vadd.f32 %v2505, %v2553
        %2555 = vmatmul.bf16.gmra.mxu0 %v1134
        %v2556 = vpop.f32.mrf.mxu0
        %v2557 = vadd.f32 %v2508, %v2556
        %v2558 = vpop.f32.mrf.mxu0
        %v2559 = vadd.f32 %v2510, %v2558
        %2560 = vmatmul.bf16.gmra.mxu0 %v1142
        %v2561 = vpop.f32.mrf.mxu0
        %v2562 = vadd.f32 %v2513, %v2561
        %v2563 = vpop.f32.mrf.mxu0
        %v2564 = vadd.f32 %v2515, %v2563
        %2565 = vmatmul.bf16.gmra.mxu0 %v1150
        %v2566 = vpop.f32.mrf.mxu0
        %v2567 = vadd.f32 %v2518, %v2566
        %v2568 = vpop.f32.mrf.mxu0
        %v2569 = vadd.f32 %v2520, %v2568
        %2570 = vmatmul.bf16.gmra.mxu0 %v1158
        %v2571 = vpop.f32.mrf.mxu0
        %v2572 = vadd.f32 %v2523, %v2571
        %v2573 = vpop.f32.mrf.mxu0
        %v2574 = vadd.f32 %v2525, %v2573
        %2575 = vmatmul.bf16.gmra.mxu0 %v1166
        %v2576 = vpop.f32.mrf.mxu0
        %v2577 = vadd.f32 %v2528, %v2576
        %v2578 = vpop.f32.mrf.mxu0
        %v2579 = vadd.f32 %v2530, %v2578
        %2580 = vdwg.mxu0
        %2581 = vmatpush.bf16.msra.mxu0 %v1783
        %2582 = vmatpush.bf16.msra.mxu0 %v1781
        %2583 = vmatpush.bf16.msra.mxu0 %v1779
        %2584 = vmatpush.bf16.msra.mxu0 %v1777
        %2585 = vmatpush.bf16.msra.mxu0 %v1775
        %2586 = vmatpush.bf16.msra.mxu0 %v1773
        %2587 = vmatpush.bf16.msra.mxu0 %v1771
        %2588 = vmatpush.bf16.msra.mxu0 %v1769
        %2589 = vmatmul.bf16.gmra.mxu0 %v1111
        %v2590 = vpop.f32.mrf.mxu0
        %v2591 = vadd.f32 %v2542, %v2590
        %v2592 = vpop.f32.mrf.mxu0
        %v2593 = vadd.f32 %v2544, %v2592
        %2594 = vmatmul.bf16.gmra.mxu0 %v1119
        %v2595 = vpop.f32.mrf.mxu0
        %v2596 = vadd.f32 %v2547, %v2595
        %v2597 = vpop.f32.mrf.mxu0
        %v2598 = vadd.f32 %v2549, %v2597
        %2599 = vmatmul.bf16.gmra.mxu0 %v1127
        %v2600 = vpop.f32.mrf.mxu0
        %v2601 = vadd.f32 %v2552, %v2600
        %v2602 = vpop.f32.mrf.mxu0
        %v2603 = vadd.f32 %v2554, %v2602
        %2604 = vmatmul.bf16.gmra.mxu0 %v1135
        %v2605 = vpop.f32.mrf.mxu0
        %v2606 = vadd.f32 %v2557, %v2605
        %v2607 = vpop.f32.mrf.mxu0
        %v2608 = vadd.f32 %v2559, %v2607
        %2609 = vmatmul.bf16.gmra.mxu0 %v1143
        %v2610 = vpop.f32.mrf.mxu0
        %v2611 = vadd.f32 %v2562, %v2610
        %v2612 = vpop.f32.mrf.mxu0
        %v2613 = vadd.f32 %v2564, %v2612
        %2614 = vmatmul.bf16.gmra.mxu0 %v1151
        %v2615 = vpop.f32.mrf.mxu0
        %v2616 = vadd.f32 %v2567, %v2615
        %v2617 = vpop.f32.mrf.mxu0
        %v2618 = vadd.f32 %v2569, %v2617
        %2619 = vmatmul.bf16.gmra.mxu0 %v1159
        %v2620 = vpop.f32.mrf.mxu0
        %v2621 = vadd.f32 %v2572, %v2620
        %v2622 = vpop.f32.mrf.mxu0
        %v2623 = vadd.f32 %v2574, %v2622
        %2624 = vmatmul.bf16.gmra.mxu0 %v1167
        %v2625 = vpop.f32.mrf.mxu0
        %v2626 = vadd.f32 %v2577, %v2625
        %v2627 = vpop.f32.mrf.mxu0
        %v2628 = vadd.f32 %v2579, %v2627
        %2629 = vdwg.mxu0
        %2630 = vmatpush.bf16.msra.mxu0 %v1799
        %2631 = vmatpush.bf16.msra.mxu0 %v1797
        %2632 = vmatpush.bf16.msra.mxu0 %v1795
        %2633 = vmatpush.bf16.msra.mxu0 %v1793
        %2634 = vmatpush.bf16.msra.mxu0 %v1791
        %2635 = vmatpush.bf16.msra.mxu0 %v1789
        %2636 = vmatpush.bf16.msra.mxu0 %v1787
        %2637 = vmatpush.bf16.msra.mxu0 %v1785
        %2638 = vmatmul.bf16.gmra.mxu0 %v1112
        %v2639 = vpop.f32.mrf.mxu0
        %v2640 = vadd.f32 %v2591, %v2639
        %v2641 = vpop.f32.mrf.mxu0
        %v2642 = vadd.f32 %v2593, %v2641
        %2643 = vmatmul.bf16.gmra.mxu0 %v1120
        %v2644 = vpop.f32.mrf.mxu0
        %v2645 = vadd.f32 %v2596, %v2644
        %v2646 = vpop.f32.mrf.mxu0
        %v2647 = vadd.f32 %v2598, %v2646
        %2648 = vmatmul.bf16.gmra.mxu0 %v1128
        %v2649 = vpop.f32.mrf.mxu0
        %v2650 = vadd.f32 %v2601, %v2649
        %v2651 = vpop.f32.mrf.mxu0
        %v2652 = vadd.f32 %v2603, %v2651
        %2653 = vmatmul.bf16.gmra.mxu0 %v1136
        %v2654 = vpop.f32.mrf.mxu0
        %v2655 = vadd.f32 %v2606, %v2654
        %v2656 = vpop.f32.mrf.mxu0
        %v2657 = vadd.f32 %v2608, %v2656
        %2658 = vmatmul.bf16.gmra.mxu0 %v1144
        %v2659 = vpop.f32.mrf.mxu0
        %v2660 = vadd.f32 %v2611, %v2659
        %v2661 = vpop.f32.mrf.mxu0
        %v2662 = vadd.f32 %v2613, %v2661
        %2663 = vmatmul.bf16.gmra.mxu0 %v1152
        %v2664 = vpop.f32.mrf.mxu0
        %v2665 = vadd.f32 %v2616, %v2664
        %v2666 = vpop.f32.mrf.mxu0
        %v2667 = vadd.f32 %v2618, %v2666
        %2668 = vmatmul.bf16.gmra.mxu0 %v1160
        %v2669 = vpop.f32.mrf.mxu0
        %v2670 = vadd.f32 %v2621, %v2669
        %v2671 = vpop.f32.mrf.mxu0
        %v2672 = vadd.f32 %v2623, %v2671
        %2673 = vmatmul.bf16.gmra.mxu0 %v1168
        %v2674 = vpop.f32.mrf.mxu0
        %v2675 = vadd.f32 %v2626, %v2674
        %v2676 = vpop.f32.mrf.mxu0
        %v2677 = vadd.f32 %v2628, %v2676
        %2678 = vdwg.mxu0
        %2679 = vmatpush.bf16.msra.mxu0 %v1815
        %2680 = vmatpush.bf16.msra.mxu0 %v1813
        %2681 = vmatpush.bf16.msra.mxu0 %v1811
        %2682 = vmatpush.bf16.msra.mxu0 %v1809
        %2683 = vmatpush.bf16.msra.mxu0 %v1807
        %2684 = vmatpush.bf16.msra.mxu0 %v1805
        %2685 = vmatpush.bf16.msra.mxu0 %v1803
        %2686 = vmatpush.bf16.msra.mxu0 %v1801
        %2687 = vmatmul.bf16.gmra.mxu0 %v1113
        %v2688 = vpop.f32.mrf.mxu0
        %v2689 = vadd.f32 %v2640, %v2688
        %v2690 = vpop.f32.mrf.mxu0
        %v2691 = vadd.f32 %v2642, %v2690
        %2692 = vmatmul.bf16.gmra.mxu0 %v1121
        %v2693 = vpop.f32.mrf.mxu0
        %v2694 = vadd.f32 %v2645, %v2693
        %v2695 = vpop.f32.mrf.mxu0
        %v2696 = vadd.f32 %v2647, %v2695
        %2697 = vmatmul.bf16.gmra.mxu0 %v1129
        %v2698 = vpop.f32.mrf.mxu0
        %v2699 = vadd.f32 %v2650, %v2698
        %v2700 = vpop.f32.mrf.mxu0
        %v2701 = vadd.f32 %v2652, %v2700
        %2702 = vmatmul.bf16.gmra.mxu0 %v1137
        %v2703 = vpop.f32.mrf.mxu0
        %v2704 = vadd.f32 %v2655, %v2703
        %v2705 = vpop.f32.mrf.mxu0
        %v2706 = vadd.f32 %v2657, %v2705
        %2707 = vmatmul.bf16.gmra.mxu0 %v1145
        %v2708 = vpop.f32.mrf.mxu0
        %v2709 = vadd.f32 %v2660, %v2708
        %v2710 = vpop.f32.mrf.mxu0
        %v2711 = vadd.f32 %v2662, %v2710
        %2712 = vmatmul.bf16.gmra.mxu0 %v1153
        %v2713 = vpop.f32.mrf.mxu0
        %v2714 = vadd.f32 %v2665, %v2713
        %v2715 = vpop.f32.mrf.mxu0
        %v2716 = vadd.f32 %v2667, %v2715
        %2717 = vmatmul.bf16.gmra.mxu0 %v1161
        %v2718 = vpop.f32.mrf.mxu0
        %v2719 = vadd.f32 %v2670, %v2718
        %v2720 = vpop.f32.mrf.mxu0
        %v2721 = vadd.f32 %v2672, %v2720
        %2722 = vmatmul.bf16.gmra.mxu0 %v1169
        %v2723 = vpop.f32.mrf.mxu0
        %v2724 = vadd.f32 %v2675, %v2723
        %v2725 = vpop.f32.mrf.mxu0
        %v2726 = vadd.f32 %v2677, %v2725
        %2727 = vdwg.mxu0
        %v2728 = vmax.f32 %v2297, 0.0
        %v2729 = vmax.f32 %v2689, 0.0
        %v2730 = vmax.f32 %v2299, 0.0
        %v2731 = vmax.f32 %v2691, 0.0
        %v2732 = vmax.f32 %v2302, 0.0
        %v2733 = vmax.f32 %v2694, 0.0
        %v2734 = vmax.f32 %v2304, 0.0
        %v2735 = vmax.f32 %v2696, 0.0
        %v2736 = vmax.f32 %v2307, 0.0
        %v2737 = vmax.f32 %v2699, 0.0
        %v2738 = vmax.f32 %v2309, 0.0
        %v2739 = vmax.f32 %v2701, 0.0
        %v2740 = vmax.f32 %v2312, 0.0
        %v2741 = vmax.f32 %v2704, 0.0
        %v2742 = vmax.f32 %v2314, 0.0
        %v2743 = vmax.f32 %v2706, 0.0
        %v2744 = vmax.f32 %v2317, 0.0
        %v2745 = vmax.f32 %v2709, 0.0
        %v2746 = vmax.f32 %v2319, 0.0
        %v2747 = vmax.f32 %v2711, 0.0
        %v2748 = vmax.f32 %v2322, 0.0
        %v2749 = vmax.f32 %v2714, 0.0
        %v2750 = vmax.f32 %v2324, 0.0
        %v2751 = vmax.f32 %v2716, 0.0
        %v2752 = vmax.f32 %v2327, 0.0
        %v2753 = vmax.f32 %v2719, 0.0
        %v2754 = vmax.f32 %v2329, 0.0
        %v2755 = vmax.f32 %v2721, 0.0
        %v2756 = vmax.f32 %v2332, 0.0
        %v2757 = vmax.f32 %v2724, 0.0
        %v2758 = vmax.f32 %v2334, 0.0
        %v2759 = vmax.f32 %v2726, 0.0
        %s2760 = smul.u32 %s33, 128
        %v2761 = vlaneseq
        %v2762 = vshrl.u32 %v2761, 7
        %v2763 = vadd.s32 %v2762, 8
        %v2764 = vadd.s32 %v2762, 16
        %v2765 = vadd.s32 %v2762, 24
        %v2766 = vadd.s32 %v2762, 32
        %v2767 = vadd.s32 %v2762, 40
        %v2768 = vadd.s32 %v2762, 48
        %v2769 = vadd.s32 %v2762, 56
        %v2770 = vadd.s32 %v2762, 64
        %v2771 = vadd.s32 %v2762, 72
        %v2772 = vadd.s32 %v2762, 80
        %v2773 = vadd.s32 %v2762, 88
        %v2774 = vadd.s32 %v2762, 96
        %v2775 = vadd.s32 %v2762, 104
        %v2776 = vadd.s32 %v2762, 112
        %v2777 = vadd.s32 %v2762, 120
        %v2778 = vstv %s2760
        %v2779 = vadd.s32 %v2778, %v2762
        %v2780 = vadd.s32 %v2778, %v2763
        %v2781 = vadd.s32 %v2778, %v2764
        %v2782 = vadd.s32 %v2778, %v2765
        %v2783 = vadd.s32 %v2778, %v2766
        %v2784 = vadd.s32 %v2778, %v2767
        %v2785 = vadd.s32 %v2778, %v2768
        %v2786 = vadd.s32 %v2778, %v2769
        %v2787 = vadd.s32 %v2778, %v2770
        %v2788 = vadd.s32 %v2778, %v2771
        %v2789 = vadd.s32 %v2778, %v2772
        %v2790 = vadd.s32 %v2778, %v2773
        %v2791 = vadd.s32 %v2778, %v2774
        %v2792 = vadd.s32 %v2778, %v2775
        %v2793 = vadd.s32 %v2778, %v2776
        %v2794 = vadd.s32 %v2778, %v2777
        %vm2795 = vcmp.lt.s32.totalorder %v2779, 320
        %vm2796 = vcmp.lt.s32.totalorder %v2780, 320
        %vm2797 = vcmp.lt.s32.totalorder %v2781, 320
        %vm2798 = vcmp.lt.s32.totalorder %v2782, 320
        %vm2799 = vcmp.lt.s32.totalorder %v2783, 320
        %vm2800 = vcmp.lt.s32.totalorder %v2784, 320
        %vm2801 = vcmp.lt.s32.totalorder %v2785, 320
        %vm2802 = vcmp.lt.s32.totalorder %v2786, 320
        %vm2803 = vcmp.lt.s32.totalorder %v2787, 320
        %vm2804 = vcmp.lt.s32.totalorder %v2788, 320
        %vm2805 = vcmp.lt.s32.totalorder %v2789, 320
        %vm2806 = vcmp.lt.s32.totalorder %v2790, 320
        %vm2807 = vcmp.lt.s32.totalorder %v2791, 320
        %vm2808 = vcmp.lt.s32.totalorder %v2792, 320
        %vm2809 = vcmp.lt.s32.totalorder %v2793, 320
        %vm2810 = vcmp.lt.s32.totalorder %v2794, 320
        %v2811 = vsel %vm2795, 1, 0
        %v2812 = vsel %vm2796, 1, 0
        %v2813 = vsel %vm2797, 1, 0
        %v2814 = vsel %vm2798, 1, 0
        %v2815 = vsel %vm2799, 1, 0
        %v2816 = vsel %vm2800, 1, 0
        %v2817 = vsel %vm2801, 1, 0
        %v2818 = vsel %vm2802, 1, 0
        %v2819 = vsel %vm2803, 1, 0
        %v2820 = vsel %vm2804, 1, 0
        %v2821 = vsel %vm2805, 1, 0
        %v2822 = vsel %vm2806, 1, 0
        %v2823 = vsel %vm2807, 1, 0
        %v2824 = vsel %vm2808, 1, 0
        %v2825 = vsel %vm2809, 1, 0
        %v2826 = vsel %vm2810, 1, 0
        %vm2827 = vcmp.eq.s32.totalorder %v2811, 1
        %vm2828 = vcmp.eq.s32.totalorder %v2812, 1
        %vm2829 = vcmp.eq.s32.totalorder %v2813, 1
        %vm2830 = vcmp.eq.s32.totalorder %v2814, 1
        %vm2831 = vcmp.eq.s32.totalorder %v2815, 1
        %vm2832 = vcmp.eq.s32.totalorder %v2816, 1
        %vm2833 = vcmp.eq.s32.totalorder %v2817, 1
        %vm2834 = vcmp.eq.s32.totalorder %v2818, 1
        %vm2835 = vcmp.eq.s32.totalorder %v2819, 1
        %vm2836 = vcmp.eq.s32.totalorder %v2820, 1
        %vm2837 = vcmp.eq.s32.totalorder %v2821, 1
        %vm2838 = vcmp.eq.s32.totalorder %v2822, 1
        %vm2839 = vcmp.eq.s32.totalorder %v2823, 1
        %vm2840 = vcmp.eq.s32.totalorder %v2824, 1
        %vm2841 = vcmp.eq.s32.totalorder %v2825, 1
        %vm2842 = vcmp.eq.s32.totalorder %v2826, 1
        %v2843 = vsel %vm2827, %v2728, -inf
        %v2844 = vsel %vm2827, %v2729, -inf
        %v2845 = vsel %vm2828, %v2730, -inf
        %v2846 = vsel %vm2828, %v2731, -inf
        %v2847 = vsel %vm2829, %v2732, -inf
        %v2848 = vsel %vm2829, %v2733, -inf
        %v2849 = vsel %vm2830, %v2734, -inf
        %v2850 = vsel %vm2830, %v2735, -inf
        %v2851 = vsel %vm2831, %v2736, -inf
        %v2852 = vsel %vm2831, %v2737, -inf
        %v2853 = vsel %vm2832, %v2738, -inf
        %v2854 = vsel %vm2832, %v2739, -inf
        %v2855 = vsel %vm2833, %v2740, -inf
        %v2856 = vsel %vm2833, %v2741, -inf
        %v2857 = vsel %vm2834, %v2742, -inf
        %v2858 = vsel %vm2834, %v2743, -inf
        %v2859 = vsel %vm2835, %v2744, -inf
        %v2860 = vsel %vm2835, %v2745, -inf
        %v2861 = vsel %vm2836, %v2746, -inf
        %v2862 = vsel %vm2836, %v2747, -inf
        %v2863 = vsel %vm2837, %v2748, -inf
        %v2864 = vsel %vm2837, %v2749, -inf
        %v2865 = vsel %vm2838, %v2750, -inf
        %v2866 = vsel %vm2838, %v2751, -inf
        %v2867 = vsel %vm2839, %v2752, -inf
        %v2868 = vsel %vm2839, %v2753, -inf
        %v2869 = vsel %vm2840, %v2754, -inf
        %v2870 = vsel %vm2840, %v2755, -inf
        %v2871 = vsel %vm2841, %v2756, -inf
        %v2872 = vsel %vm2841, %v2757, -inf
        %v2873 = vsel %vm2842, %v2758, -inf
        %v2874 = vsel %vm2842, %v2759, -inf
        %v2875 = vld [vmem:[#allocation2] sm:$0x3]
        %v2876 = vmax.f32 %v2843, %v2847
        %v2877 = vmax.f32 %v2845, %v2849
        %v2878 = vmax.f32 %v2876, %v2851
        %v2879 = vmax.f32 %v2877, %v2853
        %v2880 = vmax.f32 %v2878, %v2855
        %v2881 = vmax.f32 %v2879, %v2857
        %v2882 = vmax.f32 %v2880, %v2859
        %v2883 = vmax.f32 %v2881, %v2861
        %v2884 = vmax.f32 %v2882, %v2863
        %v2885 = vmax.f32 %v2883, %v2865
        %v2886 = vmax.f32 %v2884, %v2867
        %v2887 = vmax.f32 %v2885, %v2869
        %v2888 = vmax.f32 %v2886, %v2871
        %v2889 = vmax.f32 %v2887, %v2873
        %v2890 = vmax.f32 %v2888, %v2889
        %v2891 = vrot.slane %v2890, 4
        %v2892 = vmax.f32 %v2890, %v2891
        %v2893 = vrot.slane %v2892, 2
        %v2894 = vmax.f32 %v2892, %v2893
        %v2895 = vrot.slane %v2894, 1
        %v2896 = vmax.f32 %v2894, %v2895
        %v2897 = vmax.f32 %v2844, %v2848
        %v2898 = vmax.f32 %v2846, %v2850
        %v2899 = vmax.f32 %v2897, %v2852
        %v2900 = vmax.f32 %v2898, %v2854
        %v2901 = vmax.f32 %v2899, %v2856
        %v2902 = vmax.f32 %v2900, %v2858
        %v2903 = vmax.f32 %v2901, %v2860
        %v2904 = vmax.f32 %v2902, %v2862
        %v2905 = vmax.f32 %v2903, %v2864
        %v2906 = vmax.f32 %v2904, %v2866
        %v2907 = vmax.f32 %v2905, %v2868
        %v2908 = vmax.f32 %v2906, %v2870
        %v2909 = vmax.f32 %v2907, %v2872
        %v2910 = vmax.f32 %v2908, %v2874
        %v2911 = vmax.f32 %v2909, %v2910
        %v2912 = vrot.slane %v2911, 4
        %v2913 = vmax.f32 %v2911, %v2912
        %v2914 = vrot.slane %v2913, 2
        %v2915 = vmax.f32 %v2913, %v2914
        %v2916 = vrot.slane %v2915, 1
        %v2917 = vmax.f32 %v2915, %v2916
        %v2920 = vrot.slane %v2917, 7
        %vm2921 = vcmask 1040384
        %v2922 = vsel %vm2921, %v2896, %v2920
        %v2924 = vmax.f32 %v2875, %v2922
        %v2925 = vlaneseq
        %vm2926 = vcmp.ge.s32.totalorder %v2925, 0
        %vm2927 = vcmp.lt.s32.totalorder %v2925, 256
        %vm2928 = vmand %vm2926, %vm2927
        %2929 = vst.msk [vmem:[#allocation2] sm:$0x3] %vm2928, %v2924
        %p2930 = scmp.eq.s32.totalorder %s33, 2
        // Predicated region
        $region77: #{tpu_custom_call.1} parent=55 // pred_check
          %p2931 = pneg %p2930
        $region78: #{tpu_custom_call.1} parent=55 // pred_check_branch
          %2933 = sbr.rel (%p2931) target = $region80
        $region79: #{tpu_custom_call.1} parent=55 // pred_region
          %v2934 = vld [vmem:[#allocation2] sm:$0x3]
          %v2936 = vperm.slane %v2934, 0
          %v2937 = vperm.slane %v2934, 1
          %v2940 = vpack.c.bf16 %v2936, %v2936
          %v2941 = vpack.c.bf16 %v2937, %v2937
          %v2942 = vld [vmem:[#allocation9] sm:$0xff]
          %v2943 = vld [vmem:[#allocation9 + $0x8] sm:$0xff]
          %v2944 = vld [vmem:[#allocation9 + $0x10] sm:$0xff]
          %v2945 = vld [vmem:[#allocation9 + $0x18] sm:$0xff]
          %v2946 = vld [vmem:[#allocation9 + $0x20] sm:$0xff]
          %v2947 = vld [vmem:[#allocation9 + $0x28] sm:$0xff]
          %v2948 = vld [vmem:[#allocation9 + $0x30] sm:$0xff]
          %v2949 = vld [vmem:[#allocation9 + $0x38] sm:$0xff]
          %v2950 = vld [vmem:[#allocation9 + $0x40] sm:$0xff]
          %v2951 = vld [vmem:[#allocation9 + $0x48] sm:$0xff]
          %v2952 = vld [vmem:[#allocation9 + $0x50] sm:$0xff]
          %v2953 = vld [vmem:[#allocation9 + $0x58] sm:$0xff]
          %v2954 = vld [vmem:[#allocation9 + $0x60] sm:$0xff]
          %v2955 = vld [vmem:[#allocation9 + $0x68] sm:$0xff]
          %v2956 = vld [vmem:[#allocation9 + $0x70] sm:$0xff]
          %v2957 = vld [vmem:[#allocation9 + $0x78] sm:$0xff]
          %v2958 = vld [vmem:[#allocation9 + $0x80] sm:$0xff]
          %v2959 = vld [vmem:[#allocation9 + $0x88] sm:$0xff]
          %v2960 = vld [vmem:[#allocation9 + $0x90] sm:$0xff]
          %v2961 = vld [vmem:[#allocation9 + $0x98] sm:$0xff]
          %v2962 = vld [vmem:[#allocation9 + $0xa0] sm:$0xff]
          %v2963 = vld [vmem:[#allocation9 + $0xa8] sm:$0xff]
          %v2964 = vld [vmem:[#allocation9 + $0xb0] sm:$0xff]
          %v2965 = vld [vmem:[#allocation9 + $0xb8] sm:$0xff]
          %v2966 = vld [vmem:[#allocation9 + $0xc0] sm:$0xff]
          %v2967 = vld [vmem:[#allocation9 + $0xc8] sm:$0xff]
          %v2968 = vld [vmem:[#allocation9 + $0xd0] sm:$0xff]
          %v2969 = vld [vmem:[#allocation9 + $0xd8] sm:$0xff]
          %v2970 = vld [vmem:[#allocation9 + $0xe0] sm:$0xff]
          %v2971 = vld [vmem:[#allocation9 + $0xe8] sm:$0xff]
          %v2972 = vld [vmem:[#allocation9 + $0xf0] sm:$0xff]
          %v2973 = vld [vmem:[#allocation9 + $0xf8] sm:$0xff]
          %v2974 = vld [vmem:[%s6] sm:$0x3]
          %v3007 = vunpack.c.l.b16 %v2942
          %v3008 = vunpack.c.h.b16 %v2942
          %v3009 = vunpack.c.l.b16 %v2943
          %v3010 = vunpack.c.h.b16 %v2943
          %v3011 = vunpack.c.l.b16 %v2944
          %v3012 = vunpack.c.h.b16 %v2944
          %v3013 = vunpack.c.l.b16 %v2945
          %v3014 = vunpack.c.h.b16 %v2945
          %v3015 = vunpack.c.l.b16 %v2946
          %v3016 = vunpack.c.h.b16 %v2946
          %v3017 = vunpack.c.l.b16 %v2947
          %v3018 = vunpack.c.h.b16 %v2947
          %v3019 = vunpack.c.l.b16 %v2948
          %v3020 = vunpack.c.h.b16 %v2948
          %v3021 = vunpack.c.l.b16 %v2949
          %v3022 = vunpack.c.h.b16 %v2949
          %v3023 = vunpack.c.l.b16 %v2950
          %v3024 = vunpack.c.h.b16 %v2950
          %v3025 = vunpack.c.l.b16 %v2951
          %v3026 = vunpack.c.h.b16 %v2951
          %v3027 = vunpack.c.l.b16 %v2952
          %v3028 = vunpack.c.h.b16 %v2952
          %v3029 = vunpack.c.l.b16 %v2953
          %v3030 = vunpack.c.h.b16 %v2953
          %v3031 = vunpack.c.l.b16 %v2954
          %v3032 = vunpack.c.h.b16 %v2954
          %v3033 = vunpack.c.l.b16 %v2955
          %v3034 = vunpack.c.h.b16 %v2955
          %v3035 = vunpack.c.l.b16 %v2956
          %v3036 = vunpack.c.h.b16 %v2956
          %v3037 = vunpack.c.l.b16 %v2957
          %v3038 = vunpack.c.h.b16 %v2957
          %v3039 = vunpack.c.l.b16 %v2958
          %v3040 = vunpack.c.h.b16 %v2958
          %v3041 = vunpack.c.l.b16 %v2959
          %v3042 = vunpack.c.h.b16 %v2959
          %v3043 = vunpack.c.l.b16 %v2960
          %v3044 = vunpack.c.h.b16 %v2960
          %v3045 = vunpack.c.l.b16 %v2961
          %v3046 = vunpack.c.h.b16 %v2961
          %v3047 = vunpack.c.l.b16 %v2962
          %v3048 = vunpack.c.h.b16 %v2962
          %v3049 = vunpack.c.l.b16 %v2963
          %v3050 = vunpack.c.h.b16 %v2963
          %v3051 = vunpack.c.l.b16 %v2964
          %v3052 = vunpack.c.h.b16 %v2964
          %v3053 = vunpack.c.l.b16 %v2965
          %v3054 = vunpack.c.h.b16 %v2965
          %v3055 = vunpack.c.l.b16 %v2966
          %v3056 = vunpack.c.h.b16 %v2966
          %v3057 = vunpack.c.l.b16 %v2967
          %v3058 = vunpack.c.h.b16 %v2967
          %v3059 = vunpack.c.l.b16 %v2968
          %v3060 = vunpack.c.h.b16 %v2968
          %v3061 = vunpack.c.l.b16 %v2969
          %v3062 = vunpack.c.h.b16 %v2969
          %v3063 = vunpack.c.l.b16 %v2970
          %v3064 = vunpack.c.h.b16 %v2970
          %v3065 = vunpack.c.l.b16 %v2971
          %v3066 = vunpack.c.h.b16 %v2971
          %v3067 = vunpack.c.l.b16 %v2972
          %v3068 = vunpack.c.h.b16 %v2972
          %v3069 = vunpack.c.l.b16 %v2973
          %v3070 = vunpack.c.h.b16 %v2973
          %v3071 = vpack.c.b16 %v3009, %v3007
          %v3072 = vpack.c.b16 %v3010, %v3008
          %v3073 = vpack.c.b16 %v3013, %v3011
          %v3074 = vpack.c.b16 %v3014, %v3012
          %v3075 = vpack.c.b16 %v3017, %v3015
          %v3076 = vpack.c.b16 %v3018, %v3016
          %v3077 = vpack.c.b16 %v3021, %v3019
          %v3078 = vpack.c.b16 %v3022, %v3020
          %v3079 = vpack.c.b16 %v3025, %v3023
          %v3080 = vpack.c.b16 %v3026, %v3024
          %v3081 = vpack.c.b16 %v3029, %v3027
          %v3082 = vpack.c.b16 %v3030, %v3028
          %v3083 = vpack.c.b16 %v3033, %v3031
          %v3084 = vpack.c.b16 %v3034, %v3032
          %v3085 = vpack.c.b16 %v3037, %v3035
          %v3086 = vpack.c.b16 %v3038, %v3036
          %v3087 = vpack.c.b16 %v3041, %v3039
          %v3088 = vpack.c.b16 %v3042, %v3040
          %v3089 = vpack.c.b16 %v3045, %v3043
          %v3090 = vpack.c.b16 %v3046, %v3044
          %v3091 = vpack.c.b16 %v3049, %v3047
          %v3092 = vpack.c.b16 %v3050, %v3048
          %v3093 = vpack.c.b16 %v3053, %v3051
          %v3094 = vpack.c.b16 %v3054, %v3052
          %v3095 = vpack.c.b16 %v3057, %v3055
          %v3096 = vpack.c.b16 %v3058, %v3056
          %v3097 = vpack.c.b16 %v3061, %v3059
          %v3098 = vpack.c.b16 %v3062, %v3060
          %v3099 = vpack.c.b16 %v3065, %v3063
          %v3100 = vpack.c.b16 %v3066, %v3064
          %v3101 = vpack.c.b16 %v3069, %v3067
          %v3102 = vpack.c.b16 %v3070, %v3068
          %v3136 = vperm.slane %v2974, 0
          %v3137 = vperm.slane %v2974, 1
          %3140 = vmatpush.bf16.msra.mxu0 %v3085
          %3141 = vmatpush.bf16.msra.mxu0 %v3083
          %3142 = vmatpush.bf16.msra.mxu0 %v3081
          %3143 = vmatpush.bf16.msra.mxu0 %v3079
          %3144 = vmatpush.bf16.msra.mxu0 %v3077
          %3145 = vmatpush.bf16.msra.mxu0 %v3075
          %3146 = vmatpush.bf16.msra.mxu0 %v3073
          %3147 = vmatpush.bf16.msra.mxu0 %v3071
          %3148 = vmatmul.bf16.gmra.mxu0 %v2940
          %v3149 = vpop.f32.mrf.mxu0
          %v3150 = vadd.f32 %v3136, %v3149
          %v3151 = vpop.f32.mrf.mxu0
          %3152 = vdwg.mxu0
          %3153 = vmatpush.bf16.msra.mxu0 %v3101
          %3154 = vmatpush.bf16.msra.mxu0 %v3099
          %3155 = vmatpush.bf16.msra.mxu0 %v3097
          %3156 = vmatpush.bf16.msra.mxu0 %v3095
          %3157 = vmatpush.bf16.msra.mxu0 %v3093
          %3158 = vmatpush.bf16.msra.mxu0 %v3091
          %3159 = vmatpush.bf16.msra.mxu0 %v3089
          %3160 = vmatpush.bf16.msra.mxu0 %v3087
          %3161 = vmatmul.bf16.gmra.mxu0 %v2941
          %v3162 = vpop.f32.mrf.mxu0
          %v3163 = vadd.f32 %v3150, %v3162
          %v3164 = vpop.f32.mrf.mxu0
          %3165 = vdwg.mxu0
          %3166 = vmatpush.bf16.msra.mxu0 %v3086
          %3167 = vmatpush.bf16.msra.mxu0 %v3084
          %3168 = vmatpush.bf16.msra.mxu0 %v3082
          %3169 = vmatpush.bf16.msra.mxu0 %v3080
          %3170 = vmatpush.bf16.msra.mxu0 %v3078
          %3171 = vmatpush.bf16.msra.mxu0 %v3076
          %3172 = vmatpush.bf16.msra.mxu0 %v3074
          %3173 = vmatpush.bf16.msra.mxu0 %v3072
          %3174 = vmatmul.bf16.gmra.mxu0 %v2940
          %v3175 = vpop.f32.mrf.mxu0
          %v3176 = vadd.f32 %v3137, %v3175
          %v3177 = vpop.f32.mrf.mxu0
          %3178 = vdwg.mxu0
          %3179 = vmatpush.bf16.msra.mxu0 %v3102
          %3180 = vmatpush.bf16.msra.mxu0 %v3100
          %3181 = vmatpush.bf16.msra.mxu0 %v3098
          %3182 = vmatpush.bf16.msra.mxu0 %v3096
          %3183 = vmatpush.bf16.msra.mxu0 %v3094
          %3184 = vmatpush.bf16.msra.mxu0 %v3092
          %3185 = vmatpush.bf16.msra.mxu0 %v3090
          %3186 = vmatpush.bf16.msra.mxu0 %v3088
          %3187 = vmatmul.bf16.gmra.mxu0 %v2941
          %v3188 = vpop.f32.mrf.mxu0
          %v3189 = vadd.f32 %v3176, %v3188
          %v3190 = vpop.f32.mrf.mxu0
          %3191 = vdwg.mxu0
          %v3192 = vmax.f32 %v3163, 0.0
          %v3193 = vmax.f32 %v3189, 0.0
          %v3194 = vpack.c.bf16 %v3192, %v3192
          %v3195 = vpack.c.bf16 %v3193, %v3193
          %v3196 = vld [vmem:[%s7] sm:$0xf]
          %v3197 = vld [vmem:[%s7 + $0x4] sm:$0xf]
          %v3198 = vld [vmem:[%s7 + $0x8] sm:$0xf]
          %v3199 = vld [vmem:[%s7 + $0xc] sm:$0xf]
          %v3200 = vld [vmem:[%s7 + $0x10] sm:$0xf]
          %v3201 = vld [vmem:[%s7 + $0x14] sm:$0xf]
          %v3202 = vld [vmem:[%s7 + $0x18] sm:$0xf]
          %v3203 = vld [vmem:[%s7 + $0x1c] sm:$0xf]
          %v3204 = vld [vmem:[%s7 + $0x20] sm:$0xf]
          %v3205 = vld [vmem:[%s7 + $0x24] sm:$0xf]
          %v3206 = vld [vmem:[%s7 + $0x28] sm:$0xf]
          %v3207 = vld [vmem:[%s7 + $0x2c] sm:$0xf]
          %v3208 = vld [vmem:[%s7 + $0x30] sm:$0xf]
          %v3209 = vld [vmem:[%s7 + $0x34] sm:$0xf]
          %v3210 = vld [vmem:[%s7 + $0x38] sm:$0xf]
          %v3211 = vld [vmem:[%s7 + $0x3c] sm:$0xf]
          %v3212 = vld [vmem:[%s7 + $0x40] sm:$0xf]
          %v3213 = vld [vmem:[%s7 + $0x44] sm:$0xf]
          %v3214 = vld [vmem:[%s7 + $0x48] sm:$0xf]
          %v3215 = vld [vmem:[%s7 + $0x4c] sm:$0xf]
          %v3216 = vld [vmem:[%s7 + $0x50] sm:$0xf]
          %v3217 = vld [vmem:[%s7 + $0x54] sm:$0xf]
          %v3218 = vld [vmem:[%s7 + $0x58] sm:$0xf]
          %v3219 = vld [vmem:[%s7 + $0x5c] sm:$0xf]
          %v3220 = vld [vmem:[%s7 + $0x60] sm:$0xf]
          %v3221 = vld [vmem:[%s7 + $0x64] sm:$0xf]
          %v3222 = vld [vmem:[%s7 + $0x68] sm:$0xf]
          %v3223 = vld [vmem:[%s7 + $0x6c] sm:$0xf]
          %v3224 = vld [vmem:[%s7 + $0x70] sm:$0xf]
          %v3225 = vld [vmem:[%s7 + $0x74] sm:$0xf]
          %v3226 = vld [vmem:[%s7 + $0x78] sm:$0xf]
          %v3227 = vld [vmem:[%s7 + $0x7c] sm:$0xf]
          %v3228 = vld [vmem:[%s8] sm:$0x1]
          %v3261 = vunpack.c.l.b16 %v3196
          %v3262 = vunpack.c.l.b16 %v3197
          %v3263 = vunpack.c.l.b16 %v3198
          %v3264 = vunpack.c.l.b16 %v3199
          %v3265 = vunpack.c.l.b16 %v3200
          %v3266 = vunpack.c.l.b16 %v3201
          %v3267 = vunpack.c.l.b16 %v3202
          %v3268 = vunpack.c.l.b16 %v3203
          %v3269 = vunpack.c.l.b16 %v3204
          %v3270 = vunpack.c.l.b16 %v3205
          %v3271 = vunpack.c.l.b16 %v3206
          %v3272 = vunpack.c.l.b16 %v3207
          %v3273 = vunpack.c.l.b16 %v3208
          %v3274 = vunpack.c.l.b16 %v3209
          %v3275 = vunpack.c.l.b16 %v3210
          %v3276 = vunpack.c.l.b16 %v3211
          %v3277 = vunpack.c.l.b16 %v3212
          %v3278 = vunpack.c.l.b16 %v3213
          %v3279 = vunpack.c.l.b16 %v3214
          %v3280 = vunpack.c.l.b16 %v3215
          %v3281 = vunpack.c.l.b16 %v3216
          %v3282 = vunpack.c.l.b16 %v3217
          %v3283 = vunpack.c.l.b16 %v3218
          %v3284 = vunpack.c.l.b16 %v3219
          %v3285 = vunpack.c.l.b16 %v3220
          %v3286 = vunpack.c.l.b16 %v3221
          %v3287 = vunpack.c.l.b16 %v3222
          %v3288 = vunpack.c.l.b16 %v3223
          %v3289 = vunpack.c.l.b16 %v3224
          %v3290 = vunpack.c.l.b16 %v3225
          %v3291 = vunpack.c.l.b16 %v3226
          %v3292 = vunpack.c.l.b16 %v3227
          %v3293 = vpack.c.b16 %v3262, %v3261
          %v3294 = vpack.c.b16 %v3264, %v3263
          %v3295 = vpack.c.b16 %v3266, %v3265
          %v3296 = vpack.c.b16 %v3268, %v3267
          %v3297 = vpack.c.b16 %v3270, %v3269
          %v3298 = vpack.c.b16 %v3272, %v3271
          %v3299 = vpack.c.b16 %v3274, %v3273
          %v3300 = vpack.c.b16 %v3276, %v3275
          %v3301 = vpack.c.b16 %v3278, %v3277
          %v3302 = vpack.c.b16 %v3280, %v3279
          %v3303 = vpack.c.b16 %v3282, %v3281
          %v3304 = vpack.c.b16 %v3284, %v3283
          %v3305 = vpack.c.b16 %v3286, %v3285
          %v3306 = vpack.c.b16 %v3288, %v3287
          %v3307 = vpack.c.b16 %v3290, %v3289
          %v3308 = vpack.c.b16 %v3292, %v3291
          %3325 = vmatpush.bf16.msra.mxu0 %v3300
          %3326 = vmatpush.bf16.msra.mxu0 %v3299
          %3327 = vmatpush.bf16.msra.mxu0 %v3298
          %3328 = vmatpush.bf16.msra.mxu0 %v3297
          %3329 = vmatpush.bf16.msra.mxu0 %v3296
          %3330 = vmatpush.bf16.msra.mxu0 %v3295
          %3331 = vmatpush.bf16.msra.mxu0 %v3294
          %3332 = vmatpush.bf16.msra.mxu0 %v3293
          %3333 = vmatmul.bf16.gmra.mxu0 %v3194
          %v3334 = vpop.f32.mrf.mxu0
          %v3335 = vadd.f32 %v3228, %v3334
          %v3336 = vpop.f32.mrf.mxu0
          %3337 = vdwg.mxu0
          %3338 = vmatpush.bf16.msra.mxu0 %v3308
          %3339 = vmatpush.bf16.msra.mxu0 %v3307
          %3340 = vmatpush.bf16.msra.mxu0 %v3306
          %3341 = vmatpush.bf16.msra.mxu0 %v3305
          %3342 = vmatpush.bf16.msra.mxu0 %v3304
          %3343 = vmatpush.bf16.msra.mxu0 %v3303
          %3344 = vmatpush.bf16.msra.mxu0 %v3302
          %3345 = vmatpush.bf16.msra.mxu0 %v3301
          %3346 = vmatmul.bf16.gmra.mxu0 %v3195
          %v3347 = vpop.f32.mrf.mxu0
          %v3348 = vadd.f32 %v3335, %v3347
          %v3349 = vpop.f32.mrf.mxu0
          %3350 = vdwg.mxu0
          %vm3351 = vcmask 16384
          %3352 = vst.msk [vmem:[%s414] sm:$0x1] %vm3351, %v3348
        $region80: #{tpu_custom_call.1} parent=55 // pred_fallthru
          _
        %s3353 = sand.u32 %s244, 1
        %s3354 = scalar_lea.sflag [#allocation5], %s3353
        %s3355 = sand.u32 %s244, 1
        %s3356 = scalar_lea.vmem [#allocation11], %s3355
        // Predicated region
        $region81: #{tpu_custom_call.1} parent=55 // pred_check
          %p3357 = pneg %p254
        $region82: #{tpu_custom_call.1} parent=55 // pred_check_branch
          %3359 = sbr.rel (%p3357) target = $region84
        $region83: #{tpu_custom_call.1} parent=55 // pred_region
          %3361 = vsyncadd %s3354, 0
          %s3362 = scalar_lea.hbm %s9, %s32
          %s3364 = sshll.u32 %s3356, 4
          %s3365 = int_to_ptr.vmem [resolvable:$true] %s3364
          %s3366 = sshll.u32 %s3362, 4
          %s3367 = int_to_ptr.hbm [resolvable:$true] %s3366
          %3369 = dma.vmem_to_hbm [thread:$0]  %s3365, 16, %s3367, %s3354
        $region84: #{tpu_custom_call.1} parent=55 // pred_fallthru
          _
      $region56: #{tpu_custom_call.1} parent=5 // pred_fallthru
        _
      %p3370 = scmp.le.s32.totalorder 2, %s23
      // Predicated region
      $region85: #{tpu_custom_call.1} parent=5 // pred_check
        %p3371 = pneg %p3370
      $region86: #{tpu_custom_call.1} parent=5 // pred_check_branch
        %3373 = sbr.rel (%p3371) target = $region88
      $region87: #{tpu_custom_call.1} parent=5 // pred_region
        %s3374 = ssub.s32 %s23, 2
        // Predicated region
        $region89: #{tpu_custom_call.1} parent=87 // pred_check
          %p3375 = pneg %p260
        $region90: #{tpu_custom_call.1} parent=87 // pred_check_branch
          %3377 = sbr.rel (%p3375) target = $region92
        $region91: #{tpu_custom_call.1} parent=87 // pred_region
          %s3378 = sand.u32 %s245, 1
          %s3379 = scalar_lea.sflag [#allocation5], %s3378
          %s3380 = sand.u32 %s245, 1
          %s3381 = scalar_lea.vmem [#allocation11], %s3380
          %3383 = dma.done %s3379, 16
        $region92: #{tpu_custom_call.1} parent=87 // pred_fallthru
          _
      $region88: #{tpu_custom_call.1} parent=5 // pred_fallthru
        _
    $region6: #{tpu_custom_call.1} parent=1 // loop_footer
      %s27 = sadd.s32 1, %s23
    $region7: #{tpu_custom_call.1} parent=1 // loop_footer_branch
      %22 = sbr.rel target = $region3
    $region8: #{tpu_custom_call.1} parent=1 // loop_exit
      _
    %3384 = vsyncpa [#allocation4], 1
    %s3385 = scalar_lea.sflag [#allocation4], 1
    %3386 = vsyncpa %s3385, 1
    %3387 = vsyncpa [#allocation7], 1
    %3388 = vsyncpa [#allocation10], 1
    %3389 = vsyncpa [#allocation5], 1
    %s3390 = scalar_lea.sflag [#allocation5], 1
    %3391 = vsyncpa %s3390, 1

</llo_original>
